<compile_context>
chip_gen: v7x
topology: tpu7x:2x2x1
jax: 0.10.0
libtpu: 0.0.40
codegen_flags: <defaults>
</compile_context>

<pallas_src>
import numpy as np
import jax
import jax.numpy as jnp
from jax.experimental import pallas as pl
from jax.experimental.pallas import tpu as pltpu


def _interp_kernel(xq_ref, xx_ref, dq2_ref, pos_t_ref, vals_t_ref, out_ref):
    # xq_ref    : (BLOCK_Q, 3)  queries of this block, already / scale_x (streamed)
    # xx_ref    : (G, 3)        grid offsets / scale_x, padded           (resident)
    # dq2_ref   : (G, 1)        squared offset radii (huge for pad rows) (resident)
    # pos_t_ref : (3, P)        reference positions / scale_x, transposed(resident)
    # vals_t_ref: (n_vals, P)   values at reference positions, transposed(resident)
    # out_ref   : (BLOCK_Q, n_vals)
    block_q = xq_ref.shape[0]
    n_vals = vals_t_ref.shape[0]

    xq = xq_ref[...]          # (BLOCK_Q, 3)
    xx = xx_ref[...]          # (G, 3)
    pos_t = pos_t_ref[...]    # (3, P)
    dq2 = dq2_ref[...]        # (G, 1)
    vals_t = vals_t_ref[...]  # (n_vals, P)

    # Hoist the query-independent coordinate columns/rows.
    xx_cols = [xx[:, c:c + 1] for c in range(3)]       # 3 x (G, 1)
    pos_rows = [pos_t[c:c + 1, :] for c in range(3)]   # 3 x (1, P)

    w_rows, cnt_rows = [], []
    for t in range(block_q):                # static unroll over the query block
        # squared distance candidate -> every reference position (VPU only)
        d2 = None
        for c in range(3):
            qx = xq[t:t + 1, c:c + 1] + xx_cols[c]     # (G, 1) candidate coord c
            diff = qx - pos_rows[c]                    # (G, 1) - (1, P) -> (G, P)
            d2 = diff * diff if d2 is None else d2 + diff * diff

        min_d2 = jnp.min(d2, axis=1, keepdims=True)    # (G, 1) lane reduce
        # nearest-neighbour selection mask (no argmin / iota / one-hot)
        near = (d2 == min_d2).astype(jnp.float32)      # (G, P)
        # keep candidate iff its offset radius <= distance to nearest position
        keep = (dq2 <= min_d2).astype(jnp.float32)     # (G, 1)

        w_rows.append(jnp.sum(near * keep, axis=0, keepdims=True))   # (1, P)
        cnt_rows.append(jnp.sum(keep, axis=0, keepdims=True))        # (1, 1)

    w = jnp.concatenate(w_rows, axis=0)      # (BLOCK_Q, P) per-position weights
    cnt = jnp.concatenate(cnt_rows, axis=0)  # (BLOCK_Q, 1) kept-candidate counts

    # tiny n_vals: VPU multiply + lane reduce per value column (skip the MXU)
    num_cols = [jnp.sum(w * vals_t[v:v + 1, :], axis=1, keepdims=True)
                for v in range(n_vals)]                 # n_vals x (BLOCK_Q, 1)
    num = num_cols[0] if n_vals == 1 else jnp.concatenate(num_cols, axis=1)

    # cnt >= 1 always (the zero offset is always kept); approx=True is fine
    # when bit-level agreement with the reference is not required.
    inv_cnt = pl.reciprocal(jnp.maximum(cnt, 1.0), approx=False)
    out_ref[...] = num * inv_cnt


def _round_up(n, m):
    return ((n + m - 1) // m) * m


def nn_interp_forward(vals, x_query, pos, xx, scale_x, block_q=8):
    """Pallas implementation of NNInterp.forward (ftrns1 = identity)."""
    vals = jnp.asarray(vals, jnp.float32)
    if vals.ndim == 1:
        vals = vals[:, None]
    pos = jnp.asarray(pos, jnp.float32)
    x_query = jnp.asarray(x_query, jnp.float32)
    xx = jnp.asarray(xx, jnp.float32)

    n_pos, n_vals = vals.shape
    assert pos.shape[0] == n_pos
    n_query = x_query.shape[0]
    n_grid = xx.shape[0]

    # padded extents: positions on lanes (multiple of 128), candidates on
    # sublanes (multiple of 8), queries padded to the per-step block size.
    p_pad = _round_up(n_pos, 128)
    g_pad = _round_up(max(n_grid, 8), 8)
    q_pad = _round_up(max(n_query, block_q), block_q)

    # reference positions / values, padded along n_pos with far-away sentinel
    # positions (never the nearest) and zero values.
    pos_s = pos / scale_x
    pos_padded = jnp.pad(pos_s, ((0, p_pad - n_pos), (0, 0)), constant_values=1e7)
    pos_t = pos_padded.T                                           # (3, P)
    vals_t = jnp.pad(vals, ((0, p_pad - n_pos), (0, 0))).T         # (n_vals, P)

    # grid offsets; padded rows get an effectively infinite radius so the keep
    # test rejects them regardless of geometry.
    xx_s = xx / scale_x
    xx_padded = jnp.pad(xx_s, ((0, g_pad - n_grid), (0, 0)))       # (G, 3)
    dq2 = jnp.sum(xx_s * xx_s, axis=1, keepdims=True)              # (n_grid, 1)
    dq2_padded = jnp.pad(dq2, ((0, g_pad - n_grid), (0, 0)),
                         constant_values=1e30)                     # (G, 1)

    xq_padded = jnp.pad(x_query / scale_x,
                        ((0, q_pad - n_query), (0, 0)))            # (Qp, 3)

    out = pl.pallas_call(
        _interp_kernel,
        out_shape=jax.ShapeDtypeStruct((q_pad, n_vals), jnp.float32),
        grid_spec=pltpu.PrefetchScalarGridSpec(
            num_scalar_prefetch=0,
            grid=(q_pad // block_q,),
            in_specs=[
                pl.BlockSpec((block_q, 3), lambda i: (i, 0)),       # streamed queries
                pl.BlockSpec((g_pad, 3), lambda i: (0, 0)),         # resident offsets
                pl.BlockSpec((g_pad, 1), lambda i: (0, 0)),         # resident radii^2
                pl.BlockSpec((3, p_pad), lambda i: (0, 0)),         # resident positions
                pl.BlockSpec((n_vals, p_pad), lambda i: (0, 0)),    # resident values
            ],
            out_specs=pl.BlockSpec((block_q, n_vals), lambda i: (i, 0)),
        ),
        compiler_params=pltpu.CompilerParams(
            dimension_semantics=("parallel",)),
    )(xq_padded, xx_padded, dq2_padded, pos_t, vals_t)

    return out[:n_query]


def nn_interp_reference(vals, x_query, pos, xx, scale_x):
    """Pure-JAX reference with the module's math (for correctness check)."""
    vals = jnp.asarray(vals, jnp.float32)
    if vals.ndim == 1:
        vals = vals[:, None]
    qs = jnp.asarray(x_query, jnp.float32) / scale_x
    xs = jnp.asarray(xx, jnp.float32) / scale_x
    ps = jnp.asarray(pos, jnp.float32) / scale_x

    qpts = qs[:, None, :] + xs[None, :, :]                           # (Q, G, 3)
    d2 = jnp.sum((qpts[:, :, None, :] - ps[None, None, :, :]) ** 2, axis=-1)
    min_d2 = d2.min(-1)
    nn = d2.argmin(-1)
    dq2 = jnp.sum(xs * xs, axis=-1)
    keep = (dq2[None, :] <= min_d2).astype(jnp.float32)              # (Q, G)
    gathered = vals[nn]                                              # (Q, G, nv)
    num = jnp.sum(gathered * keep[..., None], axis=1)
    cnt = jnp.sum(keep, axis=1, keepdims=True)
    return jnp.where(cnt > 0, num / cnt, jnp.zeros_like(num))


if __name__ == "__main__":
    # Deterministic synthetic setup (mirrors NNInterp.__init__ with dx given).
    scale_x = 1000.0
    n_res = 5
    dx = 120.0
    n_pos = 64
    n_query = 16          # two query blocks -> exercises the streamed BlockSpec

    # reference grid of offsets (same construction as the module)
    x1 = np.linspace(0, n_res * dx, n_res) - n_res * dx / 2.0
    x11, x12, x13 = np.meshgrid(x1, x1, x1)
    xx = np.concatenate(
        (x11.reshape(-1, 1), x12.reshape(-1, 1), x13.reshape(-1, 1)), axis=1
    ).astype(np.float32)                                             # (n_res^3, 3)

    key = jax.random.PRNGKey(0)
    k_pos, k_val, k_q = jax.random.split(key, 3)
    pos = jax.random.uniform(k_pos, (n_pos, 3), jnp.float32, 0.0, 1000.0)
    vals = jax.random.normal(k_val, (n_pos, 1), jnp.float32)
    x_query = jax.random.uniform(k_q, (n_query, 3), jnp.float32, 100.0, 900.0)

    out = nn_interp_forward(vals, x_query, pos, jnp.asarray(xx), scale_x)
    out = jax.block_until_ready(out)

    ref = jax.block_until_ready(
        nn_interp_reference(vals, x_query, pos, jnp.asarray(xx), scale_x))

    assert out.shape == (n_query, 1)
    assert bool(jnp.all(jnp.isfinite(out)))
    np.testing.assert_allclose(np.asarray(out), np.asarray(ref),
                               rtol=1e-4, atol=1e-5)

    print("KERNEL_OK")
</pallas_src>

<mosaic_0001>
module attributes {stable_mosaic.version = 11 : i64} {
  func.func @_interp_kernel(%arg0: i32, %arg1: memref<8x3xf32, #tpu.memory_space<vmem>>, %arg2: memref<128x3xf32, #tpu.memory_space<vmem>>, %arg3: memref<128x1xf32, #tpu.memory_space<vmem>>, %arg4: memref<3x128xf32, #tpu.memory_space<vmem>>, %arg5: memref<1x128xf32, #tpu.memory_space<vmem>>, %arg6: memref<8x1xf32, #tpu.memory_space<vmem>>) attributes {dimension_semantics = [#tpu.dimension_semantics<parallel>], iteration_bounds = array<i64: 2>, scalar_prefetch = 0 : i64, scratch_operands = 0 : i64, tpu.core_type = #tpu.core_type<tc>, window_params = [{transform_indices = @transform_0, window_bounds = array<i64: 8, 3>}, {pipeline_mode = #tpu.pipeline_mode<synchronous>, transform_indices = @transform_1, window_bounds = array<i64: 128, 3>}, {pipeline_mode = #tpu.pipeline_mode<synchronous>, transform_indices = @transform_2, window_bounds = array<i64: 128, 1>}, {pipeline_mode = #tpu.pipeline_mode<synchronous>, transform_indices = @transform_3, window_bounds = array<i64: 3, 128>}, {pipeline_mode = #tpu.pipeline_mode<synchronous>, transform_indices = @transform_4, window_bounds = array<i64: 1, 128>}, {transform_indices = @transform_5, window_bounds = array<i64: 8, 1>}]} {
    %c0 = arith.constant 0 : index
    %c0_0 = arith.constant 0 : index
    %0 = vector.load %arg1[%c0, %c0_0] : memref<8x3xf32, #tpu.memory_space<vmem>>, vector<8x3xf32>
    %c0_1 = arith.constant 0 : index
    %c0_2 = arith.constant 0 : index
    %1 = vector.load %arg2[%c0_1, %c0_2] : memref<128x3xf32, #tpu.memory_space<vmem>>, vector<128x3xf32>
    %c0_3 = arith.constant 0 : index
    %c0_4 = arith.constant 0 : index
    %2 = vector.load %arg4[%c0_3, %c0_4] : memref<3x128xf32, #tpu.memory_space<vmem>>, vector<3x128xf32>
    %c0_5 = arith.constant 0 : index
    %c0_6 = arith.constant 0 : index
    %3 = vector.load %arg3[%c0_5, %c0_6] : memref<128x1xf32, #tpu.memory_space<vmem>>, vector<128x1xf32>
    %c0_7 = arith.constant 0 : index
    %c0_8 = arith.constant 0 : index
    %4 = vector.load %arg5[%c0_7, %c0_8] : memref<1x128xf32, #tpu.memory_space<vmem>>, vector<1x128xf32>
    %5 = vector.extract_strided_slice %1 {offsets = [0, 0], sizes = [128, 1], strides = [1, 1]} : vector<128x3xf32> to vector<128x1xf32>
    %6 = vector.extract_strided_slice %1 {offsets = [0, 1], sizes = [128, 1], strides = [1, 1]} : vector<128x3xf32> to vector<128x1xf32>
    %7 = vector.extract_strided_slice %1 {offsets = [0, 2], sizes = [128, 1], strides = [1, 1]} : vector<128x3xf32> to vector<128x1xf32>
    %8 = vector.extract_strided_slice %2 {offsets = [0, 0], sizes = [1, 128], strides = [1, 1]} : vector<3x128xf32> to vector<1x128xf32>
    %9 = vector.extract_strided_slice %2 {offsets = [1, 0], sizes = [1, 128], strides = [1, 1]} : vector<3x128xf32> to vector<1x128xf32>
    %10 = vector.extract_strided_slice %2 {offsets = [2, 0], sizes = [1, 128], strides = [1, 1]} : vector<3x128xf32> to vector<1x128xf32>
    %11 = vector.extract_strided_slice %0 {offsets = [0, 0], sizes = [1, 1], strides = [1, 1]} : vector<8x3xf32> to vector<1x1xf32>
    %12 = vector.broadcast %11 : vector<1x1xf32> to vector<128x1xf32>
    %13 = arith.addf %12, %5 : vector<128x1xf32>
    %14 = vector.broadcast %13 : vector<128x1xf32> to vector<128x128xf32>
    %15 = vector.broadcast %8 : vector<1x128xf32> to vector<128x128xf32>
    %16 = arith.subf %14, %15 : vector<128x128xf32>
    %17 = arith.mulf %16, %16 : vector<128x128xf32>
    %18 = vector.extract_strided_slice %0 {offsets = [0, 1], sizes = [1, 1], strides = [1, 1]} : vector<8x3xf32> to vector<1x1xf32>
    %19 = vector.broadcast %18 : vector<1x1xf32> to vector<128x1xf32>
    %20 = arith.addf %19, %6 : vector<128x1xf32>
    %21 = vector.broadcast %20 : vector<128x1xf32> to vector<128x128xf32>
    %22 = vector.broadcast %9 : vector<1x128xf32> to vector<128x128xf32>
    %23 = arith.subf %21, %22 : vector<128x128xf32>
    %24 = arith.mulf %23, %23 : vector<128x128xf32>
    %25 = arith.addf %17, %24 : vector<128x128xf32>
    %26 = vector.extract_strided_slice %0 {offsets = [0, 2], sizes = [1, 1], strides = [1, 1]} : vector<8x3xf32> to vector<1x1xf32>
    %27 = vector.broadcast %26 : vector<1x1xf32> to vector<128x1xf32>
    %28 = arith.addf %27, %7 : vector<128x1xf32>
    %29 = vector.broadcast %28 : vector<128x1xf32> to vector<128x128xf32>
    %30 = vector.broadcast %10 : vector<1x128xf32> to vector<128x128xf32>
    %31 = arith.subf %29, %30 : vector<128x128xf32>
    %32 = arith.mulf %31, %31 : vector<128x128xf32>
    %33 = arith.addf %25, %32 : vector<128x128xf32>
    %cst = arith.constant dense<0x7F800000> : vector<128xf32>
    %34 = vector.multi_reduction <minimumf>, %33, %cst [1] : vector<128x128xf32> to vector<128xf32>
    %35 = vector.shape_cast %34 : vector<128xf32> to vector<128x1xf32>
    %36 = vector.broadcast %35 : vector<128x1xf32> to vector<128x128xf32>
    %37 = arith.cmpf oeq, %33, %36 : vector<128x128xf32>
    %38 = arith.extui %37 : vector<128x128xi1> to vector<128x128xi32>
    %39 = arith.sitofp %38 : vector<128x128xi32> to vector<128x128xf32>
    %40 = arith.cmpf ole, %3, %35 : vector<128x1xf32>
    %41 = arith.extui %40 : vector<128x1xi1> to vector<128x1xi32>
    %42 = arith.sitofp %41 : vector<128x1xi32> to vector<128x1xf32>
    %43 = vector.broadcast %42 : vector<128x1xf32> to vector<128x128xf32>
    %44 = arith.mulf %39, %43 : vector<128x128xf32>
    %cst_9 = arith.constant dense<0.000000e+00> : vector<128xf32>
    %45 = vector.multi_reduction <add>, %44, %cst_9 [0] : vector<128x128xf32> to vector<128xf32>
    %46 = vector.shape_cast %45 : vector<128xf32> to vector<1x128xf32>
    %cst_10 = arith.constant dense<0.000000e+00> : vector<1xf32>
    %47 = vector.multi_reduction <add>, %42, %cst_10 [0] : vector<128x1xf32> to vector<1xf32>
    %48 = vector.shape_cast %47 : vector<1xf32> to vector<1x1xf32>
    %49 = vector.extract_strided_slice %0 {offsets = [1, 0], sizes = [1, 1], strides = [1, 1]} : vector<8x3xf32> to vector<1x1xf32>
    %50 = vector.broadcast %49 : vector<1x1xf32> to vector<128x1xf32>
    %51 = arith.addf %50, %5 : vector<128x1xf32>
    %52 = vector.broadcast %51 : vector<128x1xf32> to vector<128x128xf32>
    %53 = vector.broadcast %8 : vector<1x128xf32> to vector<128x128xf32>
    %54 = arith.subf %52, %53 : vector<128x128xf32>
    %55 = arith.mulf %54, %54 : vector<128x128xf32>
    %56 = vector.extract_strided_slice %0 {offsets = [1, 1], sizes = [1, 1], strides = [1, 1]} : vector<8x3xf32> to vector<1x1xf32>
    %57 = vector.broadcast %56 : vector<1x1xf32> to vector<128x1xf32>
    %58 = arith.addf %57, %6 : vector<128x1xf32>
    %59 = vector.broadcast %58 : vector<128x1xf32> to vector<128x128xf32>
    %60 = vector.broadcast %9 : vector<1x128xf32> to vector<128x128xf32>
    %61 = arith.subf %59, %60 : vector<128x128xf32>
    %62 = arith.mulf %61, %61 : vector<128x128xf32>
    %63 = arith.addf %55, %62 : vector<128x128xf32>
    %64 = vector.extract_strided_slice %0 {offsets = [1, 2], sizes = [1, 1], strides = [1, 1]} : vector<8x3xf32> to vector<1x1xf32>
    %65 = vector.broadcast %64 : vector<1x1xf32> to vector<128x1xf32>
    %66 = arith.addf %65, %7 : vector<128x1xf32>
    %67 = vector.broadcast %66 : vector<128x1xf32> to vector<128x128xf32>
    %68 = vector.broadcast %10 : vector<1x128xf32> to vector<128x128xf32>
    %69 = arith.subf %67, %68 : vector<128x128xf32>
    %70 = arith.mulf %69, %69 : vector<128x128xf32>
    %71 = arith.addf %63, %70 : vector<128x128xf32>
    %cst_11 = arith.constant dense<0x7F800000> : vector<128xf32>
    %72 = vector.multi_reduction <minimumf>, %71, %cst_11 [1] : vector<128x128xf32> to vector<128xf32>
    %73 = vector.shape_cast %72 : vector<128xf32> to vector<128x1xf32>
    %74 = vector.broadcast %73 : vector<128x1xf32> to vector<128x128xf32>
    %75 = arith.cmpf oeq, %71, %74 : vector<128x128xf32>
    %76 = arith.extui %75 : vector<128x128xi1> to vector<128x128xi32>
    %77 = arith.sitofp %76 : vector<128x128xi32> to vector<128x128xf32>
    %78 = arith.cmpf ole, %3, %73 : vector<128x1xf32>
    %79 = arith.extui %78 : vector<128x1xi1> to vector<128x1xi32>
    %80 = arith.sitofp %79 : vector<128x1xi32> to vector<128x1xf32>
    %81 = vector.broadcast %80 : vector<128x1xf32> to vector<128x128xf32>
    %82 = arith.mulf %77, %81 : vector<128x128xf32>
    %cst_12 = arith.constant dense<0.000000e+00> : vector<128xf32>
    %83 = vector.multi_reduction <add>, %82, %cst_12 [0] : vector<128x128xf32> to vector<128xf32>
    %84 = vector.shape_cast %83 : vector<128xf32> to vector<1x128xf32>
    %cst_13 = arith.constant dense<0.000000e+00> : vector<1xf32>
    %85 = vector.multi_reduction <add>, %80, %cst_13 [0] : vector<128x1xf32> to vector<1xf32>
    %86 = vector.shape_cast %85 : vector<1xf32> to vector<1x1xf32>
    %87 = vector.extract_strided_slice %0 {offsets = [2, 0], sizes = [1, 1], strides = [1, 1]} : vector<8x3xf32> to vector<1x1xf32>
    %88 = vector.broadcast %87 : vector<1x1xf32> to vector<128x1xf32>
    %89 = arith.addf %88, %5 : vector<128x1xf32>
    %90 = vector.broadcast %89 : vector<128x1xf32> to vector<128x128xf32>
    %91 = vector.broadcast %8 : vector<1x128xf32> to vector<128x128xf32>
    %92 = arith.subf %90, %91 : vector<128x128xf32>
    %93 = arith.mulf %92, %92 : vector<128x128xf32>
    %94 = vector.extract_strided_slice %0 {offsets = [2, 1], sizes = [1, 1], strides = [1, 1]} : vector<8x3xf32> to vector<1x1xf32>
    %95 = vector.broadcast %94 : vector<1x1xf32> to vector<128x1xf32>
    %96 = arith.addf %95, %6 : vector<128x1xf32>
    %97 = vector.broadcast %96 : vector<128x1xf32> to vector<128x128xf32>
    %98 = vector.broadcast %9 : vector<1x128xf32> to vector<128x128xf32>
    %99 = arith.subf %97, %98 : vector<128x128xf32>
    %100 = arith.mulf %99, %99 : vector<128x128xf32>
    %101 = arith.addf %93, %100 : vector<128x128xf32>
    %102 = vector.extract_strided_slice %0 {offsets = [2, 2], sizes = [1, 1], strides = [1, 1]} : vector<8x3xf32> to vector<1x1xf32>
    %103 = vector.broadcast %102 : vector<1x1xf32> to vector<128x1xf32>
    %104 = arith.addf %103, %7 : vector<128x1xf32>
    %105 = vector.broadcast %104 : vector<128x1xf32> to vector<128x128xf32>
    %106 = vector.broadcast %10 : vector<1x128xf32> to vector<128x128xf32>
    %107 = arith.subf %105, %106 : vector<128x128xf32>
    %108 = arith.mulf %107, %107 : vector<128x128xf32>
    %109 = arith.addf %101, %108 : vector<128x128xf32>
    %cst_14 = arith.constant dense<0x7F800000> : vector<128xf32>
    %110 = vector.multi_reduction <minimumf>, %109, %cst_14 [1] : vector<128x128xf32> to vector<128xf32>
    %111 = vector.shape_cast %110 : vector<128xf32> to vector<128x1xf32>
    %112 = vector.broadcast %111 : vector<128x1xf32> to vector<128x128xf32>
    %113 = arith.cmpf oeq, %109, %112 : vector<128x128xf32>
    %114 = arith.extui %113 : vector<128x128xi1> to vector<128x128xi32>
    %115 = arith.sitofp %114 : vector<128x128xi32> to vector<128x128xf32>
    %116 = arith.cmpf ole, %3, %111 : vector<128x1xf32>
    %117 = arith.extui %116 : vector<128x1xi1> to vector<128x1xi32>
    %118 = arith.sitofp %117 : vector<128x1xi32> to vector<128x1xf32>
    %119 = vector.broadcast %118 : vector<128x1xf32> to vector<128x128xf32>
    %120 = arith.mulf %115, %119 : vector<128x128xf32>
    %cst_15 = arith.constant dense<0.000000e+00> : vector<128xf32>
    %121 = vector.multi_reduction <add>, %120, %cst_15 [0] : vector<128x128xf32> to vector<128xf32>
    %122 = vector.shape_cast %121 : vector<128xf32> to vector<1x128xf32>
    %cst_16 = arith.constant dense<0.000000e+00> : vector<1xf32>
    %123 = vector.multi_reduction <add>, %118, %cst_16 [0] : vector<128x1xf32> to vector<1xf32>
    %124 = vector.shape_cast %123 : vector<1xf32> to vector<1x1xf32>
    %125 = vector.extract_strided_slice %0 {offsets = [3, 0], sizes = [1, 1], strides = [1, 1]} : vector<8x3xf32> to vector<1x1xf32>
    %126 = vector.broadcast %125 : vector<1x1xf32> to vector<128x1xf32>
    %127 = arith.addf %126, %5 : vector<128x1xf32>
    %128 = vector.broadcast %127 : vector<128x1xf32> to vector<128x128xf32>
    %129 = vector.broadcast %8 : vector<1x128xf32> to vector<128x128xf32>
    %130 = arith.subf %128, %129 : vector<128x128xf32>
    %131 = arith.mulf %130, %130 : vector<128x128xf32>
    %132 = vector.extract_strided_slice %0 {offsets = [3, 1], sizes = [1, 1], strides = [1, 1]} : vector<8x3xf32> to vector<1x1xf32>
    %133 = vector.broadcast %132 : vector<1x1xf32> to vector<128x1xf32>
    %134 = arith.addf %133, %6 : vector<128x1xf32>
    %135 = vector.broadcast %134 : vector<128x1xf32> to vector<128x128xf32>
    %136 = vector.broadcast %9 : vector<1x128xf32> to vector<128x128xf32>
    %137 = arith.subf %135, %136 : vector<128x128xf32>
    %138 = arith.mulf %137, %137 : vector<128x128xf32>
    %139 = arith.addf %131, %138 : vector<128x128xf32>
    %140 = vector.extract_strided_slice %0 {offsets = [3, 2], sizes = [1, 1], strides = [1, 1]} : vector<8x3xf32> to vector<1x1xf32>
    %141 = vector.broadcast %140 : vector<1x1xf32> to vector<128x1xf32>
    %142 = arith.addf %141, %7 : vector<128x1xf32>
    %143 = vector.broadcast %142 : vector<128x1xf32> to vector<128x128xf32>
    %144 = vector.broadcast %10 : vector<1x128xf32> to vector<128x128xf32>
    %145 = arith.subf %143, %144 : vector<128x128xf32>
    %146 = arith.mulf %145, %145 : vector<128x128xf32>
    %147 = arith.addf %139, %146 : vector<128x128xf32>
    %cst_17 = arith.constant dense<0x7F800000> : vector<128xf32>
    %148 = vector.multi_reduction <minimumf>, %147, %cst_17 [1] : vector<128x128xf32> to vector<128xf32>
    %149 = vector.shape_cast %148 : vector<128xf32> to vector<128x1xf32>
    %150 = vector.broadcast %149 : vector<128x1xf32> to vector<128x128xf32>
    %151 = arith.cmpf oeq, %147, %150 : vector<128x128xf32>
    %152 = arith.extui %151 : vector<128x128xi1> to vector<128x128xi32>
    %153 = arith.sitofp %152 : vector<128x128xi32> to vector<128x128xf32>
    %154 = arith.cmpf ole, %3, %149 : vector<128x1xf32>
    %155 = arith.extui %154 : vector<128x1xi1> to vector<128x1xi32>
    %156 = arith.sitofp %155 : vector<128x1xi32> to vector<128x1xf32>
    %157 = vector.broadcast %156 : vector<128x1xf32> to vector<128x128xf32>
    %158 = arith.mulf %153, %157 : vector<128x128xf32>
    %cst_18 = arith.constant dense<0.000000e+00> : vector<128xf32>
    %159 = vector.multi_reduction <add>, %158, %cst_18 [0] : vector<128x128xf32> to vector<128xf32>
    %160 = vector.shape_cast %159 : vector<128xf32> to vector<1x128xf32>
    %cst_19 = arith.constant dense<0.000000e+00> : vector<1xf32>
    %161 = vector.multi_reduction <add>, %156, %cst_19 [0] : vector<128x1xf32> to vector<1xf32>
    %162 = vector.shape_cast %161 : vector<1xf32> to vector<1x1xf32>
    %163 = vector.extract_strided_slice %0 {offsets = [4, 0], sizes = [1, 1], strides = [1, 1]} : vector<8x3xf32> to vector<1x1xf32>
    %164 = vector.broadcast %163 : vector<1x1xf32> to vector<128x1xf32>
    %165 = arith.addf %164, %5 : vector<128x1xf32>
    %166 = vector.broadcast %165 : vector<128x1xf32> to vector<128x128xf32>
    %167 = vector.broadcast %8 : vector<1x128xf32> to vector<128x128xf32>
    %168 = arith.subf %166, %167 : vector<128x128xf32>
    %169 = arith.mulf %168, %168 : vector<128x128xf32>
    %170 = vector.extract_strided_slice %0 {offsets = [4, 1], sizes = [1, 1], strides = [1, 1]} : vector<8x3xf32> to vector<1x1xf32>
    %171 = vector.broadcast %170 : vector<1x1xf32> to vector<128x1xf32>
    %172 = arith.addf %171, %6 : vector<128x1xf32>
    %173 = vector.broadcast %172 : vector<128x1xf32> to vector<128x128xf32>
    %174 = vector.broadcast %9 : vector<1x128xf32> to vector<128x128xf32>
    %175 = arith.subf %173, %174 : vector<128x128xf32>
    %176 = arith.mulf %175, %175 : vector<128x128xf32>
    %177 = arith.addf %169, %176 : vector<128x128xf32>
    %178 = vector.extract_strided_slice %0 {offsets = [4, 2], sizes = [1, 1], strides = [1, 1]} : vector<8x3xf32> to vector<1x1xf32>
    %179 = vector.broadcast %178 : vector<1x1xf32> to vector<128x1xf32>
    %180 = arith.addf %179, %7 : vector<128x1xf32>
    %181 = vector.broadcast %180 : vector<128x1xf32> to vector<128x128xf32>
    %182 = vector.broadcast %10 : vector<1x128xf32> to vector<128x128xf32>
    %183 = arith.subf %181, %182 : vector<128x128xf32>
    %184 = arith.mulf %183, %183 : vector<128x128xf32>
    %185 = arith.addf %177, %184 : vector<128x128xf32>
    %cst_20 = arith.constant dense<0x7F800000> : vector<128xf32>
    %186 = vector.multi_reduction <minimumf>, %185, %cst_20 [1] : vector<128x128xf32> to vector<128xf32>
    %187 = vector.shape_cast %186 : vector<128xf32> to vector<128x1xf32>
    %188 = vector.broadcast %187 : vector<128x1xf32> to vector<128x128xf32>
    %189 = arith.cmpf oeq, %185, %188 : vector<128x128xf32>
    %190 = arith.extui %189 : vector<128x128xi1> to vector<128x128xi32>
    %191 = arith.sitofp %190 : vector<128x128xi32> to vector<128x128xf32>
    %192 = arith.cmpf ole, %3, %187 : vector<128x1xf32>
    %193 = arith.extui %192 : vector<128x1xi1> to vector<128x1xi32>
    %194 = arith.sitofp %193 : vector<128x1xi32> to vector<128x1xf32>
    %195 = vector.broadcast %194 : vector<128x1xf32> to vector<128x128xf32>
    %196 = arith.mulf %191, %195 : vector<128x128xf32>
    %cst_21 = arith.constant dense<0.000000e+00> : vector<128xf32>
    %197 = vector.multi_reduction <add>, %196, %cst_21 [0] : vector<128x128xf32> to vector<128xf32>
    %198 = vector.shape_cast %197 : vector<128xf32> to vector<1x128xf32>
    %cst_22 = arith.constant dense<0.000000e+00> : vector<1xf32>
    %199 = vector.multi_reduction <add>, %194, %cst_22 [0] : vector<128x1xf32> to vector<1xf32>
    %200 = vector.shape_cast %199 : vector<1xf32> to vector<1x1xf32>
    %201 = vector.extract_strided_slice %0 {offsets = [5, 0], sizes = [1, 1], strides = [1, 1]} : vector<8x3xf32> to vector<1x1xf32>
    %202 = vector.broadcast %201 : vector<1x1xf32> to vector<128x1xf32>
    %203 = arith.addf %202, %5 : vector<128x1xf32>
    %204 = vector.broadcast %203 : vector<128x1xf32> to vector<128x128xf32>
    %205 = vector.broadcast %8 : vector<1x128xf32> to vector<128x128xf32>
    %206 = arith.subf %204, %205 : vector<128x128xf32>
    %207 = arith.mulf %206, %206 : vector<128x128xf32>
    %208 = vector.extract_strided_slice %0 {offsets = [5, 1], sizes = [1, 1], strides = [1, 1]} : vector<8x3xf32> to vector<1x1xf32>
    %209 = vector.broadcast %208 : vector<1x1xf32> to vector<128x1xf32>
    %210 = arith.addf %209, %6 : vector<128x1xf32>
    %211 = vector.broadcast %210 : vector<128x1xf32> to vector<128x128xf32>
    %212 = vector.broadcast %9 : vector<1x128xf32> to vector<128x128xf32>
    %213 = arith.subf %211, %212 : vector<128x128xf32>
    %214 = arith.mulf %213, %213 : vector<128x128xf32>
    %215 = arith.addf %207, %214 : vector<128x128xf32>
    %216 = vector.extract_strided_slice %0 {offsets = [5, 2], sizes = [1, 1], strides = [1, 1]} : vector<8x3xf32> to vector<1x1xf32>
    %217 = vector.broadcast %216 : vector<1x1xf32> to vector<128x1xf32>
    %218 = arith.addf %217, %7 : vector<128x1xf32>
    %219 = vector.broadcast %218 : vector<128x1xf32> to vector<128x128xf32>
    %220 = vector.broadcast %10 : vector<1x128xf32> to vector<128x128xf32>
    %221 = arith.subf %219, %220 : vector<128x128xf32>
    %222 = arith.mulf %221, %221 : vector<128x128xf32>
    %223 = arith.addf %215, %222 : vector<128x128xf32>
    %cst_23 = arith.constant dense<0x7F800000> : vector<128xf32>
    %224 = vector.multi_reduction <minimumf>, %223, %cst_23 [1] : vector<128x128xf32> to vector<128xf32>
    %225 = vector.shape_cast %224 : vector<128xf32> to vector<128x1xf32>
    %226 = vector.broadcast %225 : vector<128x1xf32> to vector<128x128xf32>
    %227 = arith.cmpf oeq, %223, %226 : vector<128x128xf32>
    %228 = arith.extui %227 : vector<128x128xi1> to vector<128x128xi32>
    %229 = arith.sitofp %228 : vector<128x128xi32> to vector<128x128xf32>
    %230 = arith.cmpf ole, %3, %225 : vector<128x1xf32>
    %231 = arith.extui %230 : vector<128x1xi1> to vector<128x1xi32>
    %232 = arith.sitofp %231 : vector<128x1xi32> to vector<128x1xf32>
    %233 = vector.broadcast %232 : vector<128x1xf32> to vector<128x128xf32>
    %234 = arith.mulf %229, %233 : vector<128x128xf32>
    %cst_24 = arith.constant dense<0.000000e+00> : vector<128xf32>
    %235 = vector.multi_reduction <add>, %234, %cst_24 [0] : vector<128x128xf32> to vector<128xf32>
    %236 = vector.shape_cast %235 : vector<128xf32> to vector<1x128xf32>
    %cst_25 = arith.constant dense<0.000000e+00> : vector<1xf32>
    %237 = vector.multi_reduction <add>, %232, %cst_25 [0] : vector<128x1xf32> to vector<1xf32>
    %238 = vector.shape_cast %237 : vector<1xf32> to vector<1x1xf32>
    %239 = vector.extract_strided_slice %0 {offsets = [6, 0], sizes = [1, 1], strides = [1, 1]} : vector<8x3xf32> to vector<1x1xf32>
    %240 = vector.broadcast %239 : vector<1x1xf32> to vector<128x1xf32>
    %241 = arith.addf %240, %5 : vector<128x1xf32>
    %242 = vector.broadcast %241 : vector<128x1xf32> to vector<128x128xf32>
    %243 = vector.broadcast %8 : vector<1x128xf32> to vector<128x128xf32>
    %244 = arith.subf %242, %243 : vector<128x128xf32>
    %245 = arith.mulf %244, %244 : vector<128x128xf32>
    %246 = vector.extract_strided_slice %0 {offsets = [6, 1], sizes = [1, 1], strides = [1, 1]} : vector<8x3xf32> to vector<1x1xf32>
    %247 = vector.broadcast %246 : vector<1x1xf32> to vector<128x1xf32>
    %248 = arith.addf %247, %6 : vector<128x1xf32>
    %249 = vector.broadcast %248 : vector<128x1xf32> to vector<128x128xf32>
    %250 = vector.broadcast %9 : vector<1x128xf32> to vector<128x128xf32>
    %251 = arith.subf %249, %250 : vector<128x128xf32>
    %252 = arith.mulf %251, %251 : vector<128x128xf32>
    %253 = arith.addf %245, %252 : vector<128x128xf32>
    %254 = vector.extract_strided_slice %0 {offsets = [6, 2], sizes = [1, 1], strides = [1, 1]} : vector<8x3xf32> to vector<1x1xf32>
    %255 = vector.broadcast %254 : vector<1x1xf32> to vector<128x1xf32>
    %256 = arith.addf %255, %7 : vector<128x1xf32>
    %257 = vector.broadcast %256 : vector<128x1xf32> to vector<128x128xf32>
    %258 = vector.broadcast %10 : vector<1x128xf32> to vector<128x128xf32>
    %259 = arith.subf %257, %258 : vector<128x128xf32>
    %260 = arith.mulf %259, %259 : vector<128x128xf32>
    %261 = arith.addf %253, %260 : vector<128x128xf32>
    %cst_26 = arith.constant dense<0x7F800000> : vector<128xf32>
    %262 = vector.multi_reduction <minimumf>, %261, %cst_26 [1] : vector<128x128xf32> to vector<128xf32>
    %263 = vector.shape_cast %262 : vector<128xf32> to vector<128x1xf32>
    %264 = vector.broadcast %263 : vector<128x1xf32> to vector<128x128xf32>
    %265 = arith.cmpf oeq, %261, %264 : vector<128x128xf32>
    %266 = arith.extui %265 : vector<128x128xi1> to vector<128x128xi32>
    %267 = arith.sitofp %266 : vector<128x128xi32> to vector<128x128xf32>
    %268 = arith.cmpf ole, %3, %263 : vector<128x1xf32>
    %269 = arith.extui %268 : vector<128x1xi1> to vector<128x1xi32>
    %270 = arith.sitofp %269 : vector<128x1xi32> to vector<128x1xf32>
    %271 = vector.broadcast %270 : vector<128x1xf32> to vector<128x128xf32>
    %272 = arith.mulf %267, %271 : vector<128x128xf32>
    %cst_27 = arith.constant dense<0.000000e+00> : vector<128xf32>
    %273 = vector.multi_reduction <add>, %272, %cst_27 [0] : vector<128x128xf32> to vector<128xf32>
    %274 = vector.shape_cast %273 : vector<128xf32> to vector<1x128xf32>
    %cst_28 = arith.constant dense<0.000000e+00> : vector<1xf32>
    %275 = vector.multi_reduction <add>, %270, %cst_28 [0] : vector<128x1xf32> to vector<1xf32>
    %276 = vector.shape_cast %275 : vector<1xf32> to vector<1x1xf32>
    %277 = vector.extract_strided_slice %0 {offsets = [7, 0], sizes = [1, 1], strides = [1, 1]} : vector<8x3xf32> to vector<1x1xf32>
    %278 = vector.broadcast %277 : vector<1x1xf32> to vector<128x1xf32>
    %279 = arith.addf %278, %5 : vector<128x1xf32>
    %280 = vector.broadcast %279 : vector<128x1xf32> to vector<128x128xf32>
    %281 = vector.broadcast %8 : vector<1x128xf32> to vector<128x128xf32>
    %282 = arith.subf %280, %281 : vector<128x128xf32>
    %283 = arith.mulf %282, %282 : vector<128x128xf32>
    %284 = vector.extract_strided_slice %0 {offsets = [7, 1], sizes = [1, 1], strides = [1, 1]} : vector<8x3xf32> to vector<1x1xf32>
    %285 = vector.broadcast %284 : vector<1x1xf32> to vector<128x1xf32>
    %286 = arith.addf %285, %6 : vector<128x1xf32>
    %287 = vector.broadcast %286 : vector<128x1xf32> to vector<128x128xf32>
    %288 = vector.broadcast %9 : vector<1x128xf32> to vector<128x128xf32>
    %289 = arith.subf %287, %288 : vector<128x128xf32>
    %290 = arith.mulf %289, %289 : vector<128x128xf32>
    %291 = arith.addf %283, %290 : vector<128x128xf32>
    %292 = vector.extract_strided_slice %0 {offsets = [7, 2], sizes = [1, 1], strides = [1, 1]} : vector<8x3xf32> to vector<1x1xf32>
    %293 = vector.broadcast %292 : vector<1x1xf32> to vector<128x1xf32>
    %294 = arith.addf %293, %7 : vector<128x1xf32>
    %295 = vector.broadcast %294 : vector<128x1xf32> to vector<128x128xf32>
    %296 = vector.broadcast %10 : vector<1x128xf32> to vector<128x128xf32>
    %297 = arith.subf %295, %296 : vector<128x128xf32>
    %298 = arith.mulf %297, %297 : vector<128x128xf32>
    %299 = arith.addf %291, %298 : vector<128x128xf32>
    %cst_29 = arith.constant dense<0x7F800000> : vector<128xf32>
    %300 = vector.multi_reduction <minimumf>, %299, %cst_29 [1] : vector<128x128xf32> to vector<128xf32>
    %301 = vector.shape_cast %300 : vector<128xf32> to vector<128x1xf32>
    %302 = vector.broadcast %301 : vector<128x1xf32> to vector<128x128xf32>
    %303 = arith.cmpf oeq, %299, %302 : vector<128x128xf32>
    %304 = arith.extui %303 : vector<128x128xi1> to vector<128x128xi32>
    %305 = arith.sitofp %304 : vector<128x128xi32> to vector<128x128xf32>
    %306 = arith.cmpf ole, %3, %301 : vector<128x1xf32>
    %307 = arith.extui %306 : vector<128x1xi1> to vector<128x1xi32>
    %308 = arith.sitofp %307 : vector<128x1xi32> to vector<128x1xf32>
    %309 = vector.broadcast %308 : vector<128x1xf32> to vector<128x128xf32>
    %310 = arith.mulf %305, %309 : vector<128x128xf32>
    %cst_30 = arith.constant dense<0.000000e+00> : vector<128xf32>
    %311 = vector.multi_reduction <add>, %310, %cst_30 [0] : vector<128x128xf32> to vector<128xf32>
    %312 = vector.shape_cast %311 : vector<128xf32> to vector<1x128xf32>
    %cst_31 = arith.constant dense<0.000000e+00> : vector<1xf32>
    %313 = vector.multi_reduction <add>, %308, %cst_31 [0] : vector<128x1xf32> to vector<1xf32>
    %314 = vector.shape_cast %313 : vector<1xf32> to vector<1x1xf32>
    %315 = tpu.concatenate %46, %84, %122, %160, %198, %236, %274, %312 in 0 : vector<1x128xf32>, vector<1x128xf32>, vector<1x128xf32>, vector<1x128xf32>, vector<1x128xf32>, vector<1x128xf32>, vector<1x128xf32>, vector<1x128xf32> -> vector<8x128xf32>
    %316 = tpu.concatenate %48, %86, %124, %162, %200, %238, %276, %314 in 0 : vector<1x1xf32>, vector<1x1xf32>, vector<1x1xf32>, vector<1x1xf32>, vector<1x1xf32>, vector<1x1xf32>, vector<1x1xf32>, vector<1x1xf32> -> vector<8x1xf32>
    %317 = vector.broadcast %4 : vector<1x128xf32> to vector<8x128xf32>
    %318 = arith.mulf %315, %317 : vector<8x128xf32>
    %cst_32 = arith.constant dense<0.000000e+00> : vector<8xf32>
    %319 = vector.multi_reduction <add>, %318, %cst_32 [1] : vector<8x128xf32> to vector<8xf32>
    %320 = vector.shape_cast %319 : vector<8xf32> to vector<8x1xf32>
    %cst_33 = arith.constant 1.000000e+00 : f32
    %321 = vector.broadcast %cst_33 : f32 to vector<8x1xf32>
    %322 = arith.maximumf %316, %321 : vector<8x1xf32>
    %323 = tpu.reciprocal %322 : vector<8x1xf32> -> vector<8x1xf32>
    %324 = arith.mulf %320, %323 : vector<8x1xf32>
    %c0_34 = arith.constant 0 : index
    %c0_35 = arith.constant 0 : index
    %325 = vector.load %arg6[%c0_34, %c0_35] : memref<8x1xf32, #tpu.memory_space<vmem>>, vector<8x1xf32>
    tpu.vector_store %arg6[%c0_34, %c0_35], %324 {strides = array<i32>} : memref<8x1xf32, #tpu.memory_space<vmem>>, vector<8x1xf32>,
    return
  }
  func.func @transform_0(%arg0: i32) -> (i32, i32) {
    %c0_i32 = arith.constant 0 : i32
    %c0_i32_0 = arith.constant 0 : i32
    return %arg0, %c0_i32 : i32, i32
  }
  func.func @transform_1(%arg0: i32) -> (i32, i32) {
    %c0_i32 = arith.constant 0 : i32
    %c0_i32_0 = arith.constant 0 : i32
    %c0_i32_1 = arith.constant 0 : i32
    return %c0_i32, %c0_i32_0 : i32, i32
  }
  func.func @transform_2(%arg0: i32) -> (i32, i32) {
    %c0_i32 = arith.constant 0 : i32
    %c0_i32_0 = arith.constant 0 : i32
    %c0_i32_1 = arith.constant 0 : i32
    return %c0_i32, %c0_i32_0 : i32, i32
  }
  func.func @transform_3(%arg0: i32) -> (i32, i32) {
    %c0_i32 = arith.constant 0 : i32
    %c0_i32_0 = arith.constant 0 : i32
    %c0_i32_1 = arith.constant 0 : i32
    return %c0_i32, %c0_i32_0 : i32, i32
  }
  func.func @transform_4(%arg0: i32) -> (i32, i32) {
    %c0_i32 = arith.constant 0 : i32
    %c0_i32_0 = arith.constant 0 : i32
    %c0_i32_1 = arith.constant 0 : i32
    return %c0_i32, %c0_i32_0 : i32, i32
  }
  func.func @transform_5(%arg0: i32) -> (i32, i32) {
    %c0_i32 = arith.constant 0 : i32
    %c0_i32_0 = arith.constant 0 : i32
    return %arg0, %c0_i32 : i32, i32
  }
}

</mosaic_0001>

<llo_original>
// kernel: tpu_custom_call.1
$region0: #{tpu_custom_call.1}
  #allocation0 [shape = 'u32[]', space=smem, size = 0x4, offset = 0x4, fixed_abs, tag = 'smem constant byte address 0x4 - core index']
  #allocation1 [shape = 'u32[144,128]{1,0:T(1,128)}', space=vmem, size = 0x12000, scoped, tag = 'internal scratch']
  %s0 = inlined_call_operand.vmem [shape: f32[16,3], index: 0, kind: input, shape index: {}]
  %s1 = inlined_call_operand.vmem [shape: f32[128,3], index: 1, kind: input, shape index: {}]
  %s2 = inlined_call_operand.vmem [shape: f32[128,1], index: 2, kind: input, shape index: {}]
  %s3 = inlined_call_operand.vmem [shape: f32[3,128], index: 3, kind: input, shape index: {}]
  %s4 = inlined_call_operand.vmem [shape: f32[1,128], index: 4, kind: input, shape index: {}]
  %s5 = inlined_call_operand.vmem [shape: f32[16,1], index: 5, kind: output, shape index: {}]
  %s6 = sld [smem:[#allocation0]]
  $region53: #{tpu_custom_call.1} parent=0
    _
  %s8 = ssub.s32 1, %s6
  %s9 = scalar_select 0, %s8, %s6
  loop: start=0, step=1, limit=4
  $region2: #{tpu_custom_call.1} parent=0 // loop_pre_header
    _
  $region3: #{tpu_custom_call.1} parent=0 // loop_header
    %s11 = sphi 0, %s15
    %p12 = scmp.ge.s32.totalorder %s11, 4
    %s21 = sphi 0, %s23
    %s24 = sphi 0, %s21
    %s25 = sphi 0, %s24
    %s41 = sphi 0, %s25
    %s45 = sphi 0, %s45
    %s47 = sphi 0, %s45
    %s48 = sphi 0, %s47
    %s62 = sphi 0, %s48
    %s66 = sphi 0, %s66
    %s68 = sphi 0, %s66
    %s69 = sphi 0, %s68
    %s83 = sphi 0, %s69
    %s87 = sphi 0, %s87
    %s89 = sphi 0, %s87
    %s90 = sphi 0, %s89
    %s104 = sphi 0, %s90
    %s108 = sphi 0, %s108
    %s110 = sphi 0, %s108
    %s111 = sphi 0, %s110
    %s125 = sphi 0, %s111
    %s131 = sphi 0, %s133
    %s134 = sphi 0, %s131
    %s135 = sphi 0, %s134
    %s151 = sphi 0, %s135
  $region4: #{tpu_custom_call.1} parent=0 // loop_header_branch
    %14 = sbr.rel (%p12) target = $region8
  $region5: #{tpu_custom_call.1} parent=0 // loop_body
    %s16 = ssub.s32 %s11, 1
    %s17 = ssub.s32 %s11, 2
    %s18 = sadd.s32 %s11, 1
    %s19 = ssub.s32 %s11, %s18
    %p20 = scmp.eq.s32.totalorder %s19, 0
    %s22 = sadd.s32 %s21, 1
    %s23 = scalar_select %p20, %s21, %s22
    %p26 = pneg %p20
    %p27 = scmp.eq.s32.totalorder %s11, 1
    %p28 = por %p26, %p27
    %p29 = scmp.ne.s32.totalorder %s21, %s24
    %p30 = scmp.eq.s32.totalorder %s11, 0
    %p31 = por %p29, %p30
    %p32 = scmp.ne.s32.totalorder %s21, %s24
    %p33 = scmp.eq.s32.totalorder %s16, 1
    %p34 = por %p32, %p33
    %p35 = scmp.ne.s32.totalorder %s24, %s25
    %p36 = scmp.eq.s32.totalorder %s16, 0
    %p37 = por %p35, %p36
    %p38 = scmp.ne.s32.totalorder %s24, %s25
    %p39 = scmp.eq.s32.totalorder %s17, 1
    %p40 = por %p38, %p39
    %p42 = scmp.ne.s32.totalorder %s25, %s41
    %p43 = scmp.eq.s32.totalorder %s17, 0
    %p44 = por %p42, %p43
    %s46 = sadd.s32 %s45, 1
    %p49 = scmp.eq.s32.totalorder %s11, 1
    %p50 = scmp.ne.s32.totalorder %s45, %s47
    %p51 = scmp.eq.s32.totalorder %s11, 0
    %p52 = por %p50, %p51
    %p53 = scmp.ne.s32.totalorder %s45, %s47
    %p54 = scmp.eq.s32.totalorder %s16, 1
    %p55 = por %p53, %p54
    %p56 = scmp.ne.s32.totalorder %s47, %s48
    %p57 = scmp.eq.s32.totalorder %s16, 0
    %p58 = por %p56, %p57
    %p59 = scmp.ne.s32.totalorder %s47, %s48
    %p60 = scmp.eq.s32.totalorder %s17, 1
    %p61 = por %p59, %p60
    %p63 = scmp.ne.s32.totalorder %s48, %s62
    %p64 = scmp.eq.s32.totalorder %s17, 0
    %p65 = por %p63, %p64
    %s67 = sadd.s32 %s66, 1
    %p70 = scmp.eq.s32.totalorder %s11, 1
    %p71 = scmp.ne.s32.totalorder %s66, %s68
    %p72 = scmp.eq.s32.totalorder %s11, 0
    %p73 = por %p71, %p72
    %p74 = scmp.ne.s32.totalorder %s66, %s68
    %p75 = scmp.eq.s32.totalorder %s16, 1
    %p76 = por %p74, %p75
    %p77 = scmp.ne.s32.totalorder %s68, %s69
    %p78 = scmp.eq.s32.totalorder %s16, 0
    %p79 = por %p77, %p78
    %p80 = scmp.ne.s32.totalorder %s68, %s69
    %p81 = scmp.eq.s32.totalorder %s17, 1
    %p82 = por %p80, %p81
    %p84 = scmp.ne.s32.totalorder %s69, %s83
    %p85 = scmp.eq.s32.totalorder %s17, 0
    %p86 = por %p84, %p85
    %s88 = sadd.s32 %s87, 1
    %p91 = scmp.eq.s32.totalorder %s11, 1
    %p92 = scmp.ne.s32.totalorder %s87, %s89
    %p93 = scmp.eq.s32.totalorder %s11, 0
    %p94 = por %p92, %p93
    %p95 = scmp.ne.s32.totalorder %s87, %s89
    %p96 = scmp.eq.s32.totalorder %s16, 1
    %p97 = por %p95, %p96
    %p98 = scmp.ne.s32.totalorder %s89, %s90
    %p99 = scmp.eq.s32.totalorder %s16, 0
    %p100 = por %p98, %p99
    %p101 = scmp.ne.s32.totalorder %s89, %s90
    %p102 = scmp.eq.s32.totalorder %s17, 1
    %p103 = por %p101, %p102
    %p105 = scmp.ne.s32.totalorder %s90, %s104
    %p106 = scmp.eq.s32.totalorder %s17, 0
    %p107 = por %p105, %p106
    %s109 = sadd.s32 %s108, 1
    %p112 = scmp.eq.s32.totalorder %s11, 1
    %p113 = scmp.ne.s32.totalorder %s108, %s110
    %p114 = scmp.eq.s32.totalorder %s11, 0
    %p115 = por %p113, %p114
    %p116 = scmp.ne.s32.totalorder %s108, %s110
    %p117 = scmp.eq.s32.totalorder %s16, 1
    %p118 = por %p116, %p117
    %p119 = scmp.ne.s32.totalorder %s110, %s111
    %p120 = scmp.eq.s32.totalorder %s16, 0
    %p121 = por %p119, %p120
    %p122 = scmp.ne.s32.totalorder %s110, %s111
    %p123 = scmp.eq.s32.totalorder %s17, 1
    %p124 = por %p122, %p123
    %p126 = scmp.ne.s32.totalorder %s111, %s125
    %p127 = scmp.eq.s32.totalorder %s17, 0
    %p128 = por %p126, %p127
    %s129 = ssub.s32 %s11, %s18
    %p130 = scmp.eq.s32.totalorder %s129, 0
    %s132 = sadd.s32 %s131, 1
    %s133 = scalar_select %p130, %s131, %s132
    %p136 = pneg %p130
    %p137 = scmp.eq.s32.totalorder %s11, 1
    %p138 = por %p136, %p137
    %p139 = scmp.ne.s32.totalorder %s131, %s134
    %p140 = scmp.eq.s32.totalorder %s11, 0
    %p141 = por %p139, %p140
    %p142 = scmp.ne.s32.totalorder %s131, %s134
    %p143 = scmp.eq.s32.totalorder %s16, 1
    %p144 = por %p142, %p143
    %p145 = scmp.ne.s32.totalorder %s134, %s135
    %p146 = scmp.eq.s32.totalorder %s16, 0
    %p147 = por %p145, %p146
    %p148 = scmp.ne.s32.totalorder %s134, %s135
    %p149 = scmp.eq.s32.totalorder %s17, 1
    %p150 = por %p148, %p149
    %p152 = scmp.ne.s32.totalorder %s135, %s151
    %p153 = scmp.eq.s32.totalorder %s17, 0
    %p154 = por %p152, %p153
    %p155 = scmp.le.s32.totalorder 1, %s11
    %p156 = scmp.lt.s32.totalorder %s11, 3
    %p157 = pnand %p155, %p156
    %p158 = pneg %p157
    // Predicated region
    $region9: #{tpu_custom_call.1} parent=5 // pred_check
      _
    $region10: #{tpu_custom_call.1} parent=5 // pred_check_branch
      %160 = sbr.rel (%p157) target = $region12
    $region11: #{tpu_custom_call.1} parent=5 // pred_region
      %s161 = ssub.s32 %s11, 1
      // Predicated region
      $region13: #{tpu_custom_call.1} parent=11 // pred_check
        %p162 = pneg %p58
      $region14: #{tpu_custom_call.1} parent=11 // pred_check_branch
        %164 = sbr.rel (%p162) target = $region16
      $region15: #{tpu_custom_call.1} parent=11 // pred_region
        _
      $region16: #{tpu_custom_call.1} parent=11 // pred_fallthru
        _
      // Predicated region
      $region17: #{tpu_custom_call.1} parent=11 // pred_check
        %p165 = pneg %p79
      $region18: #{tpu_custom_call.1} parent=11 // pred_check_branch
        %167 = sbr.rel (%p165) target = $region20
      $region19: #{tpu_custom_call.1} parent=11 // pred_region
        _
      $region20: #{tpu_custom_call.1} parent=11 // pred_fallthru
        _
      // Predicated region
      $region21: #{tpu_custom_call.1} parent=11 // pred_check
        %p168 = pneg %p100
      $region22: #{tpu_custom_call.1} parent=11 // pred_check_branch
        %170 = sbr.rel (%p168) target = $region24
      $region23: #{tpu_custom_call.1} parent=11 // pred_region
        _
      $region24: #{tpu_custom_call.1} parent=11 // pred_fallthru
        _
      // Predicated region
      $region25: #{tpu_custom_call.1} parent=11 // pred_check
        %p171 = pneg %p121
      $region26: #{tpu_custom_call.1} parent=11 // pred_check_branch
        %173 = sbr.rel (%p171) target = $region28
      $region27: #{tpu_custom_call.1} parent=11 // pred_region
        _
      $region28: #{tpu_custom_call.1} parent=11 // pred_fallthru
        _
    $region12: #{tpu_custom_call.1} parent=5 // pred_fallthru
      _
    %p174 = scmp.lt.s32.totalorder %s11, 2
    // Predicated region
    $region29: #{tpu_custom_call.1} parent=5 // pred_check
      %p175 = pneg %p174
    $region30: #{tpu_custom_call.1} parent=5 // pred_check_branch
      %177 = sbr.rel (%p175) target = $region32
    $region31: #{tpu_custom_call.1} parent=5 // pred_region
      // Predicated region
      $region33: #{tpu_custom_call.1} parent=31 // pred_check
        %p178 = pneg %p31
      $region34: #{tpu_custom_call.1} parent=31 // pred_check_branch
        %180 = sbr.rel (%p178) target = $region36
      $region35: #{tpu_custom_call.1} parent=31 // pred_region
        %p181 = scmp.lt.s32.totalorder %s11, 1
        %s182 = scalar_select %p181, %s11, 1
        %s183 = smul.addr %s182, 8
        %s184 = scalar_lea.vmem %s0, %s183
      $region36: #{tpu_custom_call.1} parent=31 // pred_fallthru
        _
    $region32: #{tpu_custom_call.1} parent=5 // pred_fallthru
      _
    %p185 = scmp.le.s32.totalorder 1, %s11
    %p186 = scmp.lt.s32.totalorder %s11, 3
    %p187 = pnand %p185, %p186
    %p188 = pneg %p187
    // Predicated region
    $region37: #{tpu_custom_call.1} parent=5 // pred_check
      _
    $region38: #{tpu_custom_call.1} parent=5 // pred_check_branch
      %190 = sbr.rel (%p187) target = $region40
    $region39: #{tpu_custom_call.1} parent=5 // pred_region
      %s191 = ssub.s32 %s11, 1
      %p192 = scmp.lt.s32.totalorder %s16, 1
      %s193 = scalar_select %p192, %s16, 1
      %s194 = smul.addr %s193, 8
      %s195 = scalar_lea.vmem %s0, %s194
      %p196 = pneg %p37
      %p197 = pneg %p34
      %p198 = pneg %p58
      %p199 = pneg %p55
      %p200 = pneg %p79
      %p201 = pneg %p76
      %p202 = pneg %p100
      %p203 = pneg %p97
      %p204 = pneg %p121
      %p205 = pneg %p118
      %p206 = pneg %p147
      %p207 = pneg %p144
      %p208 = scmp.lt.s32.totalorder %s16, 1
      %s209 = scalar_select %p208, %s16, 1
      %s210 = smul.addr %s209, 8
      %s211 = scalar_lea.vmem %s5, %s210
      %p212 = scmp.lt.s32.totalorder %s16, 1
      %s213 = scalar_select %p212, %s16, 1
      %s214 = smul.addr %s213, 8
      %s215 = scalar_lea.vmem %s0, %s214
      %p216 = scmp.lt.s32.totalorder %s16, 1
      %s217 = scalar_select %p216, %s16, 1
      %s218 = smul.addr %s217, 8
      %s219 = scalar_lea.vmem %s5, %s218
      %v220 = vld [vmem:[%s215] sm:$0xff]
      %v221 = vld [vmem:[%s1] sm:$0xff]
      %v222 = vld [vmem:[%s1 + $0x8] sm:$0xff]
      %v223 = vld [vmem:[%s1 + $0x10] sm:$0xff]
      %v224 = vld [vmem:[%s1 + $0x18] sm:$0xff]
      %v225 = vld [vmem:[%s1 + $0x20] sm:$0xff]
      %v226 = vld [vmem:[%s1 + $0x28] sm:$0xff]
      %v227 = vld [vmem:[%s1 + $0x30] sm:$0xff]
      %v228 = vld [vmem:[%s1 + $0x38] sm:$0xff]
      %v229 = vld [vmem:[%s1 + $0x40] sm:$0xff]
      %v230 = vld [vmem:[%s1 + $0x48] sm:$0xff]
      %v231 = vld [vmem:[%s1 + $0x50] sm:$0xff]
      %v232 = vld [vmem:[%s1 + $0x58] sm:$0xff]
      %v233 = vld [vmem:[%s1 + $0x60] sm:$0xff]
      %v234 = vld [vmem:[%s1 + $0x68] sm:$0xff]
      %v235 = vld [vmem:[%s1 + $0x70] sm:$0xff]
      %v236 = vld [vmem:[%s1 + $0x78] sm:$0xff]
      %v237 = vld [vmem:[%s3] sm:$0x7]
      %v238 = vld [vmem:[%s2] sm:$0xff]
      %v239 = vld [vmem:[%s2 + $0x8] sm:$0xff]
      %v240 = vld [vmem:[%s2 + $0x10] sm:$0xff]
      %v241 = vld [vmem:[%s2 + $0x18] sm:$0xff]
      %v242 = vld [vmem:[%s2 + $0x20] sm:$0xff]
      %v243 = vld [vmem:[%s2 + $0x28] sm:$0xff]
      %v244 = vld [vmem:[%s2 + $0x30] sm:$0xff]
      %v245 = vld [vmem:[%s2 + $0x38] sm:$0xff]
      %v246 = vld [vmem:[%s2 + $0x40] sm:$0xff]
      %v247 = vld [vmem:[%s2 + $0x48] sm:$0xff]
      %v248 = vld [vmem:[%s2 + $0x50] sm:$0xff]
      %v249 = vld [vmem:[%s2 + $0x58] sm:$0xff]
      %v250 = vld [vmem:[%s2 + $0x60] sm:$0xff]
      %v251 = vld [vmem:[%s2 + $0x68] sm:$0xff]
      %v252 = vld [vmem:[%s2 + $0x70] sm:$0xff]
      %v253 = vld [vmem:[%s2 + $0x78] sm:$0xff]
      %v254 = vld [vmem:[%s4] sm:$0x1]
      %v255 = vlaneseq
      %v256 = vshrl.u32 %v255, 7
      %v257 = vsub.s32 0, %v256
      %v258 = vrot.slane %v220, %v257
      %v259 = vadd.f32 %v258, %v221
      %v260 = vadd.f32 %v258, %v222
      %v261 = vadd.f32 %v258, %v223
      %v262 = vadd.f32 %v258, %v224
      %v263 = vadd.f32 %v258, %v225
      %v264 = vadd.f32 %v258, %v226
      %v265 = vadd.f32 %v258, %v227
      %v266 = vadd.f32 %v258, %v228
      %v267 = vadd.f32 %v258, %v229
      %v268 = vadd.f32 %v258, %v230
      %v269 = vadd.f32 %v258, %v231
      %v270 = vadd.f32 %v258, %v232
      %v271 = vadd.f32 %v258, %v233
      %v272 = vadd.f32 %v258, %v234
      %v273 = vadd.f32 %v258, %v235
      %v274 = vadd.f32 %v258, %v236
      %276 = vset.pattern.permute.xlu0 0
      %277 = vperm.xlu0 %276, %v259
      %v278 = vpop.permute.xlu0 %277
      %281 = vset.pattern.permute.xlu0 0
      %282 = vperm.xlu0 %281, %v260
      %v283 = vpop.permute.xlu0 %282
      %286 = vset.pattern.permute.xlu0 0
      %287 = vperm.xlu0 %286, %v261
      %v288 = vpop.permute.xlu0 %287
      %291 = vset.pattern.permute.xlu0 0
      %292 = vperm.xlu0 %291, %v262
      %v293 = vpop.permute.xlu0 %292
      %296 = vset.pattern.permute.xlu0 0
      %297 = vperm.xlu0 %296, %v263
      %v298 = vpop.permute.xlu0 %297
      %301 = vset.pattern.permute.xlu0 0
      %302 = vperm.xlu0 %301, %v264
      %v303 = vpop.permute.xlu0 %302
      %306 = vset.pattern.permute.xlu0 0
      %307 = vperm.xlu0 %306, %v265
      %v308 = vpop.permute.xlu0 %307
      %311 = vset.pattern.permute.xlu0 0
      %312 = vperm.xlu0 %311, %v266
      %v313 = vpop.permute.xlu0 %312
      %316 = vset.pattern.permute.xlu0 0
      %317 = vperm.xlu0 %316, %v267
      %v318 = vpop.permute.xlu0 %317
      %321 = vset.pattern.permute.xlu0 0
      %322 = vperm.xlu0 %321, %v268
      %v323 = vpop.permute.xlu0 %322
      %326 = vset.pattern.permute.xlu0 0
      %327 = vperm.xlu0 %326, %v269
      %v328 = vpop.permute.xlu0 %327
      %331 = vset.pattern.permute.xlu0 0
      %332 = vperm.xlu0 %331, %v270
      %v333 = vpop.permute.xlu0 %332
      %336 = vset.pattern.permute.xlu0 0
      %337 = vperm.xlu0 %336, %v271
      %v338 = vpop.permute.xlu0 %337
      %341 = vset.pattern.permute.xlu0 0
      %342 = vperm.xlu0 %341, %v272
      %v343 = vpop.permute.xlu0 %342
      %346 = vset.pattern.permute.xlu0 0
      %347 = vperm.xlu0 %346, %v273
      %v348 = vpop.permute.xlu0 %347
      %351 = vset.pattern.permute.xlu0 0
      %352 = vperm.xlu0 %351, %v274
      %v353 = vpop.permute.xlu0 %352
      %v355 = vlaneseq
      %v356 = vshrl.u32 %v355, 7
      %v357 = vsub.s32 0, %v356
      %v358 = vrot.slane %v237, %v357
      %v359 = vsub.f32 %v278, %v358
      %v360 = vsub.f32 %v283, %v358
      %v361 = vsub.f32 %v288, %v358
      %v362 = vsub.f32 %v293, %v358
      %v363 = vsub.f32 %v298, %v358
      %v364 = vsub.f32 %v303, %v358
      %v365 = vsub.f32 %v308, %v358
      %v366 = vsub.f32 %v313, %v358
      %v367 = vsub.f32 %v318, %v358
      %v368 = vsub.f32 %v323, %v358
      %v369 = vsub.f32 %v328, %v358
      %v370 = vsub.f32 %v333, %v358
      %v371 = vsub.f32 %v338, %v358
      %v372 = vsub.f32 %v343, %v358
      %v373 = vsub.f32 %v348, %v358
      %v374 = vsub.f32 %v353, %v358
      %v375 = vmul.f32 %v359, %v359
      %v376 = vmul.f32 %v360, %v360
      %v377 = vmul.f32 %v361, %v361
      %v378 = vmul.f32 %v362, %v362
      %v379 = vmul.f32 %v363, %v363
      %v380 = vmul.f32 %v364, %v364
      %v381 = vmul.f32 %v365, %v365
      %v382 = vmul.f32 %v366, %v366
      %v383 = vmul.f32 %v367, %v367
      %v384 = vmul.f32 %v368, %v368
      %v385 = vmul.f32 %v369, %v369
      %v386 = vmul.f32 %v370, %v370
      %v387 = vmul.f32 %v371, %v371
      %v388 = vmul.f32 %v372, %v372
      %v389 = vmul.f32 %v373, %v373
      %v390 = vmul.f32 %v374, %v374
      %391 = vset.pattern.permute.xlu0 1
      %392 = vperm.xlu0 %391, %v259
      %v393 = vpop.permute.xlu0 %392
      %395 = vset.pattern.permute.xlu0 1
      %396 = vperm.xlu0 %395, %v260
      %v397 = vpop.permute.xlu0 %396
      %399 = vset.pattern.permute.xlu0 1
      %400 = vperm.xlu0 %399, %v261
      %v401 = vpop.permute.xlu0 %400
      %403 = vset.pattern.permute.xlu0 1
      %404 = vperm.xlu0 %403, %v262
      %v405 = vpop.permute.xlu0 %404
      %407 = vset.pattern.permute.xlu0 1
      %408 = vperm.xlu0 %407, %v263
      %v409 = vpop.permute.xlu0 %408
      %411 = vset.pattern.permute.xlu0 1
      %412 = vperm.xlu0 %411, %v264
      %v413 = vpop.permute.xlu0 %412
      %415 = vset.pattern.permute.xlu0 1
      %416 = vperm.xlu0 %415, %v265
      %v417 = vpop.permute.xlu0 %416
      %419 = vset.pattern.permute.xlu0 1
      %420 = vperm.xlu0 %419, %v266
      %v421 = vpop.permute.xlu0 %420
      %423 = vset.pattern.permute.xlu0 1
      %424 = vperm.xlu0 %423, %v267
      %v425 = vpop.permute.xlu0 %424
      %427 = vset.pattern.permute.xlu0 1
      %428 = vperm.xlu0 %427, %v268
      %v429 = vpop.permute.xlu0 %428
      %431 = vset.pattern.permute.xlu0 1
      %432 = vperm.xlu0 %431, %v269
      %v433 = vpop.permute.xlu0 %432
      %435 = vset.pattern.permute.xlu0 1
      %436 = vperm.xlu0 %435, %v270
      %v437 = vpop.permute.xlu0 %436
      %439 = vset.pattern.permute.xlu0 1
      %440 = vperm.xlu0 %439, %v271
      %v441 = vpop.permute.xlu0 %440
      %443 = vset.pattern.permute.xlu0 1
      %444 = vperm.xlu0 %443, %v272
      %v445 = vpop.permute.xlu0 %444
      %447 = vset.pattern.permute.xlu0 1
      %448 = vperm.xlu0 %447, %v273
      %v449 = vpop.permute.xlu0 %448
      %451 = vset.pattern.permute.xlu0 1
      %452 = vperm.xlu0 %451, %v274
      %v453 = vpop.permute.xlu0 %452
      %v455 = vlaneseq
      %v456 = vshrl.u32 %v455, 7
      %v457 = vsub.s32 1, %v456
      %v458 = vrot.slane %v237, %v457
      %v459 = vsub.f32 %v393, %v458
      %v460 = vsub.f32 %v397, %v458
      %v461 = vsub.f32 %v401, %v458
      %v462 = vsub.f32 %v405, %v458
      %v463 = vsub.f32 %v409, %v458
      %v464 = vsub.f32 %v413, %v458
      %v465 = vsub.f32 %v417, %v458
      %v466 = vsub.f32 %v421, %v458
      %v467 = vsub.f32 %v425, %v458
      %v468 = vsub.f32 %v429, %v458
      %v469 = vsub.f32 %v433, %v458
      %v470 = vsub.f32 %v437, %v458
      %v471 = vsub.f32 %v441, %v458
      %v472 = vsub.f32 %v445, %v458
      %v473 = vsub.f32 %v449, %v458
      %v474 = vsub.f32 %v453, %v458
      %v475 = vmul.f32 %v459, %v459
      %v476 = vmul.f32 %v460, %v460
      %v477 = vmul.f32 %v461, %v461
      %v478 = vmul.f32 %v462, %v462
      %v479 = vmul.f32 %v463, %v463
      %v480 = vmul.f32 %v464, %v464
      %v481 = vmul.f32 %v465, %v465
      %v482 = vmul.f32 %v466, %v466
      %v483 = vmul.f32 %v467, %v467
      %v484 = vmul.f32 %v468, %v468
      %v485 = vmul.f32 %v469, %v469
      %v486 = vmul.f32 %v470, %v470
      %v487 = vmul.f32 %v471, %v471
      %v488 = vmul.f32 %v472, %v472
      %v489 = vmul.f32 %v473, %v473
      %v490 = vmul.f32 %v474, %v474
      %v491 = vadd.f32 %v375, %v475
      %v492 = vadd.f32 %v376, %v476
      %v493 = vadd.f32 %v377, %v477
      %v494 = vadd.f32 %v378, %v478
      %v495 = vadd.f32 %v379, %v479
      %v496 = vadd.f32 %v380, %v480
      %v497 = vadd.f32 %v381, %v481
      %v498 = vadd.f32 %v382, %v482
      %v499 = vadd.f32 %v383, %v483
      %v500 = vadd.f32 %v384, %v484
      %v501 = vadd.f32 %v385, %v485
      %v502 = vadd.f32 %v386, %v486
      %v503 = vadd.f32 %v387, %v487
      %v504 = vadd.f32 %v388, %v488
      %v505 = vadd.f32 %v389, %v489
      %v506 = vadd.f32 %v390, %v490
      %507 = vset.pattern.permute.xlu0 2
      %508 = vperm.xlu0 %507, %v259
      %v509 = vpop.permute.xlu0 %508
      %511 = vset.pattern.permute.xlu0 2
      %512 = vperm.xlu0 %511, %v260
      %v513 = vpop.permute.xlu0 %512
      %515 = vset.pattern.permute.xlu0 2
      %516 = vperm.xlu0 %515, %v261
      %v517 = vpop.permute.xlu0 %516
      %519 = vset.pattern.permute.xlu0 2
      %520 = vperm.xlu0 %519, %v262
      %v521 = vpop.permute.xlu0 %520
      %523 = vset.pattern.permute.xlu0 2
      %524 = vperm.xlu0 %523, %v263
      %v525 = vpop.permute.xlu0 %524
      %527 = vset.pattern.permute.xlu0 2
      %528 = vperm.xlu0 %527, %v264
      %v529 = vpop.permute.xlu0 %528
      %531 = vset.pattern.permute.xlu0 2
      %532 = vperm.xlu0 %531, %v265
      %v533 = vpop.permute.xlu0 %532
      %535 = vset.pattern.permute.xlu0 2
      %536 = vperm.xlu0 %535, %v266
      %v537 = vpop.permute.xlu0 %536
      %539 = vset.pattern.permute.xlu0 2
      %540 = vperm.xlu0 %539, %v267
      %v541 = vpop.permute.xlu0 %540
      %543 = vset.pattern.permute.xlu0 2
      %544 = vperm.xlu0 %543, %v268
      %v545 = vpop.permute.xlu0 %544
      %547 = vset.pattern.permute.xlu0 2
      %548 = vperm.xlu0 %547, %v269
      %v549 = vpop.permute.xlu0 %548
      %551 = vset.pattern.permute.xlu0 2
      %552 = vperm.xlu0 %551, %v270
      %v553 = vpop.permute.xlu0 %552
      %555 = vset.pattern.permute.xlu0 2
      %556 = vperm.xlu0 %555, %v271
      %v557 = vpop.permute.xlu0 %556
      %559 = vset.pattern.permute.xlu0 2
      %560 = vperm.xlu0 %559, %v272
      %v561 = vpop.permute.xlu0 %560
      %563 = vset.pattern.permute.xlu0 2
      %564 = vperm.xlu0 %563, %v273
      %v565 = vpop.permute.xlu0 %564
      %567 = vset.pattern.permute.xlu0 2
      %568 = vperm.xlu0 %567, %v274
      %v569 = vpop.permute.xlu0 %568
      %v571 = vlaneseq
      %v572 = vshrl.u32 %v571, 7
      %v573 = vsub.s32 2, %v572
      %v574 = vrot.slane %v237, %v573
      %v575 = vsub.f32 %v509, %v574
      %v576 = vsub.f32 %v513, %v574
      %v577 = vsub.f32 %v517, %v574
      %v578 = vsub.f32 %v521, %v574
      %v579 = vsub.f32 %v525, %v574
      %v580 = vsub.f32 %v529, %v574
      %v581 = vsub.f32 %v533, %v574
      %v582 = vsub.f32 %v537, %v574
      %v583 = vsub.f32 %v541, %v574
      %v584 = vsub.f32 %v545, %v574
      %v585 = vsub.f32 %v549, %v574
      %v586 = vsub.f32 %v553, %v574
      %v587 = vsub.f32 %v557, %v574
      %v588 = vsub.f32 %v561, %v574
      %v589 = vsub.f32 %v565, %v574
      %v590 = vsub.f32 %v569, %v574
      %v591 = vmul.f32 %v575, %v575
      %v592 = vmul.f32 %v576, %v576
      %v593 = vmul.f32 %v577, %v577
      %v594 = vmul.f32 %v578, %v578
      %v595 = vmul.f32 %v579, %v579
      %v596 = vmul.f32 %v580, %v580
      %v597 = vmul.f32 %v581, %v581
      %v598 = vmul.f32 %v582, %v582
      %v599 = vmul.f32 %v583, %v583
      %v600 = vmul.f32 %v584, %v584
      %v601 = vmul.f32 %v585, %v585
      %v602 = vmul.f32 %v586, %v586
      %v603 = vmul.f32 %v587, %v587
      %v604 = vmul.f32 %v588, %v588
      %v605 = vmul.f32 %v589, %v589
      %v606 = vmul.f32 %v590, %v590
      %v607 = vadd.f32 %v491, %v591
      %v608 = vadd.f32 %v492, %v592
      %v609 = vadd.f32 %v493, %v593
      %v610 = vadd.f32 %v494, %v594
      %v611 = vadd.f32 %v495, %v595
      %v612 = vadd.f32 %v496, %v596
      %v613 = vadd.f32 %v497, %v597
      %v614 = vadd.f32 %v498, %v598
      %v615 = vadd.f32 %v499, %v599
      %v616 = vadd.f32 %v500, %v600
      %v617 = vadd.f32 %v501, %v601
      %v618 = vadd.f32 %v502, %v602
      %v619 = vadd.f32 %v503, %v603
      %v620 = vadd.f32 %v504, %v604
      %v621 = vadd.f32 %v505, %v605
      %v622 = vadd.f32 %v506, %v606
      %623 = vmin.xlane.f32.xlu0 %v607
      %v624 = vpop.xlane.xlu0 %623
      %625 = vmin.xlane.f32.xlu0 %v608
      %v626 = vpop.xlane.xlu0 %625
      %627 = vmin.xlane.f32.xlu0 %v609
      %v628 = vpop.xlane.xlu0 %627
      %629 = vmin.xlane.f32.xlu0 %v610
      %v630 = vpop.xlane.xlu0 %629
      %631 = vmin.xlane.f32.xlu0 %v611
      %v632 = vpop.xlane.xlu0 %631
      %633 = vmin.xlane.f32.xlu0 %v612
      %v634 = vpop.xlane.xlu0 %633
      %635 = vmin.xlane.f32.xlu0 %v613
      %v636 = vpop.xlane.xlu0 %635
      %637 = vmin.xlane.f32.xlu0 %v614
      %v638 = vpop.xlane.xlu0 %637
      %639 = vmin.xlane.f32.xlu0 %v615
      %v640 = vpop.xlane.xlu0 %639
      %641 = vmin.xlane.f32.xlu0 %v616
      %v642 = vpop.xlane.xlu0 %641
      %643 = vmin.xlane.f32.xlu0 %v617
      %v644 = vpop.xlane.xlu0 %643
      %645 = vmin.xlane.f32.xlu0 %v618
      %v646 = vpop.xlane.xlu0 %645
      %647 = vmin.xlane.f32.xlu0 %v619
      %v648 = vpop.xlane.xlu0 %647
      %649 = vmin.xlane.f32.xlu0 %v620
      %v650 = vpop.xlane.xlu0 %649
      %651 = vmin.xlane.f32.xlu0 %v621
      %v652 = vpop.xlane.xlu0 %651
      %653 = vmin.xlane.f32.xlu0 %v622
      %v654 = vpop.xlane.xlu0 %653
      %vm655 = vcmp.eq.f32.partialorder %v607, %v624
      %vm656 = vcmp.eq.f32.partialorder %v608, %v626
      %vm657 = vcmp.eq.f32.partialorder %v609, %v628
      %vm658 = vcmp.eq.f32.partialorder %v610, %v630
      %vm659 = vcmp.eq.f32.partialorder %v611, %v632
      %vm660 = vcmp.eq.f32.partialorder %v612, %v634
      %vm661 = vcmp.eq.f32.partialorder %v613, %v636
      %vm662 = vcmp.eq.f32.partialorder %v614, %v638
      %vm663 = vcmp.eq.f32.partialorder %v615, %v640
      %vm664 = vcmp.eq.f32.partialorder %v616, %v642
      %vm665 = vcmp.eq.f32.partialorder %v617, %v644
      %vm666 = vcmp.eq.f32.partialorder %v618, %v646
      %vm667 = vcmp.eq.f32.partialorder %v619, %v648
      %vm668 = vcmp.eq.f32.partialorder %v620, %v650
      %vm669 = vcmp.eq.f32.partialorder %v621, %v652
      %vm670 = vcmp.eq.f32.partialorder %v622, %v654
      %v671 = vsel %vm655, 1, 0
      %v672 = vsel %vm656, 1, 0
      %v673 = vsel %vm657, 1, 0
      %v674 = vsel %vm658, 1, 0
      %v675 = vsel %vm659, 1, 0
      %v676 = vsel %vm660, 1, 0
      %v677 = vsel %vm661, 1, 0
      %v678 = vsel %vm662, 1, 0
      %v679 = vsel %vm663, 1, 0
      %v680 = vsel %vm664, 1, 0
      %v681 = vsel %vm665, 1, 0
      %v682 = vsel %vm666, 1, 0
      %v683 = vsel %vm667, 1, 0
      %v684 = vsel %vm668, 1, 0
      %v685 = vsel %vm669, 1, 0
      %v686 = vsel %vm670, 1, 0
      %v687 = vcvt.s32.f32 %v671
      %v688 = vcvt.s32.f32 %v672
      %v689 = vcvt.s32.f32 %v673
      %v690 = vcvt.s32.f32 %v674
      %v691 = vcvt.s32.f32 %v675
      %v692 = vcvt.s32.f32 %v676
      %v693 = vcvt.s32.f32 %v677
      %v694 = vcvt.s32.f32 %v678
      %v695 = vcvt.s32.f32 %v679
      %v696 = vcvt.s32.f32 %v680
      %v697 = vcvt.s32.f32 %v681
      %v698 = vcvt.s32.f32 %v682
      %v699 = vcvt.s32.f32 %v683
      %v700 = vcvt.s32.f32 %v684
      %v701 = vcvt.s32.f32 %v685
      %v702 = vcvt.s32.f32 %v686
      %vm703 = vcmp.le.f32.partialorder %v238, %v624
      %vm704 = vcmp.le.f32.partialorder %v239, %v626
      %vm705 = vcmp.le.f32.partialorder %v240, %v628
      %vm706 = vcmp.le.f32.partialorder %v241, %v630
      %vm707 = vcmp.le.f32.partialorder %v242, %v632
      %vm708 = vcmp.le.f32.partialorder %v243, %v634
      %vm709 = vcmp.le.f32.partialorder %v244, %v636
      %vm710 = vcmp.le.f32.partialorder %v245, %v638
      %vm711 = vcmp.le.f32.partialorder %v246, %v640
      %vm712 = vcmp.le.f32.partialorder %v247, %v642
      %vm713 = vcmp.le.f32.partialorder %v248, %v644
      %vm714 = vcmp.le.f32.partialorder %v249, %v646
      %vm715 = vcmp.le.f32.partialorder %v250, %v648
      %vm716 = vcmp.le.f32.partialorder %v251, %v650
      %vm717 = vcmp.le.f32.partialorder %v252, %v652
      %vm718 = vcmp.le.f32.partialorder %v253, %v654
      %v719 = vsel %vm703, 1, 0
      %v720 = vsel %vm704, 1, 0
      %v721 = vsel %vm705, 1, 0
      %v722 = vsel %vm706, 1, 0
      %v723 = vsel %vm707, 1, 0
      %v724 = vsel %vm708, 1, 0
      %v725 = vsel %vm709, 1, 0
      %v726 = vsel %vm710, 1, 0
      %v727 = vsel %vm711, 1, 0
      %v728 = vsel %vm712, 1, 0
      %v729 = vsel %vm713, 1, 0
      %v730 = vsel %vm714, 1, 0
      %v731 = vsel %vm715, 1, 0
      %v732 = vsel %vm716, 1, 0
      %v733 = vsel %vm717, 1, 0
      %v734 = vsel %vm718, 1, 0
      %v735 = vcvt.s32.f32 %v719
      %v736 = vcvt.s32.f32 %v720
      %v737 = vcvt.s32.f32 %v721
      %v738 = vcvt.s32.f32 %v722
      %v739 = vcvt.s32.f32 %v723
      %v740 = vcvt.s32.f32 %v724
      %v741 = vcvt.s32.f32 %v725
      %v742 = vcvt.s32.f32 %v726
      %v743 = vcvt.s32.f32 %v727
      %v744 = vcvt.s32.f32 %v728
      %v745 = vcvt.s32.f32 %v729
      %v746 = vcvt.s32.f32 %v730
      %v747 = vcvt.s32.f32 %v731
      %v748 = vcvt.s32.f32 %v732
      %v749 = vcvt.s32.f32 %v733
      %v750 = vcvt.s32.f32 %v734
      %752 = vset.pattern.permute.xlu0 0
      %753 = vperm.xlu0 %752, %v735
      %v754 = vpop.permute.xlu0 %753
      %757 = vset.pattern.permute.xlu0 0
      %758 = vperm.xlu0 %757, %v736
      %v759 = vpop.permute.xlu0 %758
      %762 = vset.pattern.permute.xlu0 0
      %763 = vperm.xlu0 %762, %v737
      %v764 = vpop.permute.xlu0 %763
      %767 = vset.pattern.permute.xlu0 0
      %768 = vperm.xlu0 %767, %v738
      %v769 = vpop.permute.xlu0 %768
      %772 = vset.pattern.permute.xlu0 0
      %773 = vperm.xlu0 %772, %v739
      %v774 = vpop.permute.xlu0 %773
      %777 = vset.pattern.permute.xlu0 0
      %778 = vperm.xlu0 %777, %v740
      %v779 = vpop.permute.xlu0 %778
      %782 = vset.pattern.permute.xlu0 0
      %783 = vperm.xlu0 %782, %v741
      %v784 = vpop.permute.xlu0 %783
      %787 = vset.pattern.permute.xlu0 0
      %788 = vperm.xlu0 %787, %v742
      %v789 = vpop.permute.xlu0 %788
      %792 = vset.pattern.permute.xlu0 0
      %793 = vperm.xlu0 %792, %v743
      %v794 = vpop.permute.xlu0 %793
      %797 = vset.pattern.permute.xlu0 0
      %798 = vperm.xlu0 %797, %v744
      %v799 = vpop.permute.xlu0 %798
      %802 = vset.pattern.permute.xlu0 0
      %803 = vperm.xlu0 %802, %v745
      %v804 = vpop.permute.xlu0 %803
      %807 = vset.pattern.permute.xlu0 0
      %808 = vperm.xlu0 %807, %v746
      %v809 = vpop.permute.xlu0 %808
      %812 = vset.pattern.permute.xlu0 0
      %813 = vperm.xlu0 %812, %v747
      %v814 = vpop.permute.xlu0 %813
      %817 = vset.pattern.permute.xlu0 0
      %818 = vperm.xlu0 %817, %v748
      %v819 = vpop.permute.xlu0 %818
      %822 = vset.pattern.permute.xlu0 0
      %823 = vperm.xlu0 %822, %v749
      %v824 = vpop.permute.xlu0 %823
      %827 = vset.pattern.permute.xlu0 0
      %828 = vperm.xlu0 %827, %v750
      %v829 = vpop.permute.xlu0 %828
      %v831 = vmul.f32 %v687, %v754
      %v832 = vmul.f32 %v688, %v759
      %v833 = vmul.f32 %v689, %v764
      %v834 = vmul.f32 %v690, %v769
      %v835 = vmul.f32 %v691, %v774
      %v836 = vmul.f32 %v692, %v779
      %v837 = vmul.f32 %v693, %v784
      %v838 = vmul.f32 %v694, %v789
      %v839 = vmul.f32 %v695, %v794
      %v840 = vmul.f32 %v696, %v799
      %v841 = vmul.f32 %v697, %v804
      %v842 = vmul.f32 %v698, %v809
      %v843 = vmul.f32 %v699, %v814
      %v844 = vmul.f32 %v700, %v819
      %v845 = vmul.f32 %v701, %v824
      %v846 = vmul.f32 %v702, %v829
      %v847 = vadd.f32 %v831, %v832
      %v848 = vadd.f32 %v847, %v833
      %v849 = vadd.f32 %v848, %v834
      %v850 = vadd.f32 %v849, %v835
      %v851 = vadd.f32 %v850, %v836
      %v852 = vadd.f32 %v851, %v837
      %v853 = vadd.f32 %v852, %v838
      %v854 = vadd.f32 %v853, %v839
      %v855 = vadd.f32 %v854, %v840
      %v856 = vadd.f32 %v855, %v841
      %v857 = vadd.f32 %v856, %v842
      %v858 = vadd.f32 %v857, %v843
      %v859 = vadd.f32 %v858, %v844
      %v860 = vadd.f32 %v859, %v845
      %v861 = vadd.f32 %v860, %v846
      %v862 = vrot.slane %v861, 4
      %v863 = vadd.f32 %v861, %v862
      %v864 = vrot.slane %v863, 2
      %v865 = vadd.f32 %v863, %v864
      %v866 = vrot.slane %v865, 1
      %v867 = vadd.f32 %v865, %v866
      %vm868 = vcmask 7168
      %v869 = vsel %vm868, %v735, 0.0
      %v870 = vsel %vm868, %v736, 0.0
      %v871 = vadd.f32 %v869, %v870
      %v872 = vsel %vm868, %v737, 0.0
      %v873 = vadd.f32 %v871, %v872
      %v874 = vsel %vm868, %v738, 0.0
      %v875 = vadd.f32 %v873, %v874
      %v876 = vsel %vm868, %v739, 0.0
      %v877 = vadd.f32 %v875, %v876
      %v878 = vsel %vm868, %v740, 0.0
      %v879 = vadd.f32 %v877, %v878
      %v880 = vsel %vm868, %v741, 0.0
      %v881 = vadd.f32 %v879, %v880
      %v882 = vsel %vm868, %v742, 0.0
      %v883 = vadd.f32 %v881, %v882
      %v884 = vsel %vm868, %v743, 0.0
      %v885 = vadd.f32 %v883, %v884
      %v886 = vsel %vm868, %v744, 0.0
      %v887 = vadd.f32 %v885, %v886
      %v888 = vsel %vm868, %v745, 0.0
      %v889 = vadd.f32 %v887, %v888
      %v890 = vsel %vm868, %v746, 0.0
      %v891 = vadd.f32 %v889, %v890
      %v892 = vsel %vm868, %v747, 0.0
      %v893 = vadd.f32 %v891, %v892
      %v894 = vsel %vm868, %v748, 0.0
      %v895 = vadd.f32 %v893, %v894
      %v896 = vsel %vm868, %v749, 0.0
      %v897 = vadd.f32 %v895, %v896
      %v898 = vsel %vm868, %v750, 0.0
      %v899 = vadd.f32 %v897, %v898
      %v900 = vrot.slane %v899, 4
      %v901 = vadd.f32 %v899, %v900
      %v902 = vrot.slane %v901, 2
      %v903 = vadd.f32 %v901, %v902
      %v904 = vrot.slane %v903, 1
      %v905 = vadd.f32 %v903, %v904
      %v906 = vlaneseq
      %v907 = vshrl.u32 %v906, 7
      %v908 = vsub.s32 1, %v907
      %v909 = vrot.slane %v220, %v908
      %v910 = vadd.f32 %v909, %v221
      %v911 = vadd.f32 %v909, %v222
      %v912 = vadd.f32 %v909, %v223
      %v913 = vadd.f32 %v909, %v224
      %v914 = vadd.f32 %v909, %v225
      %v915 = vadd.f32 %v909, %v226
      %v916 = vadd.f32 %v909, %v227
      %v917 = vadd.f32 %v909, %v228
      %v918 = vadd.f32 %v909, %v229
      %v919 = vadd.f32 %v909, %v230
      %v920 = vadd.f32 %v909, %v231
      %v921 = vadd.f32 %v909, %v232
      %v922 = vadd.f32 %v909, %v233
      %v923 = vadd.f32 %v909, %v234
      %v924 = vadd.f32 %v909, %v235
      %v925 = vadd.f32 %v909, %v236
      %927 = vset.pattern.permute.xlu0 0
      %928 = vperm.xlu0 %927, %v910
      %v929 = vpop.permute.xlu0 %928
      %932 = vset.pattern.permute.xlu0 0
      %933 = vperm.xlu0 %932, %v911
      %v934 = vpop.permute.xlu0 %933
      %937 = vset.pattern.permute.xlu0 0
      %938 = vperm.xlu0 %937, %v912
      %v939 = vpop.permute.xlu0 %938
      %942 = vset.pattern.permute.xlu0 0
      %943 = vperm.xlu0 %942, %v913
      %v944 = vpop.permute.xlu0 %943
      %947 = vset.pattern.permute.xlu0 0
      %948 = vperm.xlu0 %947, %v914
      %v949 = vpop.permute.xlu0 %948
      %952 = vset.pattern.permute.xlu0 0
      %953 = vperm.xlu0 %952, %v915
      %v954 = vpop.permute.xlu0 %953
      %957 = vset.pattern.permute.xlu0 0
      %958 = vperm.xlu0 %957, %v916
      %v959 = vpop.permute.xlu0 %958
      %962 = vset.pattern.permute.xlu0 0
      %963 = vperm.xlu0 %962, %v917
      %v964 = vpop.permute.xlu0 %963
      %967 = vset.pattern.permute.xlu0 0
      %968 = vperm.xlu0 %967, %v918
      %v969 = vpop.permute.xlu0 %968
      %972 = vset.pattern.permute.xlu0 0
      %973 = vperm.xlu0 %972, %v919
      %v974 = vpop.permute.xlu0 %973
      %977 = vset.pattern.permute.xlu0 0
      %978 = vperm.xlu0 %977, %v920
      %v979 = vpop.permute.xlu0 %978
      %982 = vset.pattern.permute.xlu0 0
      %983 = vperm.xlu0 %982, %v921
      %v984 = vpop.permute.xlu0 %983
      %987 = vset.pattern.permute.xlu0 0
      %988 = vperm.xlu0 %987, %v922
      %v989 = vpop.permute.xlu0 %988
      %992 = vset.pattern.permute.xlu0 0
      %993 = vperm.xlu0 %992, %v923
      %v994 = vpop.permute.xlu0 %993
      %997 = vset.pattern.permute.xlu0 0
      %998 = vperm.xlu0 %997, %v924
      %v999 = vpop.permute.xlu0 %998
      %1002 = vset.pattern.permute.xlu0 0
      %1003 = vperm.xlu0 %1002, %v925
      %v1004 = vpop.permute.xlu0 %1003
      %v1006 = vsub.f32 %v929, %v358
      %v1007 = vsub.f32 %v934, %v358
      %v1008 = vsub.f32 %v939, %v358
      %v1009 = vsub.f32 %v944, %v358
      %v1010 = vsub.f32 %v949, %v358
      %v1011 = vsub.f32 %v954, %v358
      %v1012 = vsub.f32 %v959, %v358
      %v1013 = vsub.f32 %v964, %v358
      %v1014 = vsub.f32 %v969, %v358
      %v1015 = vsub.f32 %v974, %v358
      %v1016 = vsub.f32 %v979, %v358
      %v1017 = vsub.f32 %v984, %v358
      %v1018 = vsub.f32 %v989, %v358
      %v1019 = vsub.f32 %v994, %v358
      %v1020 = vsub.f32 %v999, %v358
      %v1021 = vsub.f32 %v1004, %v358
      %v1022 = vmul.f32 %v1006, %v1006
      %v1023 = vmul.f32 %v1007, %v1007
      %v1024 = vmul.f32 %v1008, %v1008
      %v1025 = vmul.f32 %v1009, %v1009
      %v1026 = vmul.f32 %v1010, %v1010
      %v1027 = vmul.f32 %v1011, %v1011
      %v1028 = vmul.f32 %v1012, %v1012
      %v1029 = vmul.f32 %v1013, %v1013
      %v1030 = vmul.f32 %v1014, %v1014
      %v1031 = vmul.f32 %v1015, %v1015
      %v1032 = vmul.f32 %v1016, %v1016
      %v1033 = vmul.f32 %v1017, %v1017
      %v1034 = vmul.f32 %v1018, %v1018
      %v1035 = vmul.f32 %v1019, %v1019
      %v1036 = vmul.f32 %v1020, %v1020
      %v1037 = vmul.f32 %v1021, %v1021
      %1038 = vset.pattern.permute.xlu0 1
      %1039 = vperm.xlu0 %1038, %v910
      %v1040 = vpop.permute.xlu0 %1039
      %1042 = vset.pattern.permute.xlu0 1
      %1043 = vperm.xlu0 %1042, %v911
      %v1044 = vpop.permute.xlu0 %1043
      %1046 = vset.pattern.permute.xlu0 1
      %1047 = vperm.xlu0 %1046, %v912
      %v1048 = vpop.permute.xlu0 %1047
      %1050 = vset.pattern.permute.xlu0 1
      %1051 = vperm.xlu0 %1050, %v913
      %v1052 = vpop.permute.xlu0 %1051
      %1054 = vset.pattern.permute.xlu0 1
      %1055 = vperm.xlu0 %1054, %v914
      %v1056 = vpop.permute.xlu0 %1055
      %1058 = vset.pattern.permute.xlu0 1
      %1059 = vperm.xlu0 %1058, %v915
      %v1060 = vpop.permute.xlu0 %1059
      %1062 = vset.pattern.permute.xlu0 1
      %1063 = vperm.xlu0 %1062, %v916
      %v1064 = vpop.permute.xlu0 %1063
      %1066 = vset.pattern.permute.xlu0 1
      %1067 = vperm.xlu0 %1066, %v917
      %v1068 = vpop.permute.xlu0 %1067
      %1070 = vset.pattern.permute.xlu0 1
      %1071 = vperm.xlu0 %1070, %v918
      %v1072 = vpop.permute.xlu0 %1071
      %1074 = vset.pattern.permute.xlu0 1
      %1075 = vperm.xlu0 %1074, %v919
      %v1076 = vpop.permute.xlu0 %1075
      %1078 = vset.pattern.permute.xlu0 1
      %1079 = vperm.xlu0 %1078, %v920
      %v1080 = vpop.permute.xlu0 %1079
      %1082 = vset.pattern.permute.xlu0 1
      %1083 = vperm.xlu0 %1082, %v921
      %v1084 = vpop.permute.xlu0 %1083
      %1086 = vset.pattern.permute.xlu0 1
      %1087 = vperm.xlu0 %1086, %v922
      %v1088 = vpop.permute.xlu0 %1087
      %1090 = vset.pattern.permute.xlu0 1
      %1091 = vperm.xlu0 %1090, %v923
      %v1092 = vpop.permute.xlu0 %1091
      %1094 = vset.pattern.permute.xlu0 1
      %1095 = vperm.xlu0 %1094, %v924
      %v1096 = vpop.permute.xlu0 %1095
      %1098 = vset.pattern.permute.xlu0 1
      %1099 = vperm.xlu0 %1098, %v925
      %v1100 = vpop.permute.xlu0 %1099
      %v1102 = vsub.f32 %v1040, %v458
      %v1103 = vsub.f32 %v1044, %v458
      %v1104 = vsub.f32 %v1048, %v458
      %v1105 = vsub.f32 %v1052, %v458
      %v1106 = vsub.f32 %v1056, %v458
      %v1107 = vsub.f32 %v1060, %v458
      %v1108 = vsub.f32 %v1064, %v458
      %v1109 = vsub.f32 %v1068, %v458
      %v1110 = vsub.f32 %v1072, %v458
      %v1111 = vsub.f32 %v1076, %v458
      %v1112 = vsub.f32 %v1080, %v458
      %v1113 = vsub.f32 %v1084, %v458
      %v1114 = vsub.f32 %v1088, %v458
      %v1115 = vsub.f32 %v1092, %v458
      %v1116 = vsub.f32 %v1096, %v458
      %v1117 = vsub.f32 %v1100, %v458
      %v1118 = vmul.f32 %v1102, %v1102
      %v1119 = vmul.f32 %v1103, %v1103
      %v1120 = vmul.f32 %v1104, %v1104
      %v1121 = vmul.f32 %v1105, %v1105
      %v1122 = vmul.f32 %v1106, %v1106
      %v1123 = vmul.f32 %v1107, %v1107
      %v1124 = vmul.f32 %v1108, %v1108
      %v1125 = vmul.f32 %v1109, %v1109
      %v1126 = vmul.f32 %v1110, %v1110
      %v1127 = vmul.f32 %v1111, %v1111
      %v1128 = vmul.f32 %v1112, %v1112
      %v1129 = vmul.f32 %v1113, %v1113
      %v1130 = vmul.f32 %v1114, %v1114
      %v1131 = vmul.f32 %v1115, %v1115
      %v1132 = vmul.f32 %v1116, %v1116
      %v1133 = vmul.f32 %v1117, %v1117
      %v1134 = vadd.f32 %v1022, %v1118
      %v1135 = vadd.f32 %v1023, %v1119
      %v1136 = vadd.f32 %v1024, %v1120
      %v1137 = vadd.f32 %v1025, %v1121
      %v1138 = vadd.f32 %v1026, %v1122
      %v1139 = vadd.f32 %v1027, %v1123
      %v1140 = vadd.f32 %v1028, %v1124
      %v1141 = vadd.f32 %v1029, %v1125
      %v1142 = vadd.f32 %v1030, %v1126
      %v1143 = vadd.f32 %v1031, %v1127
      %v1144 = vadd.f32 %v1032, %v1128
      %v1145 = vadd.f32 %v1033, %v1129
      %v1146 = vadd.f32 %v1034, %v1130
      %v1147 = vadd.f32 %v1035, %v1131
      %v1148 = vadd.f32 %v1036, %v1132
      %v1149 = vadd.f32 %v1037, %v1133
      %1150 = vset.pattern.permute.xlu0 2
      %1151 = vperm.xlu0 %1150, %v910
      %v1152 = vpop.permute.xlu0 %1151
      %1154 = vset.pattern.permute.xlu0 2
      %1155 = vperm.xlu0 %1154, %v911
      %v1156 = vpop.permute.xlu0 %1155
      %1158 = vset.pattern.permute.xlu0 2
      %1159 = vperm.xlu0 %1158, %v912
      %v1160 = vpop.permute.xlu0 %1159
      %1162 = vset.pattern.permute.xlu0 2
      %1163 = vperm.xlu0 %1162, %v913
      %v1164 = vpop.permute.xlu0 %1163
      %1166 = vset.pattern.permute.xlu0 2
      %1167 = vperm.xlu0 %1166, %v914
      %v1168 = vpop.permute.xlu0 %1167
      %1170 = vset.pattern.permute.xlu0 2
      %1171 = vperm.xlu0 %1170, %v915
      %v1172 = vpop.permute.xlu0 %1171
      %1174 = vset.pattern.permute.xlu0 2
      %1175 = vperm.xlu0 %1174, %v916
      %v1176 = vpop.permute.xlu0 %1175
      %1178 = vset.pattern.permute.xlu0 2
      %1179 = vperm.xlu0 %1178, %v917
      %v1180 = vpop.permute.xlu0 %1179
      %1182 = vset.pattern.permute.xlu0 2
      %1183 = vperm.xlu0 %1182, %v918
      %v1184 = vpop.permute.xlu0 %1183
      %1186 = vset.pattern.permute.xlu0 2
      %1187 = vperm.xlu0 %1186, %v919
      %v1188 = vpop.permute.xlu0 %1187
      %1190 = vset.pattern.permute.xlu0 2
      %1191 = vperm.xlu0 %1190, %v920
      %v1192 = vpop.permute.xlu0 %1191
      %1194 = vset.pattern.permute.xlu0 2
      %1195 = vperm.xlu0 %1194, %v921
      %v1196 = vpop.permute.xlu0 %1195
      %1198 = vset.pattern.permute.xlu0 2
      %1199 = vperm.xlu0 %1198, %v922
      %v1200 = vpop.permute.xlu0 %1199
      %1202 = vset.pattern.permute.xlu0 2
      %1203 = vperm.xlu0 %1202, %v923
      %v1204 = vpop.permute.xlu0 %1203
      %1206 = vset.pattern.permute.xlu0 2
      %1207 = vperm.xlu0 %1206, %v924
      %v1208 = vpop.permute.xlu0 %1207
      %1210 = vset.pattern.permute.xlu0 2
      %1211 = vperm.xlu0 %1210, %v925
      %v1212 = vpop.permute.xlu0 %1211
      %v1214 = vsub.f32 %v1152, %v574
      %v1215 = vsub.f32 %v1156, %v574
      %v1216 = vsub.f32 %v1160, %v574
      %v1217 = vsub.f32 %v1164, %v574
      %v1218 = vsub.f32 %v1168, %v574
      %v1219 = vsub.f32 %v1172, %v574
      %v1220 = vsub.f32 %v1176, %v574
      %v1221 = vsub.f32 %v1180, %v574
      %v1222 = vsub.f32 %v1184, %v574
      %v1223 = vsub.f32 %v1188, %v574
      %v1224 = vsub.f32 %v1192, %v574
      %v1225 = vsub.f32 %v1196, %v574
      %v1226 = vsub.f32 %v1200, %v574
      %v1227 = vsub.f32 %v1204, %v574
      %v1228 = vsub.f32 %v1208, %v574
      %v1229 = vsub.f32 %v1212, %v574
      %v1230 = vmul.f32 %v1214, %v1214
      %v1231 = vmul.f32 %v1215, %v1215
      %v1232 = vmul.f32 %v1216, %v1216
      %v1233 = vmul.f32 %v1217, %v1217
      %v1234 = vmul.f32 %v1218, %v1218
      %v1235 = vmul.f32 %v1219, %v1219
      %v1236 = vmul.f32 %v1220, %v1220
      %v1237 = vmul.f32 %v1221, %v1221
      %v1238 = vmul.f32 %v1222, %v1222
      %v1239 = vmul.f32 %v1223, %v1223
      %v1240 = vmul.f32 %v1224, %v1224
      %v1241 = vmul.f32 %v1225, %v1225
      %v1242 = vmul.f32 %v1226, %v1226
      %v1243 = vmul.f32 %v1227, %v1227
      %v1244 = vmul.f32 %v1228, %v1228
      %v1245 = vmul.f32 %v1229, %v1229
      %v1246 = vadd.f32 %v1134, %v1230
      %v1247 = vadd.f32 %v1135, %v1231
      %v1248 = vadd.f32 %v1136, %v1232
      %v1249 = vadd.f32 %v1137, %v1233
      %v1250 = vadd.f32 %v1138, %v1234
      %v1251 = vadd.f32 %v1139, %v1235
      %v1252 = vadd.f32 %v1140, %v1236
      %v1253 = vadd.f32 %v1141, %v1237
      %v1254 = vadd.f32 %v1142, %v1238
      %v1255 = vadd.f32 %v1143, %v1239
      %v1256 = vadd.f32 %v1144, %v1240
      %v1257 = vadd.f32 %v1145, %v1241
      %v1258 = vadd.f32 %v1146, %v1242
      %v1259 = vadd.f32 %v1147, %v1243
      %v1260 = vadd.f32 %v1148, %v1244
      %v1261 = vadd.f32 %v1149, %v1245
      %1262 = vmin.xlane.f32.xlu0 %v1246
      %v1263 = vpop.xlane.xlu0 %1262
      %1264 = vmin.xlane.f32.xlu0 %v1247
      %v1265 = vpop.xlane.xlu0 %1264
      %1266 = vmin.xlane.f32.xlu0 %v1248
      %v1267 = vpop.xlane.xlu0 %1266
      %1268 = vmin.xlane.f32.xlu0 %v1249
      %v1269 = vpop.xlane.xlu0 %1268
      %1270 = vmin.xlane.f32.xlu0 %v1250
      %v1271 = vpop.xlane.xlu0 %1270
      %1272 = vmin.xlane.f32.xlu0 %v1251
      %v1273 = vpop.xlane.xlu0 %1272
      %1274 = vmin.xlane.f32.xlu0 %v1252
      %v1275 = vpop.xlane.xlu0 %1274
      %1276 = vmin.xlane.f32.xlu0 %v1253
      %v1277 = vpop.xlane.xlu0 %1276
      %1278 = vmin.xlane.f32.xlu0 %v1254
      %v1279 = vpop.xlane.xlu0 %1278
      %1280 = vmin.xlane.f32.xlu0 %v1255
      %v1281 = vpop.xlane.xlu0 %1280
      %1282 = vmin.xlane.f32.xlu0 %v1256
      %v1283 = vpop.xlane.xlu0 %1282
      %1284 = vmin.xlane.f32.xlu0 %v1257
      %v1285 = vpop.xlane.xlu0 %1284
      %1286 = vmin.xlane.f32.xlu0 %v1258
      %v1287 = vpop.xlane.xlu0 %1286
      %1288 = vmin.xlane.f32.xlu0 %v1259
      %v1289 = vpop.xlane.xlu0 %1288
      %1290 = vmin.xlane.f32.xlu0 %v1260
      %v1291 = vpop.xlane.xlu0 %1290
      %1292 = vmin.xlane.f32.xlu0 %v1261
      %v1293 = vpop.xlane.xlu0 %1292
      %vm1294 = vcmp.eq.f32.partialorder %v1246, %v1263
      %vm1295 = vcmp.eq.f32.partialorder %v1247, %v1265
      %vm1296 = vcmp.eq.f32.partialorder %v1248, %v1267
      %vm1297 = vcmp.eq.f32.partialorder %v1249, %v1269
      %vm1298 = vcmp.eq.f32.partialorder %v1250, %v1271
      %vm1299 = vcmp.eq.f32.partialorder %v1251, %v1273
      %vm1300 = vcmp.eq.f32.partialorder %v1252, %v1275
      %vm1301 = vcmp.eq.f32.partialorder %v1253, %v1277
      %vm1302 = vcmp.eq.f32.partialorder %v1254, %v1279
      %vm1303 = vcmp.eq.f32.partialorder %v1255, %v1281
      %vm1304 = vcmp.eq.f32.partialorder %v1256, %v1283
      %vm1305 = vcmp.eq.f32.partialorder %v1257, %v1285
      %vm1306 = vcmp.eq.f32.partialorder %v1258, %v1287
      %vm1307 = vcmp.eq.f32.partialorder %v1259, %v1289
      %vm1308 = vcmp.eq.f32.partialorder %v1260, %v1291
      %vm1309 = vcmp.eq.f32.partialorder %v1261, %v1293
      %v1310 = vsel %vm1294, 1, 0
      %v1311 = vsel %vm1295, 1, 0
      %v1312 = vsel %vm1296, 1, 0
      %v1313 = vsel %vm1297, 1, 0
      %v1314 = vsel %vm1298, 1, 0
      %v1315 = vsel %vm1299, 1, 0
      %v1316 = vsel %vm1300, 1, 0
      %v1317 = vsel %vm1301, 1, 0
      %v1318 = vsel %vm1302, 1, 0
      %v1319 = vsel %vm1303, 1, 0
      %v1320 = vsel %vm1304, 1, 0
      %v1321 = vsel %vm1305, 1, 0
      %v1322 = vsel %vm1306, 1, 0
      %v1323 = vsel %vm1307, 1, 0
      %v1324 = vsel %vm1308, 1, 0
      %v1325 = vsel %vm1309, 1, 0
      %v1326 = vcvt.s32.f32 %v1310
      %v1327 = vcvt.s32.f32 %v1311
      %v1328 = vcvt.s32.f32 %v1312
      %v1329 = vcvt.s32.f32 %v1313
      %v1330 = vcvt.s32.f32 %v1314
      %v1331 = vcvt.s32.f32 %v1315
      %v1332 = vcvt.s32.f32 %v1316
      %v1333 = vcvt.s32.f32 %v1317
      %v1334 = vcvt.s32.f32 %v1318
      %v1335 = vcvt.s32.f32 %v1319
      %v1336 = vcvt.s32.f32 %v1320
      %v1337 = vcvt.s32.f32 %v1321
      %v1338 = vcvt.s32.f32 %v1322
      %v1339 = vcvt.s32.f32 %v1323
      %v1340 = vcvt.s32.f32 %v1324
      %v1341 = vcvt.s32.f32 %v1325
      %vm1342 = vcmp.le.f32.partialorder %v238, %v1263
      %vm1343 = vcmp.le.f32.partialorder %v239, %v1265
      %vm1344 = vcmp.le.f32.partialorder %v240, %v1267
      %vm1345 = vcmp.le.f32.partialorder %v241, %v1269
      %vm1346 = vcmp.le.f32.partialorder %v242, %v1271
      %vm1347 = vcmp.le.f32.partialorder %v243, %v1273
      %vm1348 = vcmp.le.f32.partialorder %v244, %v1275
      %vm1349 = vcmp.le.f32.partialorder %v245, %v1277
      %vm1350 = vcmp.le.f32.partialorder %v246, %v1279
      %vm1351 = vcmp.le.f32.partialorder %v247, %v1281
      %vm1352 = vcmp.le.f32.partialorder %v248, %v1283
      %vm1353 = vcmp.le.f32.partialorder %v249, %v1285
      %vm1354 = vcmp.le.f32.partialorder %v250, %v1287
      %vm1355 = vcmp.le.f32.partialorder %v251, %v1289
      %vm1356 = vcmp.le.f32.partialorder %v252, %v1291
      %vm1357 = vcmp.le.f32.partialorder %v253, %v1293
      %v1358 = vsel %vm1342, 1, 0
      %v1359 = vsel %vm1343, 1, 0
      %v1360 = vsel %vm1344, 1, 0
      %v1361 = vsel %vm1345, 1, 0
      %v1362 = vsel %vm1346, 1, 0
      %v1363 = vsel %vm1347, 1, 0
      %v1364 = vsel %vm1348, 1, 0
      %v1365 = vsel %vm1349, 1, 0
      %v1366 = vsel %vm1350, 1, 0
      %v1367 = vsel %vm1351, 1, 0
      %v1368 = vsel %vm1352, 1, 0
      %v1369 = vsel %vm1353, 1, 0
      %v1370 = vsel %vm1354, 1, 0
      %v1371 = vsel %vm1355, 1, 0
      %v1372 = vsel %vm1356, 1, 0
      %v1373 = vsel %vm1357, 1, 0
      %v1374 = vcvt.s32.f32 %v1358
      %v1375 = vcvt.s32.f32 %v1359
      %v1376 = vcvt.s32.f32 %v1360
      %v1377 = vcvt.s32.f32 %v1361
      %v1378 = vcvt.s32.f32 %v1362
      %v1379 = vcvt.s32.f32 %v1363
      %v1380 = vcvt.s32.f32 %v1364
      %v1381 = vcvt.s32.f32 %v1365
      %v1382 = vcvt.s32.f32 %v1366
      %v1383 = vcvt.s32.f32 %v1367
      %v1384 = vcvt.s32.f32 %v1368
      %v1385 = vcvt.s32.f32 %v1369
      %v1386 = vcvt.s32.f32 %v1370
      %v1387 = vcvt.s32.f32 %v1371
      %v1388 = vcvt.s32.f32 %v1372
      %v1389 = vcvt.s32.f32 %v1373
      %1391 = vset.pattern.permute.xlu0 0
      %1392 = vperm.xlu0 %1391, %v1374
      %v1393 = vpop.permute.xlu0 %1392
      %1396 = vset.pattern.permute.xlu0 0
      %1397 = vperm.xlu0 %1396, %v1375
      %v1398 = vpop.permute.xlu0 %1397
      %1401 = vset.pattern.permute.xlu0 0
      %1402 = vperm.xlu0 %1401, %v1376
      %v1403 = vpop.permute.xlu0 %1402
      %1406 = vset.pattern.permute.xlu0 0
      %1407 = vperm.xlu0 %1406, %v1377
      %v1408 = vpop.permute.xlu0 %1407
      %1411 = vset.pattern.permute.xlu0 0
      %1412 = vperm.xlu0 %1411, %v1378
      %v1413 = vpop.permute.xlu0 %1412
      %1416 = vset.pattern.permute.xlu0 0
      %1417 = vperm.xlu0 %1416, %v1379
      %v1418 = vpop.permute.xlu0 %1417
      %1421 = vset.pattern.permute.xlu0 0
      %1422 = vperm.xlu0 %1421, %v1380
      %v1423 = vpop.permute.xlu0 %1422
      %1426 = vset.pattern.permute.xlu0 0
      %1427 = vperm.xlu0 %1426, %v1381
      %v1428 = vpop.permute.xlu0 %1427
      %1431 = vset.pattern.permute.xlu0 0
      %1432 = vperm.xlu0 %1431, %v1382
      %v1433 = vpop.permute.xlu0 %1432
      %1436 = vset.pattern.permute.xlu0 0
      %1437 = vperm.xlu0 %1436, %v1383
      %v1438 = vpop.permute.xlu0 %1437
      %1441 = vset.pattern.permute.xlu0 0
      %1442 = vperm.xlu0 %1441, %v1384
      %v1443 = vpop.permute.xlu0 %1442
      %1446 = vset.pattern.permute.xlu0 0
      %1447 = vperm.xlu0 %1446, %v1385
      %v1448 = vpop.permute.xlu0 %1447
      %1451 = vset.pattern.permute.xlu0 0
      %1452 = vperm.xlu0 %1451, %v1386
      %v1453 = vpop.permute.xlu0 %1452
      %1456 = vset.pattern.permute.xlu0 0
      %1457 = vperm.xlu0 %1456, %v1387
      %v1458 = vpop.permute.xlu0 %1457
      %1461 = vset.pattern.permute.xlu0 0
      %1462 = vperm.xlu0 %1461, %v1388
      %v1463 = vpop.permute.xlu0 %1462
      %1466 = vset.pattern.permute.xlu0 0
      %1467 = vperm.xlu0 %1466, %v1389
      %v1468 = vpop.permute.xlu0 %1467
      %v1470 = vmul.f32 %v1326, %v1393
      %v1471 = vmul.f32 %v1327, %v1398
      %v1472 = vmul.f32 %v1328, %v1403
      %v1473 = vmul.f32 %v1329, %v1408
      %v1474 = vmul.f32 %v1330, %v1413
      %v1475 = vmul.f32 %v1331, %v1418
      %v1476 = vmul.f32 %v1332, %v1423
      %v1477 = vmul.f32 %v1333, %v1428
      %v1478 = vmul.f32 %v1334, %v1433
      %v1479 = vmul.f32 %v1335, %v1438
      %v1480 = vmul.f32 %v1336, %v1443
      %v1481 = vmul.f32 %v1337, %v1448
      %v1482 = vmul.f32 %v1338, %v1453
      %v1483 = vmul.f32 %v1339, %v1458
      %v1484 = vmul.f32 %v1340, %v1463
      %v1485 = vmul.f32 %v1341, %v1468
      %v1486 = vadd.f32 %v1470, %v1471
      %v1487 = vadd.f32 %v1486, %v1472
      %v1488 = vadd.f32 %v1487, %v1473
      %v1489 = vadd.f32 %v1488, %v1474
      %v1490 = vadd.f32 %v1489, %v1475
      %v1491 = vadd.f32 %v1490, %v1476
      %v1492 = vadd.f32 %v1491, %v1477
      %v1493 = vadd.f32 %v1492, %v1478
      %v1494 = vadd.f32 %v1493, %v1479
      %v1495 = vadd.f32 %v1494, %v1480
      %v1496 = vadd.f32 %v1495, %v1481
      %v1497 = vadd.f32 %v1496, %v1482
      %v1498 = vadd.f32 %v1497, %v1483
      %v1499 = vadd.f32 %v1498, %v1484
      %v1500 = vadd.f32 %v1499, %v1485
      %v1501 = vrot.slane %v1500, 4
      %v1502 = vadd.f32 %v1500, %v1501
      %v1503 = vrot.slane %v1502, 2
      %v1504 = vadd.f32 %v1502, %v1503
      %v1505 = vrot.slane %v1504, 1
      %v1506 = vadd.f32 %v1504, %v1505
      %v1507 = vsel %vm868, %v1374, 0.0
      %v1508 = vsel %vm868, %v1375, 0.0
      %v1509 = vadd.f32 %v1507, %v1508
      %v1510 = vsel %vm868, %v1376, 0.0
      %v1511 = vadd.f32 %v1509, %v1510
      %v1512 = vsel %vm868, %v1377, 0.0
      %v1513 = vadd.f32 %v1511, %v1512
      %v1514 = vsel %vm868, %v1378, 0.0
      %v1515 = vadd.f32 %v1513, %v1514
      %v1516 = vsel %vm868, %v1379, 0.0
      %v1517 = vadd.f32 %v1515, %v1516
      %v1518 = vsel %vm868, %v1380, 0.0
      %v1519 = vadd.f32 %v1517, %v1518
      %v1520 = vsel %vm868, %v1381, 0.0
      %v1521 = vadd.f32 %v1519, %v1520
      %v1522 = vsel %vm868, %v1382, 0.0
      %v1523 = vadd.f32 %v1521, %v1522
      %v1524 = vsel %vm868, %v1383, 0.0
      %v1525 = vadd.f32 %v1523, %v1524
      %v1526 = vsel %vm868, %v1384, 0.0
      %v1527 = vadd.f32 %v1525, %v1526
      %v1528 = vsel %vm868, %v1385, 0.0
      %v1529 = vadd.f32 %v1527, %v1528
      %v1530 = vsel %vm868, %v1386, 0.0
      %v1531 = vadd.f32 %v1529, %v1530
      %v1532 = vsel %vm868, %v1387, 0.0
      %v1533 = vadd.f32 %v1531, %v1532
      %v1534 = vsel %vm868, %v1388, 0.0
      %v1535 = vadd.f32 %v1533, %v1534
      %v1536 = vsel %vm868, %v1389, 0.0
      %v1537 = vadd.f32 %v1535, %v1536
      %v1538 = vrot.slane %v1537, 4
      %v1539 = vadd.f32 %v1537, %v1538
      %v1540 = vrot.slane %v1539, 2
      %v1541 = vadd.f32 %v1539, %v1540
      %v1542 = vrot.slane %v1541, 1
      %v1543 = vadd.f32 %v1541, %v1542
      %v1544 = vlaneseq
      %v1545 = vshrl.u32 %v1544, 7
      %v1546 = vsub.s32 2, %v1545
      %v1547 = vrot.slane %v220, %v1546
      %v1548 = vadd.f32 %v1547, %v221
      %v1549 = vadd.f32 %v1547, %v222
      %v1550 = vadd.f32 %v1547, %v223
      %v1551 = vadd.f32 %v1547, %v224
      %v1552 = vadd.f32 %v1547, %v225
      %v1553 = vadd.f32 %v1547, %v226
      %v1554 = vadd.f32 %v1547, %v227
      %v1555 = vadd.f32 %v1547, %v228
      %v1556 = vadd.f32 %v1547, %v229
      %v1557 = vadd.f32 %v1547, %v230
      %v1558 = vadd.f32 %v1547, %v231
      %v1559 = vadd.f32 %v1547, %v232
      %v1560 = vadd.f32 %v1547, %v233
      %v1561 = vadd.f32 %v1547, %v234
      %v1562 = vadd.f32 %v1547, %v235
      %v1563 = vadd.f32 %v1547, %v236
      %1565 = vset.pattern.permute.xlu0 0
      %1566 = vperm.xlu0 %1565, %v1548
      %v1567 = vpop.permute.xlu0 %1566
      %1570 = vset.pattern.permute.xlu0 0
      %1571 = vperm.xlu0 %1570, %v1549
      %v1572 = vpop.permute.xlu0 %1571
      %1575 = vset.pattern.permute.xlu0 0
      %1576 = vperm.xlu0 %1575, %v1550
      %v1577 = vpop.permute.xlu0 %1576
      %1580 = vset.pattern.permute.xlu0 0
      %1581 = vperm.xlu0 %1580, %v1551
      %v1582 = vpop.permute.xlu0 %1581
      %1585 = vset.pattern.permute.xlu0 0
      %1586 = vperm.xlu0 %1585, %v1552
      %v1587 = vpop.permute.xlu0 %1586
      %1590 = vset.pattern.permute.xlu0 0
      %1591 = vperm.xlu0 %1590, %v1553
      %v1592 = vpop.permute.xlu0 %1591
      %1595 = vset.pattern.permute.xlu0 0
      %1596 = vperm.xlu0 %1595, %v1554
      %v1597 = vpop.permute.xlu0 %1596
      %1600 = vset.pattern.permute.xlu0 0
      %1601 = vperm.xlu0 %1600, %v1555
      %v1602 = vpop.permute.xlu0 %1601
      %1605 = vset.pattern.permute.xlu0 0
      %1606 = vperm.xlu0 %1605, %v1556
      %v1607 = vpop.permute.xlu0 %1606
      %1610 = vset.pattern.permute.xlu0 0
      %1611 = vperm.xlu0 %1610, %v1557
      %v1612 = vpop.permute.xlu0 %1611
      %1615 = vset.pattern.permute.xlu0 0
      %1616 = vperm.xlu0 %1615, %v1558
      %v1617 = vpop.permute.xlu0 %1616
      %1620 = vset.pattern.permute.xlu0 0
      %1621 = vperm.xlu0 %1620, %v1559
      %v1622 = vpop.permute.xlu0 %1621
      %1625 = vset.pattern.permute.xlu0 0
      %1626 = vperm.xlu0 %1625, %v1560
      %v1627 = vpop.permute.xlu0 %1626
      %1630 = vset.pattern.permute.xlu0 0
      %1631 = vperm.xlu0 %1630, %v1561
      %v1632 = vpop.permute.xlu0 %1631
      %1635 = vset.pattern.permute.xlu0 0
      %1636 = vperm.xlu0 %1635, %v1562
      %v1637 = vpop.permute.xlu0 %1636
      %1640 = vset.pattern.permute.xlu0 0
      %1641 = vperm.xlu0 %1640, %v1563
      %v1642 = vpop.permute.xlu0 %1641
      %v1644 = vsub.f32 %v1567, %v358
      %v1645 = vsub.f32 %v1572, %v358
      %v1646 = vsub.f32 %v1577, %v358
      %v1647 = vsub.f32 %v1582, %v358
      %v1648 = vsub.f32 %v1587, %v358
      %v1649 = vsub.f32 %v1592, %v358
      %v1650 = vsub.f32 %v1597, %v358
      %v1651 = vsub.f32 %v1602, %v358
      %v1652 = vsub.f32 %v1607, %v358
      %v1653 = vsub.f32 %v1612, %v358
      %v1654 = vsub.f32 %v1617, %v358
      %v1655 = vsub.f32 %v1622, %v358
      %v1656 = vsub.f32 %v1627, %v358
      %v1657 = vsub.f32 %v1632, %v358
      %v1658 = vsub.f32 %v1637, %v358
      %v1659 = vsub.f32 %v1642, %v358
      %v1660 = vmul.f32 %v1644, %v1644
      %v1661 = vmul.f32 %v1645, %v1645
      %v1662 = vmul.f32 %v1646, %v1646
      %v1663 = vmul.f32 %v1647, %v1647
      %v1664 = vmul.f32 %v1648, %v1648
      %v1665 = vmul.f32 %v1649, %v1649
      %v1666 = vmul.f32 %v1650, %v1650
      %v1667 = vmul.f32 %v1651, %v1651
      %v1668 = vmul.f32 %v1652, %v1652
      %v1669 = vmul.f32 %v1653, %v1653
      %v1670 = vmul.f32 %v1654, %v1654
      %v1671 = vmul.f32 %v1655, %v1655
      %v1672 = vmul.f32 %v1656, %v1656
      %v1673 = vmul.f32 %v1657, %v1657
      %v1674 = vmul.f32 %v1658, %v1658
      %v1675 = vmul.f32 %v1659, %v1659
      %1676 = vset.pattern.permute.xlu0 1
      %1677 = vperm.xlu0 %1676, %v1548
      %v1678 = vpop.permute.xlu0 %1677
      %1680 = vset.pattern.permute.xlu0 1
      %1681 = vperm.xlu0 %1680, %v1549
      %v1682 = vpop.permute.xlu0 %1681
      %1684 = vset.pattern.permute.xlu0 1
      %1685 = vperm.xlu0 %1684, %v1550
      %v1686 = vpop.permute.xlu0 %1685
      %1688 = vset.pattern.permute.xlu0 1
      %1689 = vperm.xlu0 %1688, %v1551
      %v1690 = vpop.permute.xlu0 %1689
      %1692 = vset.pattern.permute.xlu0 1
      %1693 = vperm.xlu0 %1692, %v1552
      %v1694 = vpop.permute.xlu0 %1693
      %1696 = vset.pattern.permute.xlu0 1
      %1697 = vperm.xlu0 %1696, %v1553
      %v1698 = vpop.permute.xlu0 %1697
      %1700 = vset.pattern.permute.xlu0 1
      %1701 = vperm.xlu0 %1700, %v1554
      %v1702 = vpop.permute.xlu0 %1701
      %1704 = vset.pattern.permute.xlu0 1
      %1705 = vperm.xlu0 %1704, %v1555
      %v1706 = vpop.permute.xlu0 %1705
      %1708 = vset.pattern.permute.xlu0 1
      %1709 = vperm.xlu0 %1708, %v1556
      %v1710 = vpop.permute.xlu0 %1709
      %1712 = vset.pattern.permute.xlu0 1
      %1713 = vperm.xlu0 %1712, %v1557
      %v1714 = vpop.permute.xlu0 %1713
      %1716 = vset.pattern.permute.xlu0 1
      %1717 = vperm.xlu0 %1716, %v1558
      %v1718 = vpop.permute.xlu0 %1717
      %1720 = vset.pattern.permute.xlu0 1
      %1721 = vperm.xlu0 %1720, %v1559
      %v1722 = vpop.permute.xlu0 %1721
      %1724 = vset.pattern.permute.xlu0 1
      %1725 = vperm.xlu0 %1724, %v1560
      %v1726 = vpop.permute.xlu0 %1725
      %1728 = vset.pattern.permute.xlu0 1
      %1729 = vperm.xlu0 %1728, %v1561
      %v1730 = vpop.permute.xlu0 %1729
      %1732 = vset.pattern.permute.xlu0 1
      %1733 = vperm.xlu0 %1732, %v1562
      %v1734 = vpop.permute.xlu0 %1733
      %1736 = vset.pattern.permute.xlu0 1
      %1737 = vperm.xlu0 %1736, %v1563
      %v1738 = vpop.permute.xlu0 %1737
      %v1740 = vsub.f32 %v1678, %v458
      %v1741 = vsub.f32 %v1682, %v458
      %v1742 = vsub.f32 %v1686, %v458
      %v1743 = vsub.f32 %v1690, %v458
      %v1744 = vsub.f32 %v1694, %v458
      %v1745 = vsub.f32 %v1698, %v458
      %v1746 = vsub.f32 %v1702, %v458
      %v1747 = vsub.f32 %v1706, %v458
      %v1748 = vsub.f32 %v1710, %v458
      %v1749 = vsub.f32 %v1714, %v458
      %v1750 = vsub.f32 %v1718, %v458
      %v1751 = vsub.f32 %v1722, %v458
      %v1752 = vsub.f32 %v1726, %v458
      %v1753 = vsub.f32 %v1730, %v458
      %v1754 = vsub.f32 %v1734, %v458
      %v1755 = vsub.f32 %v1738, %v458
      %v1756 = vmul.f32 %v1740, %v1740
      %v1757 = vmul.f32 %v1741, %v1741
      %v1758 = vmul.f32 %v1742, %v1742
      %v1759 = vmul.f32 %v1743, %v1743
      %v1760 = vmul.f32 %v1744, %v1744
      %v1761 = vmul.f32 %v1745, %v1745
      %v1762 = vmul.f32 %v1746, %v1746
      %v1763 = vmul.f32 %v1747, %v1747
      %v1764 = vmul.f32 %v1748, %v1748
      %v1765 = vmul.f32 %v1749, %v1749
      %v1766 = vmul.f32 %v1750, %v1750
      %v1767 = vmul.f32 %v1751, %v1751
      %v1768 = vmul.f32 %v1752, %v1752
      %v1769 = vmul.f32 %v1753, %v1753
      %v1770 = vmul.f32 %v1754, %v1754
      %v1771 = vmul.f32 %v1755, %v1755
      %v1772 = vadd.f32 %v1660, %v1756
      %v1773 = vadd.f32 %v1661, %v1757
      %v1774 = vadd.f32 %v1662, %v1758
      %v1775 = vadd.f32 %v1663, %v1759
      %v1776 = vadd.f32 %v1664, %v1760
      %v1777 = vadd.f32 %v1665, %v1761
      %v1778 = vadd.f32 %v1666, %v1762
      %v1779 = vadd.f32 %v1667, %v1763
      %v1780 = vadd.f32 %v1668, %v1764
      %v1781 = vadd.f32 %v1669, %v1765
      %v1782 = vadd.f32 %v1670, %v1766
      %v1783 = vadd.f32 %v1671, %v1767
      %v1784 = vadd.f32 %v1672, %v1768
      %v1785 = vadd.f32 %v1673, %v1769
      %v1786 = vadd.f32 %v1674, %v1770
      %v1787 = vadd.f32 %v1675, %v1771
      %1788 = vset.pattern.permute.xlu0 2
      %1789 = vperm.xlu0 %1788, %v1548
      %v1790 = vpop.permute.xlu0 %1789
      %1792 = vset.pattern.permute.xlu0 2
      %1793 = vperm.xlu0 %1792, %v1549
      %v1794 = vpop.permute.xlu0 %1793
      %1796 = vset.pattern.permute.xlu0 2
      %1797 = vperm.xlu0 %1796, %v1550
      %v1798 = vpop.permute.xlu0 %1797
      %1800 = vset.pattern.permute.xlu0 2
      %1801 = vperm.xlu0 %1800, %v1551
      %v1802 = vpop.permute.xlu0 %1801
      %1804 = vset.pattern.permute.xlu0 2
      %1805 = vperm.xlu0 %1804, %v1552
      %v1806 = vpop.permute.xlu0 %1805
      %1808 = vset.pattern.permute.xlu0 2
      %1809 = vperm.xlu0 %1808, %v1553
      %v1810 = vpop.permute.xlu0 %1809
      %1812 = vset.pattern.permute.xlu0 2
      %1813 = vperm.xlu0 %1812, %v1554
      %v1814 = vpop.permute.xlu0 %1813
      %1816 = vset.pattern.permute.xlu0 2
      %1817 = vperm.xlu0 %1816, %v1555
      %v1818 = vpop.permute.xlu0 %1817
      %1820 = vset.pattern.permute.xlu0 2
      %1821 = vperm.xlu0 %1820, %v1556
      %v1822 = vpop.permute.xlu0 %1821
      %1824 = vset.pattern.permute.xlu0 2
      %1825 = vperm.xlu0 %1824, %v1557
      %v1826 = vpop.permute.xlu0 %1825
      %1828 = vset.pattern.permute.xlu0 2
      %1829 = vperm.xlu0 %1828, %v1558
      %v1830 = vpop.permute.xlu0 %1829
      %1832 = vset.pattern.permute.xlu0 2
      %1833 = vperm.xlu0 %1832, %v1559
      %v1834 = vpop.permute.xlu0 %1833
      %1836 = vset.pattern.permute.xlu0 2
      %1837 = vperm.xlu0 %1836, %v1560
      %v1838 = vpop.permute.xlu0 %1837
      %1840 = vset.pattern.permute.xlu0 2
      %1841 = vperm.xlu0 %1840, %v1561
      %v1842 = vpop.permute.xlu0 %1841
      %1844 = vset.pattern.permute.xlu0 2
      %1845 = vperm.xlu0 %1844, %v1562
      %v1846 = vpop.permute.xlu0 %1845
      %1848 = vset.pattern.permute.xlu0 2
      %1849 = vperm.xlu0 %1848, %v1563
      %v1850 = vpop.permute.xlu0 %1849
      %v1852 = vsub.f32 %v1790, %v574
      %v1853 = vsub.f32 %v1794, %v574
      %v1854 = vsub.f32 %v1798, %v574
      %v1855 = vsub.f32 %v1802, %v574
      %v1856 = vsub.f32 %v1806, %v574
      %v1857 = vsub.f32 %v1810, %v574
      %v1858 = vsub.f32 %v1814, %v574
      %v1859 = vsub.f32 %v1818, %v574
      %v1860 = vsub.f32 %v1822, %v574
      %v1861 = vsub.f32 %v1826, %v574
      %v1862 = vsub.f32 %v1830, %v574
      %v1863 = vsub.f32 %v1834, %v574
      %v1864 = vsub.f32 %v1838, %v574
      %v1865 = vsub.f32 %v1842, %v574
      %v1866 = vsub.f32 %v1846, %v574
      %v1867 = vsub.f32 %v1850, %v574
      %v1868 = vmul.f32 %v1852, %v1852
      %v1869 = vmul.f32 %v1853, %v1853
      %v1870 = vmul.f32 %v1854, %v1854
      %v1871 = vmul.f32 %v1855, %v1855
      %v1872 = vmul.f32 %v1856, %v1856
      %v1873 = vmul.f32 %v1857, %v1857
      %v1874 = vmul.f32 %v1858, %v1858
      %v1875 = vmul.f32 %v1859, %v1859
      %v1876 = vmul.f32 %v1860, %v1860
      %v1877 = vmul.f32 %v1861, %v1861
      %v1878 = vmul.f32 %v1862, %v1862
      %v1879 = vmul.f32 %v1863, %v1863
      %v1880 = vmul.f32 %v1864, %v1864
      %v1881 = vmul.f32 %v1865, %v1865
      %v1882 = vmul.f32 %v1866, %v1866
      %v1883 = vmul.f32 %v1867, %v1867
      %v1884 = vadd.f32 %v1772, %v1868
      %v1885 = vadd.f32 %v1773, %v1869
      %v1886 = vadd.f32 %v1774, %v1870
      %v1887 = vadd.f32 %v1775, %v1871
      %v1888 = vadd.f32 %v1776, %v1872
      %v1889 = vadd.f32 %v1777, %v1873
      %v1890 = vadd.f32 %v1778, %v1874
      %v1891 = vadd.f32 %v1779, %v1875
      %v1892 = vadd.f32 %v1780, %v1876
      %v1893 = vadd.f32 %v1781, %v1877
      %v1894 = vadd.f32 %v1782, %v1878
      %v1895 = vadd.f32 %v1783, %v1879
      %v1896 = vadd.f32 %v1784, %v1880
      %v1897 = vadd.f32 %v1785, %v1881
      %v1898 = vadd.f32 %v1786, %v1882
      %v1899 = vadd.f32 %v1787, %v1883
      %1900 = vmin.xlane.f32.xlu0 %v1884
      %v1901 = vpop.xlane.xlu0 %1900
      %1902 = vmin.xlane.f32.xlu0 %v1885
      %v1903 = vpop.xlane.xlu0 %1902
      %1904 = vmin.xlane.f32.xlu0 %v1886
      %v1905 = vpop.xlane.xlu0 %1904
      %1906 = vmin.xlane.f32.xlu0 %v1887
      %v1907 = vpop.xlane.xlu0 %1906
      %1908 = vmin.xlane.f32.xlu0 %v1888
      %v1909 = vpop.xlane.xlu0 %1908
      %1910 = vmin.xlane.f32.xlu0 %v1889
      %v1911 = vpop.xlane.xlu0 %1910
      %1912 = vmin.xlane.f32.xlu0 %v1890
      %v1913 = vpop.xlane.xlu0 %1912
      %1914 = vmin.xlane.f32.xlu0 %v1891
      %v1915 = vpop.xlane.xlu0 %1914
      %1916 = vmin.xlane.f32.xlu0 %v1892
      %v1917 = vpop.xlane.xlu0 %1916
      %1918 = vmin.xlane.f32.xlu0 %v1893
      %v1919 = vpop.xlane.xlu0 %1918
      %1920 = vmin.xlane.f32.xlu0 %v1894
      %v1921 = vpop.xlane.xlu0 %1920
      %1922 = vmin.xlane.f32.xlu0 %v1895
      %v1923 = vpop.xlane.xlu0 %1922
      %1924 = vmin.xlane.f32.xlu0 %v1896
      %v1925 = vpop.xlane.xlu0 %1924
      %1926 = vmin.xlane.f32.xlu0 %v1897
      %v1927 = vpop.xlane.xlu0 %1926
      %1928 = vmin.xlane.f32.xlu0 %v1898
      %v1929 = vpop.xlane.xlu0 %1928
      %1930 = vmin.xlane.f32.xlu0 %v1899
      %v1931 = vpop.xlane.xlu0 %1930
      %vm1932 = vcmp.eq.f32.partialorder %v1884, %v1901
      %vm1933 = vcmp.eq.f32.partialorder %v1885, %v1903
      %vm1934 = vcmp.eq.f32.partialorder %v1886, %v1905
      %vm1935 = vcmp.eq.f32.partialorder %v1887, %v1907
      %vm1936 = vcmp.eq.f32.partialorder %v1888, %v1909
      %vm1937 = vcmp.eq.f32.partialorder %v1889, %v1911
      %vm1938 = vcmp.eq.f32.partialorder %v1890, %v1913
      %vm1939 = vcmp.eq.f32.partialorder %v1891, %v1915
      %vm1940 = vcmp.eq.f32.partialorder %v1892, %v1917
      %vm1941 = vcmp.eq.f32.partialorder %v1893, %v1919
      %vm1942 = vcmp.eq.f32.partialorder %v1894, %v1921
      %vm1943 = vcmp.eq.f32.partialorder %v1895, %v1923
      %vm1944 = vcmp.eq.f32.partialorder %v1896, %v1925
      %vm1945 = vcmp.eq.f32.partialorder %v1897, %v1927
      %vm1946 = vcmp.eq.f32.partialorder %v1898, %v1929
      %vm1947 = vcmp.eq.f32.partialorder %v1899, %v1931
      %v1948 = vsel %vm1932, 1, 0
      %v1949 = vsel %vm1933, 1, 0
      %v1950 = vsel %vm1934, 1, 0
      %v1951 = vsel %vm1935, 1, 0
      %v1952 = vsel %vm1936, 1, 0
      %v1953 = vsel %vm1937, 1, 0
      %v1954 = vsel %vm1938, 1, 0
      %v1955 = vsel %vm1939, 1, 0
      %v1956 = vsel %vm1940, 1, 0
      %v1957 = vsel %vm1941, 1, 0
      %v1958 = vsel %vm1942, 1, 0
      %v1959 = vsel %vm1943, 1, 0
      %v1960 = vsel %vm1944, 1, 0
      %v1961 = vsel %vm1945, 1, 0
      %v1962 = vsel %vm1946, 1, 0
      %v1963 = vsel %vm1947, 1, 0
      %v1964 = vcvt.s32.f32 %v1948
      %v1965 = vcvt.s32.f32 %v1949
      %v1966 = vcvt.s32.f32 %v1950
      %v1967 = vcvt.s32.f32 %v1951
      %v1968 = vcvt.s32.f32 %v1952
      %v1969 = vcvt.s32.f32 %v1953
      %v1970 = vcvt.s32.f32 %v1954
      %v1971 = vcvt.s32.f32 %v1955
      %v1972 = vcvt.s32.f32 %v1956
      %v1973 = vcvt.s32.f32 %v1957
      %v1974 = vcvt.s32.f32 %v1958
      %v1975 = vcvt.s32.f32 %v1959
      %v1976 = vcvt.s32.f32 %v1960
      %v1977 = vcvt.s32.f32 %v1961
      %v1978 = vcvt.s32.f32 %v1962
      %v1979 = vcvt.s32.f32 %v1963
      %vm1980 = vcmp.le.f32.partialorder %v238, %v1901
      %vm1981 = vcmp.le.f32.partialorder %v239, %v1903
      %vm1982 = vcmp.le.f32.partialorder %v240, %v1905
      %vm1983 = vcmp.le.f32.partialorder %v241, %v1907
      %vm1984 = vcmp.le.f32.partialorder %v242, %v1909
      %vm1985 = vcmp.le.f32.partialorder %v243, %v1911
      %vm1986 = vcmp.le.f32.partialorder %v244, %v1913
      %vm1987 = vcmp.le.f32.partialorder %v245, %v1915
      %vm1988 = vcmp.le.f32.partialorder %v246, %v1917
      %vm1989 = vcmp.le.f32.partialorder %v247, %v1919
      %vm1990 = vcmp.le.f32.partialorder %v248, %v1921
      %vm1991 = vcmp.le.f32.partialorder %v249, %v1923
      %vm1992 = vcmp.le.f32.partialorder %v250, %v1925
      %vm1993 = vcmp.le.f32.partialorder %v251, %v1927
      %vm1994 = vcmp.le.f32.partialorder %v252, %v1929
      %vm1995 = vcmp.le.f32.partialorder %v253, %v1931
      %v1996 = vsel %vm1980, 1, 0
      %v1997 = vsel %vm1981, 1, 0
      %v1998 = vsel %vm1982, 1, 0
      %v1999 = vsel %vm1983, 1, 0
      %v2000 = vsel %vm1984, 1, 0
      %v2001 = vsel %vm1985, 1, 0
      %v2002 = vsel %vm1986, 1, 0
      %v2003 = vsel %vm1987, 1, 0
      %v2004 = vsel %vm1988, 1, 0
      %v2005 = vsel %vm1989, 1, 0
      %v2006 = vsel %vm1990, 1, 0
      %v2007 = vsel %vm1991, 1, 0
      %v2008 = vsel %vm1992, 1, 0
      %v2009 = vsel %vm1993, 1, 0
      %v2010 = vsel %vm1994, 1, 0
      %v2011 = vsel %vm1995, 1, 0
      %v2012 = vcvt.s32.f32 %v1996
      %v2013 = vcvt.s32.f32 %v1997
      %v2014 = vcvt.s32.f32 %v1998
      %v2015 = vcvt.s32.f32 %v1999
      %v2016 = vcvt.s32.f32 %v2000
      %v2017 = vcvt.s32.f32 %v2001
      %v2018 = vcvt.s32.f32 %v2002
      %v2019 = vcvt.s32.f32 %v2003
      %v2020 = vcvt.s32.f32 %v2004
      %v2021 = vcvt.s32.f32 %v2005
      %v2022 = vcvt.s32.f32 %v2006
      %v2023 = vcvt.s32.f32 %v2007
      %v2024 = vcvt.s32.f32 %v2008
      %v2025 = vcvt.s32.f32 %v2009
      %v2026 = vcvt.s32.f32 %v2010
      %v2027 = vcvt.s32.f32 %v2011
      %2029 = vset.pattern.permute.xlu0 0
      %2030 = vperm.xlu0 %2029, %v2012
      %v2031 = vpop.permute.xlu0 %2030
      %2034 = vset.pattern.permute.xlu0 0
      %2035 = vperm.xlu0 %2034, %v2013
      %v2036 = vpop.permute.xlu0 %2035
      %2039 = vset.pattern.permute.xlu0 0
      %2040 = vperm.xlu0 %2039, %v2014
      %v2041 = vpop.permute.xlu0 %2040
      %2044 = vset.pattern.permute.xlu0 0
      %2045 = vperm.xlu0 %2044, %v2015
      %v2046 = vpop.permute.xlu0 %2045
      %2049 = vset.pattern.permute.xlu0 0
      %2050 = vperm.xlu0 %2049, %v2016
      %v2051 = vpop.permute.xlu0 %2050
      %2054 = vset.pattern.permute.xlu0 0
      %2055 = vperm.xlu0 %2054, %v2017
      %v2056 = vpop.permute.xlu0 %2055
      %2059 = vset.pattern.permute.xlu0 0
      %2060 = vperm.xlu0 %2059, %v2018
      %v2061 = vpop.permute.xlu0 %2060
      %2064 = vset.pattern.permute.xlu0 0
      %2065 = vperm.xlu0 %2064, %v2019
      %v2066 = vpop.permute.xlu0 %2065
      %2069 = vset.pattern.permute.xlu0 0
      %2070 = vperm.xlu0 %2069, %v2020
      %v2071 = vpop.permute.xlu0 %2070
      %2074 = vset.pattern.permute.xlu0 0
      %2075 = vperm.xlu0 %2074, %v2021
      %v2076 = vpop.permute.xlu0 %2075
      %2079 = vset.pattern.permute.xlu0 0
      %2080 = vperm.xlu0 %2079, %v2022
      %v2081 = vpop.permute.xlu0 %2080
      %2084 = vset.pattern.permute.xlu0 0
      %2085 = vperm.xlu0 %2084, %v2023
      %v2086 = vpop.permute.xlu0 %2085
      %2089 = vset.pattern.permute.xlu0 0
      %2090 = vperm.xlu0 %2089, %v2024
      %v2091 = vpop.permute.xlu0 %2090
      %2094 = vset.pattern.permute.xlu0 0
      %2095 = vperm.xlu0 %2094, %v2025
      %v2096 = vpop.permute.xlu0 %2095
      %2099 = vset.pattern.permute.xlu0 0
      %2100 = vperm.xlu0 %2099, %v2026
      %v2101 = vpop.permute.xlu0 %2100
      %2104 = vset.pattern.permute.xlu0 0
      %2105 = vperm.xlu0 %2104, %v2027
      %v2106 = vpop.permute.xlu0 %2105
      %v2108 = vmul.f32 %v1964, %v2031
      %v2109 = vmul.f32 %v1965, %v2036
      %v2110 = vmul.f32 %v1966, %v2041
      %v2111 = vmul.f32 %v1967, %v2046
      %v2112 = vmul.f32 %v1968, %v2051
      %v2113 = vmul.f32 %v1969, %v2056
      %v2114 = vmul.f32 %v1970, %v2061
      %v2115 = vmul.f32 %v1971, %v2066
      %v2116 = vmul.f32 %v1972, %v2071
      %v2117 = vmul.f32 %v1973, %v2076
      %v2118 = vmul.f32 %v1974, %v2081
      %v2119 = vmul.f32 %v1975, %v2086
      %v2120 = vmul.f32 %v1976, %v2091
      %v2121 = vmul.f32 %v1977, %v2096
      %v2122 = vmul.f32 %v1978, %v2101
      %v2123 = vmul.f32 %v1979, %v2106
      %v2124 = vadd.f32 %v2108, %v2109
      %v2125 = vadd.f32 %v2124, %v2110
      %v2126 = vadd.f32 %v2125, %v2111
      %v2127 = vadd.f32 %v2126, %v2112
      %v2128 = vadd.f32 %v2127, %v2113
      %v2129 = vadd.f32 %v2128, %v2114
      %v2130 = vadd.f32 %v2129, %v2115
      %v2131 = vadd.f32 %v2130, %v2116
      %v2132 = vadd.f32 %v2131, %v2117
      %v2133 = vadd.f32 %v2132, %v2118
      %v2134 = vadd.f32 %v2133, %v2119
      %v2135 = vadd.f32 %v2134, %v2120
      %v2136 = vadd.f32 %v2135, %v2121
      %v2137 = vadd.f32 %v2136, %v2122
      %v2138 = vadd.f32 %v2137, %v2123
      %v2139 = vrot.slane %v2138, 4
      %v2140 = vadd.f32 %v2138, %v2139
      %v2141 = vrot.slane %v2140, 2
      %v2142 = vadd.f32 %v2140, %v2141
      %v2143 = vrot.slane %v2142, 1
      %v2144 = vadd.f32 %v2142, %v2143
      %v2145 = vsel %vm868, %v2012, 0.0
      %v2146 = vsel %vm868, %v2013, 0.0
      %v2147 = vadd.f32 %v2145, %v2146
      %v2148 = vsel %vm868, %v2014, 0.0
      %v2149 = vadd.f32 %v2147, %v2148
      %v2150 = vsel %vm868, %v2015, 0.0
      %v2151 = vadd.f32 %v2149, %v2150
      %v2152 = vsel %vm868, %v2016, 0.0
      %v2153 = vadd.f32 %v2151, %v2152
      %v2154 = vsel %vm868, %v2017, 0.0
      %v2155 = vadd.f32 %v2153, %v2154
      %v2156 = vsel %vm868, %v2018, 0.0
      %v2157 = vadd.f32 %v2155, %v2156
      %v2158 = vsel %vm868, %v2019, 0.0
      %v2159 = vadd.f32 %v2157, %v2158
      %v2160 = vsel %vm868, %v2020, 0.0
      %v2161 = vadd.f32 %v2159, %v2160
      %v2162 = vsel %vm868, %v2021, 0.0
      %v2163 = vadd.f32 %v2161, %v2162
      %v2164 = vsel %vm868, %v2022, 0.0
      %v2165 = vadd.f32 %v2163, %v2164
      %v2166 = vsel %vm868, %v2023, 0.0
      %v2167 = vadd.f32 %v2165, %v2166
      %v2168 = vsel %vm868, %v2024, 0.0
      %v2169 = vadd.f32 %v2167, %v2168
      %v2170 = vsel %vm868, %v2025, 0.0
      %v2171 = vadd.f32 %v2169, %v2170
      %v2172 = vsel %vm868, %v2026, 0.0
      %v2173 = vadd.f32 %v2171, %v2172
      %v2174 = vsel %vm868, %v2027, 0.0
      %v2175 = vadd.f32 %v2173, %v2174
      %v2176 = vrot.slane %v2175, 4
      %v2177 = vadd.f32 %v2175, %v2176
      %v2178 = vrot.slane %v2177, 2
      %v2179 = vadd.f32 %v2177, %v2178
      %v2180 = vrot.slane %v2179, 1
      %v2181 = vadd.f32 %v2179, %v2180
      %v2182 = vlaneseq
      %v2183 = vshrl.u32 %v2182, 7
      %v2184 = vsub.s32 3, %v2183
      %v2185 = vrot.slane %v220, %v2184
      %v2186 = vadd.f32 %v2185, %v221
      %v2187 = vadd.f32 %v2185, %v222
      %v2188 = vadd.f32 %v2185, %v223
      %v2189 = vadd.f32 %v2185, %v224
      %v2190 = vadd.f32 %v2185, %v225
      %v2191 = vadd.f32 %v2185, %v226
      %v2192 = vadd.f32 %v2185, %v227
      %v2193 = vadd.f32 %v2185, %v228
      %v2194 = vadd.f32 %v2185, %v229
      %v2195 = vadd.f32 %v2185, %v230
      %v2196 = vadd.f32 %v2185, %v231
      %v2197 = vadd.f32 %v2185, %v232
      %v2198 = vadd.f32 %v2185, %v233
      %v2199 = vadd.f32 %v2185, %v234
      %v2200 = vadd.f32 %v2185, %v235
      %v2201 = vadd.f32 %v2185, %v236
      %2203 = vset.pattern.permute.xlu0 0
      %2204 = vperm.xlu0 %2203, %v2186
      %v2205 = vpop.permute.xlu0 %2204
      %2208 = vset.pattern.permute.xlu0 0
      %2209 = vperm.xlu0 %2208, %v2187
      %v2210 = vpop.permute.xlu0 %2209
      %2213 = vset.pattern.permute.xlu0 0
      %2214 = vperm.xlu0 %2213, %v2188
      %v2215 = vpop.permute.xlu0 %2214
      %2218 = vset.pattern.permute.xlu0 0
      %2219 = vperm.xlu0 %2218, %v2189
      %v2220 = vpop.permute.xlu0 %2219
      %2223 = vset.pattern.permute.xlu0 0
      %2224 = vperm.xlu0 %2223, %v2190
      %v2225 = vpop.permute.xlu0 %2224
      %2228 = vset.pattern.permute.xlu0 0
      %2229 = vperm.xlu0 %2228, %v2191
      %v2230 = vpop.permute.xlu0 %2229
      %2233 = vset.pattern.permute.xlu0 0
      %2234 = vperm.xlu0 %2233, %v2192
      %v2235 = vpop.permute.xlu0 %2234
      %2238 = vset.pattern.permute.xlu0 0
      %2239 = vperm.xlu0 %2238, %v2193
      %v2240 = vpop.permute.xlu0 %2239
      %2243 = vset.pattern.permute.xlu0 0
      %2244 = vperm.xlu0 %2243, %v2194
      %v2245 = vpop.permute.xlu0 %2244
      %2248 = vset.pattern.permute.xlu0 0
      %2249 = vperm.xlu0 %2248, %v2195
      %v2250 = vpop.permute.xlu0 %2249
      %2253 = vset.pattern.permute.xlu0 0
      %2254 = vperm.xlu0 %2253, %v2196
      %v2255 = vpop.permute.xlu0 %2254
      %2258 = vset.pattern.permute.xlu0 0
      %2259 = vperm.xlu0 %2258, %v2197
      %v2260 = vpop.permute.xlu0 %2259
      %2263 = vset.pattern.permute.xlu0 0
      %2264 = vperm.xlu0 %2263, %v2198
      %v2265 = vpop.permute.xlu0 %2264
      %2268 = vset.pattern.permute.xlu0 0
      %2269 = vperm.xlu0 %2268, %v2199
      %v2270 = vpop.permute.xlu0 %2269
      %2273 = vset.pattern.permute.xlu0 0
      %2274 = vperm.xlu0 %2273, %v2200
      %v2275 = vpop.permute.xlu0 %2274
      %2278 = vset.pattern.permute.xlu0 0
      %2279 = vperm.xlu0 %2278, %v2201
      %v2280 = vpop.permute.xlu0 %2279
      %v2282 = vsub.f32 %v2205, %v358
      %v2283 = vsub.f32 %v2210, %v358
      %v2284 = vsub.f32 %v2215, %v358
      %v2285 = vsub.f32 %v2220, %v358
      %v2286 = vsub.f32 %v2225, %v358
      %v2287 = vsub.f32 %v2230, %v358
      %v2288 = vsub.f32 %v2235, %v358
      %v2289 = vsub.f32 %v2240, %v358
      %v2290 = vsub.f32 %v2245, %v358
      %v2291 = vsub.f32 %v2250, %v358
      %v2292 = vsub.f32 %v2255, %v358
      %v2293 = vsub.f32 %v2260, %v358
      %v2294 = vsub.f32 %v2265, %v358
      %v2295 = vsub.f32 %v2270, %v358
      %v2296 = vsub.f32 %v2275, %v358
      %v2297 = vsub.f32 %v2280, %v358
      %v2298 = vmul.f32 %v2282, %v2282
      %v2299 = vmul.f32 %v2283, %v2283
      %v2300 = vmul.f32 %v2284, %v2284
      %v2301 = vmul.f32 %v2285, %v2285
      %v2302 = vmul.f32 %v2286, %v2286
      %v2303 = vmul.f32 %v2287, %v2287
      %v2304 = vmul.f32 %v2288, %v2288
      %v2305 = vmul.f32 %v2289, %v2289
      %v2306 = vmul.f32 %v2290, %v2290
      %v2307 = vmul.f32 %v2291, %v2291
      %v2308 = vmul.f32 %v2292, %v2292
      %v2309 = vmul.f32 %v2293, %v2293
      %v2310 = vmul.f32 %v2294, %v2294
      %v2311 = vmul.f32 %v2295, %v2295
      %v2312 = vmul.f32 %v2296, %v2296
      %v2313 = vmul.f32 %v2297, %v2297
      %2314 = vset.pattern.permute.xlu0 1
      %2315 = vperm.xlu0 %2314, %v2186
      %v2316 = vpop.permute.xlu0 %2315
      %2318 = vset.pattern.permute.xlu0 1
      %2319 = vperm.xlu0 %2318, %v2187
      %v2320 = vpop.permute.xlu0 %2319
      %2322 = vset.pattern.permute.xlu0 1
      %2323 = vperm.xlu0 %2322, %v2188
      %v2324 = vpop.permute.xlu0 %2323
      %2326 = vset.pattern.permute.xlu0 1
      %2327 = vperm.xlu0 %2326, %v2189
      %v2328 = vpop.permute.xlu0 %2327
      %2330 = vset.pattern.permute.xlu0 1
      %2331 = vperm.xlu0 %2330, %v2190
      %v2332 = vpop.permute.xlu0 %2331
      %2334 = vset.pattern.permute.xlu0 1
      %2335 = vperm.xlu0 %2334, %v2191
      %v2336 = vpop.permute.xlu0 %2335
      %2338 = vset.pattern.permute.xlu0 1
      %2339 = vperm.xlu0 %2338, %v2192
      %v2340 = vpop.permute.xlu0 %2339
      %2342 = vset.pattern.permute.xlu0 1
      %2343 = vperm.xlu0 %2342, %v2193
      %v2344 = vpop.permute.xlu0 %2343
      %2346 = vset.pattern.permute.xlu0 1
      %2347 = vperm.xlu0 %2346, %v2194
      %v2348 = vpop.permute.xlu0 %2347
      %2350 = vset.pattern.permute.xlu0 1
      %2351 = vperm.xlu0 %2350, %v2195
      %v2352 = vpop.permute.xlu0 %2351
      %2354 = vset.pattern.permute.xlu0 1
      %2355 = vperm.xlu0 %2354, %v2196
      %v2356 = vpop.permute.xlu0 %2355
      %2358 = vset.pattern.permute.xlu0 1
      %2359 = vperm.xlu0 %2358, %v2197
      %v2360 = vpop.permute.xlu0 %2359
      %2362 = vset.pattern.permute.xlu0 1
      %2363 = vperm.xlu0 %2362, %v2198
      %v2364 = vpop.permute.xlu0 %2363
      %2366 = vset.pattern.permute.xlu0 1
      %2367 = vperm.xlu0 %2366, %v2199
      %v2368 = vpop.permute.xlu0 %2367
      %2370 = vset.pattern.permute.xlu0 1
      %2371 = vperm.xlu0 %2370, %v2200
      %v2372 = vpop.permute.xlu0 %2371
      %2374 = vset.pattern.permute.xlu0 1
      %2375 = vperm.xlu0 %2374, %v2201
      %v2376 = vpop.permute.xlu0 %2375
      %v2378 = vsub.f32 %v2316, %v458
      %v2379 = vsub.f32 %v2320, %v458
      %v2380 = vsub.f32 %v2324, %v458
      %v2381 = vsub.f32 %v2328, %v458
      %v2382 = vsub.f32 %v2332, %v458
      %v2383 = vsub.f32 %v2336, %v458
      %v2384 = vsub.f32 %v2340, %v458
      %v2385 = vsub.f32 %v2344, %v458
      %v2386 = vsub.f32 %v2348, %v458
      %v2387 = vsub.f32 %v2352, %v458
      %v2388 = vsub.f32 %v2356, %v458
      %v2389 = vsub.f32 %v2360, %v458
      %v2390 = vsub.f32 %v2364, %v458
      %v2391 = vsub.f32 %v2368, %v458
      %v2392 = vsub.f32 %v2372, %v458
      %v2393 = vsub.f32 %v2376, %v458
      %v2394 = vmul.f32 %v2378, %v2378
      %v2395 = vmul.f32 %v2379, %v2379
      %v2396 = vmul.f32 %v2380, %v2380
      %v2397 = vmul.f32 %v2381, %v2381
      %v2398 = vmul.f32 %v2382, %v2382
      %v2399 = vmul.f32 %v2383, %v2383
      %v2400 = vmul.f32 %v2384, %v2384
      %v2401 = vmul.f32 %v2385, %v2385
      %v2402 = vmul.f32 %v2386, %v2386
      %v2403 = vmul.f32 %v2387, %v2387
      %v2404 = vmul.f32 %v2388, %v2388
      %v2405 = vmul.f32 %v2389, %v2389
      %v2406 = vmul.f32 %v2390, %v2390
      %v2407 = vmul.f32 %v2391, %v2391
      %v2408 = vmul.f32 %v2392, %v2392
      %v2409 = vmul.f32 %v2393, %v2393
      %v2410 = vadd.f32 %v2298, %v2394
      %v2411 = vadd.f32 %v2299, %v2395
      %v2412 = vadd.f32 %v2300, %v2396
      %v2413 = vadd.f32 %v2301, %v2397
      %v2414 = vadd.f32 %v2302, %v2398
      %v2415 = vadd.f32 %v2303, %v2399
      %v2416 = vadd.f32 %v2304, %v2400
      %v2417 = vadd.f32 %v2305, %v2401
      %v2418 = vadd.f32 %v2306, %v2402
      %v2419 = vadd.f32 %v2307, %v2403
      %v2420 = vadd.f32 %v2308, %v2404
      %v2421 = vadd.f32 %v2309, %v2405
      %v2422 = vadd.f32 %v2310, %v2406
      %v2423 = vadd.f32 %v2311, %v2407
      %v2424 = vadd.f32 %v2312, %v2408
      %v2425 = vadd.f32 %v2313, %v2409
      %2426 = vset.pattern.permute.xlu0 2
      %2427 = vperm.xlu0 %2426, %v2186
      %v2428 = vpop.permute.xlu0 %2427
      %2430 = vset.pattern.permute.xlu0 2
      %2431 = vperm.xlu0 %2430, %v2187
      %v2432 = vpop.permute.xlu0 %2431
      %2434 = vset.pattern.permute.xlu0 2
      %2435 = vperm.xlu0 %2434, %v2188
      %v2436 = vpop.permute.xlu0 %2435
      %2438 = vset.pattern.permute.xlu0 2
      %2439 = vperm.xlu0 %2438, %v2189
      %v2440 = vpop.permute.xlu0 %2439
      %2442 = vset.pattern.permute.xlu0 2
      %2443 = vperm.xlu0 %2442, %v2190
      %v2444 = vpop.permute.xlu0 %2443
      %2446 = vset.pattern.permute.xlu0 2
      %2447 = vperm.xlu0 %2446, %v2191
      %v2448 = vpop.permute.xlu0 %2447
      %2450 = vset.pattern.permute.xlu0 2
      %2451 = vperm.xlu0 %2450, %v2192
      %v2452 = vpop.permute.xlu0 %2451
      %2454 = vset.pattern.permute.xlu0 2
      %2455 = vperm.xlu0 %2454, %v2193
      %v2456 = vpop.permute.xlu0 %2455
      %2458 = vset.pattern.permute.xlu0 2
      %2459 = vperm.xlu0 %2458, %v2194
      %v2460 = vpop.permute.xlu0 %2459
      %2462 = vset.pattern.permute.xlu0 2
      %2463 = vperm.xlu0 %2462, %v2195
      %v2464 = vpop.permute.xlu0 %2463
      %2466 = vset.pattern.permute.xlu0 2
      %2467 = vperm.xlu0 %2466, %v2196
      %v2468 = vpop.permute.xlu0 %2467
      %2470 = vset.pattern.permute.xlu0 2
      %2471 = vperm.xlu0 %2470, %v2197
      %v2472 = vpop.permute.xlu0 %2471
      %2474 = vset.pattern.permute.xlu0 2
      %2475 = vperm.xlu0 %2474, %v2198
      %v2476 = vpop.permute.xlu0 %2475
      %2478 = vset.pattern.permute.xlu0 2
      %2479 = vperm.xlu0 %2478, %v2199
      %v2480 = vpop.permute.xlu0 %2479
      %2482 = vset.pattern.permute.xlu0 2
      %2483 = vperm.xlu0 %2482, %v2200
      %v2484 = vpop.permute.xlu0 %2483
      %2486 = vset.pattern.permute.xlu0 2
      %2487 = vperm.xlu0 %2486, %v2201
      %v2488 = vpop.permute.xlu0 %2487
      %v2490 = vsub.f32 %v2428, %v574
      %v2491 = vsub.f32 %v2432, %v574
      %v2492 = vsub.f32 %v2436, %v574
      %v2493 = vsub.f32 %v2440, %v574
      %v2494 = vsub.f32 %v2444, %v574
      %v2495 = vsub.f32 %v2448, %v574
      %v2496 = vsub.f32 %v2452, %v574
      %v2497 = vsub.f32 %v2456, %v574
      %v2498 = vsub.f32 %v2460, %v574
      %v2499 = vsub.f32 %v2464, %v574
      %v2500 = vsub.f32 %v2468, %v574
      %v2501 = vsub.f32 %v2472, %v574
      %v2502 = vsub.f32 %v2476, %v574
      %v2503 = vsub.f32 %v2480, %v574
      %v2504 = vsub.f32 %v2484, %v574
      %v2505 = vsub.f32 %v2488, %v574
      %v2506 = vmul.f32 %v2490, %v2490
      %v2507 = vmul.f32 %v2491, %v2491
      %v2508 = vmul.f32 %v2492, %v2492
      %v2509 = vmul.f32 %v2493, %v2493
      %v2510 = vmul.f32 %v2494, %v2494
      %v2511 = vmul.f32 %v2495, %v2495
      %v2512 = vmul.f32 %v2496, %v2496
      %v2513 = vmul.f32 %v2497, %v2497
      %v2514 = vmul.f32 %v2498, %v2498
      %v2515 = vmul.f32 %v2499, %v2499
      %v2516 = vmul.f32 %v2500, %v2500
      %v2517 = vmul.f32 %v2501, %v2501
      %v2518 = vmul.f32 %v2502, %v2502
      %v2519 = vmul.f32 %v2503, %v2503
      %v2520 = vmul.f32 %v2504, %v2504
      %v2521 = vmul.f32 %v2505, %v2505
      %v2522 = vadd.f32 %v2410, %v2506
      %v2523 = vadd.f32 %v2411, %v2507
      %v2524 = vadd.f32 %v2412, %v2508
      %v2525 = vadd.f32 %v2413, %v2509
      %v2526 = vadd.f32 %v2414, %v2510
      %v2527 = vadd.f32 %v2415, %v2511
      %v2528 = vadd.f32 %v2416, %v2512
      %v2529 = vadd.f32 %v2417, %v2513
      %v2530 = vadd.f32 %v2418, %v2514
      %v2531 = vadd.f32 %v2419, %v2515
      %v2532 = vadd.f32 %v2420, %v2516
      %v2533 = vadd.f32 %v2421, %v2517
      %v2534 = vadd.f32 %v2422, %v2518
      %v2535 = vadd.f32 %v2423, %v2519
      %v2536 = vadd.f32 %v2424, %v2520
      %v2537 = vadd.f32 %v2425, %v2521
      %2538 = vmin.xlane.f32.xlu0 %v2522
      %v2539 = vpop.xlane.xlu0 %2538
      %2540 = vmin.xlane.f32.xlu0 %v2523
      %v2541 = vpop.xlane.xlu0 %2540
      %2542 = vmin.xlane.f32.xlu0 %v2524
      %v2543 = vpop.xlane.xlu0 %2542
      %2544 = vmin.xlane.f32.xlu0 %v2525
      %v2545 = vpop.xlane.xlu0 %2544
      %2546 = vmin.xlane.f32.xlu0 %v2526
      %v2547 = vpop.xlane.xlu0 %2546
      %2548 = vmin.xlane.f32.xlu0 %v2527
      %v2549 = vpop.xlane.xlu0 %2548
      %2550 = vmin.xlane.f32.xlu0 %v2528
      %v2551 = vpop.xlane.xlu0 %2550
      %2552 = vmin.xlane.f32.xlu0 %v2529
      %v2553 = vpop.xlane.xlu0 %2552
      %2554 = vmin.xlane.f32.xlu0 %v2530
      %v2555 = vpop.xlane.xlu0 %2554
      %2556 = vmin.xlane.f32.xlu0 %v2531
      %v2557 = vpop.xlane.xlu0 %2556
      %2558 = vmin.xlane.f32.xlu0 %v2532
      %v2559 = vpop.xlane.xlu0 %2558
      %2560 = vmin.xlane.f32.xlu0 %v2533
      %v2561 = vpop.xlane.xlu0 %2560
      %2562 = vmin.xlane.f32.xlu0 %v2534
      %v2563 = vpop.xlane.xlu0 %2562
      %2564 = vmin.xlane.f32.xlu0 %v2535
      %v2565 = vpop.xlane.xlu0 %2564
      %2566 = vmin.xlane.f32.xlu0 %v2536
      %v2567 = vpop.xlane.xlu0 %2566
      %2568 = vmin.xlane.f32.xlu0 %v2537
      %v2569 = vpop.xlane.xlu0 %2568
      %vm2570 = vcmp.eq.f32.partialorder %v2522, %v2539
      %vm2571 = vcmp.eq.f32.partialorder %v2523, %v2541
      %vm2572 = vcmp.eq.f32.partialorder %v2524, %v2543
      %vm2573 = vcmp.eq.f32.partialorder %v2525, %v2545
      %vm2574 = vcmp.eq.f32.partialorder %v2526, %v2547
      %vm2575 = vcmp.eq.f32.partialorder %v2527, %v2549
      %vm2576 = vcmp.eq.f32.partialorder %v2528, %v2551
      %vm2577 = vcmp.eq.f32.partialorder %v2529, %v2553
      %vm2578 = vcmp.eq.f32.partialorder %v2530, %v2555
      %vm2579 = vcmp.eq.f32.partialorder %v2531, %v2557
      %vm2580 = vcmp.eq.f32.partialorder %v2532, %v2559
      %vm2581 = vcmp.eq.f32.partialorder %v2533, %v2561
      %vm2582 = vcmp.eq.f32.partialorder %v2534, %v2563
      %vm2583 = vcmp.eq.f32.partialorder %v2535, %v2565
      %vm2584 = vcmp.eq.f32.partialorder %v2536, %v2567
      %vm2585 = vcmp.eq.f32.partialorder %v2537, %v2569
      %v2586 = vsel %vm2570, 1, 0
      %v2587 = vsel %vm2571, 1, 0
      %v2588 = vsel %vm2572, 1, 0
      %v2589 = vsel %vm2573, 1, 0
      %v2590 = vsel %vm2574, 1, 0
      %v2591 = vsel %vm2575, 1, 0
      %v2592 = vsel %vm2576, 1, 0
      %v2593 = vsel %vm2577, 1, 0
      %v2594 = vsel %vm2578, 1, 0
      %v2595 = vsel %vm2579, 1, 0
      %v2596 = vsel %vm2580, 1, 0
      %v2597 = vsel %vm2581, 1, 0
      %v2598 = vsel %vm2582, 1, 0
      %v2599 = vsel %vm2583, 1, 0
      %v2600 = vsel %vm2584, 1, 0
      %v2601 = vsel %vm2585, 1, 0
      %v2602 = vcvt.s32.f32 %v2586
      %v2603 = vcvt.s32.f32 %v2587
      %v2604 = vcvt.s32.f32 %v2588
      %v2605 = vcvt.s32.f32 %v2589
      %v2606 = vcvt.s32.f32 %v2590
      %v2607 = vcvt.s32.f32 %v2591
      %v2608 = vcvt.s32.f32 %v2592
      %v2609 = vcvt.s32.f32 %v2593
      %v2610 = vcvt.s32.f32 %v2594
      %v2611 = vcvt.s32.f32 %v2595
      %v2612 = vcvt.s32.f32 %v2596
      %v2613 = vcvt.s32.f32 %v2597
      %v2614 = vcvt.s32.f32 %v2598
      %v2615 = vcvt.s32.f32 %v2599
      %v2616 = vcvt.s32.f32 %v2600
      %v2617 = vcvt.s32.f32 %v2601
      %vm2618 = vcmp.le.f32.partialorder %v238, %v2539
      %vm2619 = vcmp.le.f32.partialorder %v239, %v2541
      %vm2620 = vcmp.le.f32.partialorder %v240, %v2543
      %vm2621 = vcmp.le.f32.partialorder %v241, %v2545
      %vm2622 = vcmp.le.f32.partialorder %v242, %v2547
      %vm2623 = vcmp.le.f32.partialorder %v243, %v2549
      %vm2624 = vcmp.le.f32.partialorder %v244, %v2551
      %vm2625 = vcmp.le.f32.partialorder %v245, %v2553
      %vm2626 = vcmp.le.f32.partialorder %v246, %v2555
      %vm2627 = vcmp.le.f32.partialorder %v247, %v2557
      %vm2628 = vcmp.le.f32.partialorder %v248, %v2559
      %vm2629 = vcmp.le.f32.partialorder %v249, %v2561
      %vm2630 = vcmp.le.f32.partialorder %v250, %v2563
      %vm2631 = vcmp.le.f32.partialorder %v251, %v2565
      %vm2632 = vcmp.le.f32.partialorder %v252, %v2567
      %vm2633 = vcmp.le.f32.partialorder %v253, %v2569
      %v2634 = vsel %vm2618, 1, 0
      %v2635 = vsel %vm2619, 1, 0
      %v2636 = vsel %vm2620, 1, 0
      %v2637 = vsel %vm2621, 1, 0
      %v2638 = vsel %vm2622, 1, 0
      %v2639 = vsel %vm2623, 1, 0
      %v2640 = vsel %vm2624, 1, 0
      %v2641 = vsel %vm2625, 1, 0
      %v2642 = vsel %vm2626, 1, 0
      %v2643 = vsel %vm2627, 1, 0
      %v2644 = vsel %vm2628, 1, 0
      %v2645 = vsel %vm2629, 1, 0
      %v2646 = vsel %vm2630, 1, 0
      %v2647 = vsel %vm2631, 1, 0
      %v2648 = vsel %vm2632, 1, 0
      %v2649 = vsel %vm2633, 1, 0
      %v2650 = vcvt.s32.f32 %v2634
      %v2651 = vcvt.s32.f32 %v2635
      %v2652 = vcvt.s32.f32 %v2636
      %v2653 = vcvt.s32.f32 %v2637
      %v2654 = vcvt.s32.f32 %v2638
      %v2655 = vcvt.s32.f32 %v2639
      %v2656 = vcvt.s32.f32 %v2640
      %v2657 = vcvt.s32.f32 %v2641
      %v2658 = vcvt.s32.f32 %v2642
      %v2659 = vcvt.s32.f32 %v2643
      %v2660 = vcvt.s32.f32 %v2644
      %v2661 = vcvt.s32.f32 %v2645
      %v2662 = vcvt.s32.f32 %v2646
      %v2663 = vcvt.s32.f32 %v2647
      %v2664 = vcvt.s32.f32 %v2648
      %v2665 = vcvt.s32.f32 %v2649
      %2667 = vset.pattern.permute.xlu0 0
      %2668 = vperm.xlu0 %2667, %v2650
      %v2669 = vpop.permute.xlu0 %2668
      %2672 = vset.pattern.permute.xlu0 0
      %2673 = vperm.xlu0 %2672, %v2651
      %v2674 = vpop.permute.xlu0 %2673
      %2677 = vset.pattern.permute.xlu0 0
      %2678 = vperm.xlu0 %2677, %v2652
      %v2679 = vpop.permute.xlu0 %2678
      %2682 = vset.pattern.permute.xlu0 0
      %2683 = vperm.xlu0 %2682, %v2653
      %v2684 = vpop.permute.xlu0 %2683
      %2687 = vset.pattern.permute.xlu0 0
      %2688 = vperm.xlu0 %2687, %v2654
      %v2689 = vpop.permute.xlu0 %2688
      %2692 = vset.pattern.permute.xlu0 0
      %2693 = vperm.xlu0 %2692, %v2655
      %v2694 = vpop.permute.xlu0 %2693
      %2697 = vset.pattern.permute.xlu0 0
      %2698 = vperm.xlu0 %2697, %v2656
      %v2699 = vpop.permute.xlu0 %2698
      %2702 = vset.pattern.permute.xlu0 0
      %2703 = vperm.xlu0 %2702, %v2657
      %v2704 = vpop.permute.xlu0 %2703
      %2707 = vset.pattern.permute.xlu0 0
      %2708 = vperm.xlu0 %2707, %v2658
      %v2709 = vpop.permute.xlu0 %2708
      %2712 = vset.pattern.permute.xlu0 0
      %2713 = vperm.xlu0 %2712, %v2659
      %v2714 = vpop.permute.xlu0 %2713
      %2717 = vset.pattern.permute.xlu0 0
      %2718 = vperm.xlu0 %2717, %v2660
      %v2719 = vpop.permute.xlu0 %2718
      %2722 = vset.pattern.permute.xlu0 0
      %2723 = vperm.xlu0 %2722, %v2661
      %v2724 = vpop.permute.xlu0 %2723
      %2727 = vset.pattern.permute.xlu0 0
      %2728 = vperm.xlu0 %2727, %v2662
      %v2729 = vpop.permute.xlu0 %2728
      %2732 = vset.pattern.permute.xlu0 0
      %2733 = vperm.xlu0 %2732, %v2663
      %v2734 = vpop.permute.xlu0 %2733
      %2737 = vset.pattern.permute.xlu0 0
      %2738 = vperm.xlu0 %2737, %v2664
      %v2739 = vpop.permute.xlu0 %2738
      %2742 = vset.pattern.permute.xlu0 0
      %2743 = vperm.xlu0 %2742, %v2665
      %v2744 = vpop.permute.xlu0 %2743
      %v2746 = vmul.f32 %v2602, %v2669
      %v2747 = vmul.f32 %v2603, %v2674
      %v2748 = vmul.f32 %v2604, %v2679
      %v2749 = vmul.f32 %v2605, %v2684
      %v2750 = vmul.f32 %v2606, %v2689
      %v2751 = vmul.f32 %v2607, %v2694
      %v2752 = vmul.f32 %v2608, %v2699
      %v2753 = vmul.f32 %v2609, %v2704
      %v2754 = vmul.f32 %v2610, %v2709
      %v2755 = vmul.f32 %v2611, %v2714
      %v2756 = vmul.f32 %v2612, %v2719
      %v2757 = vmul.f32 %v2613, %v2724
      %v2758 = vmul.f32 %v2614, %v2729
      %v2759 = vmul.f32 %v2615, %v2734
      %v2760 = vmul.f32 %v2616, %v2739
      %v2761 = vmul.f32 %v2617, %v2744
      %v2762 = vadd.f32 %v2746, %v2747
      %v2763 = vadd.f32 %v2762, %v2748
      %v2764 = vadd.f32 %v2763, %v2749
      %v2765 = vadd.f32 %v2764, %v2750
      %v2766 = vadd.f32 %v2765, %v2751
      %v2767 = vadd.f32 %v2766, %v2752
      %v2768 = vadd.f32 %v2767, %v2753
      %v2769 = vadd.f32 %v2768, %v2754
      %v2770 = vadd.f32 %v2769, %v2755
      %v2771 = vadd.f32 %v2770, %v2756
      %v2772 = vadd.f32 %v2771, %v2757
      %v2773 = vadd.f32 %v2772, %v2758
      %v2774 = vadd.f32 %v2773, %v2759
      %v2775 = vadd.f32 %v2774, %v2760
      %v2776 = vadd.f32 %v2775, %v2761
      %v2777 = vrot.slane %v2776, 4
      %v2778 = vadd.f32 %v2776, %v2777
      %v2779 = vrot.slane %v2778, 2
      %v2780 = vadd.f32 %v2778, %v2779
      %v2781 = vrot.slane %v2780, 1
      %v2782 = vadd.f32 %v2780, %v2781
      %v2783 = vsel %vm868, %v2650, 0.0
      %v2784 = vsel %vm868, %v2651, 0.0
      %v2785 = vadd.f32 %v2783, %v2784
      %v2786 = vsel %vm868, %v2652, 0.0
      %v2787 = vadd.f32 %v2785, %v2786
      %v2788 = vsel %vm868, %v2653, 0.0
      %v2789 = vadd.f32 %v2787, %v2788
      %v2790 = vsel %vm868, %v2654, 0.0
      %v2791 = vadd.f32 %v2789, %v2790
      %v2792 = vsel %vm868, %v2655, 0.0
      %v2793 = vadd.f32 %v2791, %v2792
      %v2794 = vsel %vm868, %v2656, 0.0
      %v2795 = vadd.f32 %v2793, %v2794
      %v2796 = vsel %vm868, %v2657, 0.0
      %v2797 = vadd.f32 %v2795, %v2796
      %v2798 = vsel %vm868, %v2658, 0.0
      %v2799 = vadd.f32 %v2797, %v2798
      %v2800 = vsel %vm868, %v2659, 0.0
      %v2801 = vadd.f32 %v2799, %v2800
      %v2802 = vsel %vm868, %v2660, 0.0
      %v2803 = vadd.f32 %v2801, %v2802
      %v2804 = vsel %vm868, %v2661, 0.0
      %v2805 = vadd.f32 %v2803, %v2804
      %v2806 = vsel %vm868, %v2662, 0.0
      %v2807 = vadd.f32 %v2805, %v2806
      %v2808 = vsel %vm868, %v2663, 0.0
      %v2809 = vadd.f32 %v2807, %v2808
      %v2810 = vsel %vm868, %v2664, 0.0
      %v2811 = vadd.f32 %v2809, %v2810
      %v2812 = vsel %vm868, %v2665, 0.0
      %v2813 = vadd.f32 %v2811, %v2812
      %v2814 = vrot.slane %v2813, 4
      %v2815 = vadd.f32 %v2813, %v2814
      %v2816 = vrot.slane %v2815, 2
      %v2817 = vadd.f32 %v2815, %v2816
      %v2818 = vrot.slane %v2817, 1
      %v2819 = vadd.f32 %v2817, %v2818
      %v2820 = vlaneseq
      %v2821 = vshrl.u32 %v2820, 7
      %v2822 = vsub.s32 4, %v2821
      %v2823 = vrot.slane %v220, %v2822
      %v2824 = vadd.f32 %v2823, %v221
      %v2825 = vadd.f32 %v2823, %v222
      %v2826 = vadd.f32 %v2823, %v223
      %v2827 = vadd.f32 %v2823, %v224
      %v2828 = vadd.f32 %v2823, %v225
      %v2829 = vadd.f32 %v2823, %v226
      %v2830 = vadd.f32 %v2823, %v227
      %v2831 = vadd.f32 %v2823, %v228
      %v2832 = vadd.f32 %v2823, %v229
      %v2833 = vadd.f32 %v2823, %v230
      %v2834 = vadd.f32 %v2823, %v231
      %v2835 = vadd.f32 %v2823, %v232
      %v2836 = vadd.f32 %v2823, %v233
      %v2837 = vadd.f32 %v2823, %v234
      %v2838 = vadd.f32 %v2823, %v235
      %v2839 = vadd.f32 %v2823, %v236
      %2841 = vset.pattern.permute.xlu0 0
      %2842 = vperm.xlu0 %2841, %v2824
      %v2843 = vpop.permute.xlu0 %2842
      %2846 = vset.pattern.permute.xlu0 0
      %2847 = vperm.xlu0 %2846, %v2825
      %v2848 = vpop.permute.xlu0 %2847
      %2851 = vset.pattern.permute.xlu0 0
      %2852 = vperm.xlu0 %2851, %v2826
      %v2853 = vpop.permute.xlu0 %2852
      %2856 = vset.pattern.permute.xlu0 0
      %2857 = vperm.xlu0 %2856, %v2827
      %v2858 = vpop.permute.xlu0 %2857
      %2861 = vset.pattern.permute.xlu0 0
      %2862 = vperm.xlu0 %2861, %v2828
      %v2863 = vpop.permute.xlu0 %2862
      %2866 = vset.pattern.permute.xlu0 0
      %2867 = vperm.xlu0 %2866, %v2829
      %v2868 = vpop.permute.xlu0 %2867
      %2871 = vset.pattern.permute.xlu0 0
      %2872 = vperm.xlu0 %2871, %v2830
      %v2873 = vpop.permute.xlu0 %2872
      %2876 = vset.pattern.permute.xlu0 0
      %2877 = vperm.xlu0 %2876, %v2831
      %v2878 = vpop.permute.xlu0 %2877
      %2881 = vset.pattern.permute.xlu0 0
      %2882 = vperm.xlu0 %2881, %v2832
      %v2883 = vpop.permute.xlu0 %2882
      %2886 = vset.pattern.permute.xlu0 0
      %2887 = vperm.xlu0 %2886, %v2833
      %v2888 = vpop.permute.xlu0 %2887
      %2891 = vset.pattern.permute.xlu0 0
      %2892 = vperm.xlu0 %2891, %v2834
      %v2893 = vpop.permute.xlu0 %2892
      %2896 = vset.pattern.permute.xlu0 0
      %2897 = vperm.xlu0 %2896, %v2835
      %v2898 = vpop.permute.xlu0 %2897
      %2901 = vset.pattern.permute.xlu0 0
      %2902 = vperm.xlu0 %2901, %v2836
      %v2903 = vpop.permute.xlu0 %2902
      %2906 = vset.pattern.permute.xlu0 0
      %2907 = vperm.xlu0 %2906, %v2837
      %v2908 = vpop.permute.xlu0 %2907
      %2911 = vset.pattern.permute.xlu0 0
      %2912 = vperm.xlu0 %2911, %v2838
      %v2913 = vpop.permute.xlu0 %2912
      %2916 = vset.pattern.permute.xlu0 0
      %2917 = vperm.xlu0 %2916, %v2839
      %v2918 = vpop.permute.xlu0 %2917
      %v2920 = vsub.f32 %v2843, %v358
      %v2921 = vsub.f32 %v2848, %v358
      %v2922 = vsub.f32 %v2853, %v358
      %v2923 = vsub.f32 %v2858, %v358
      %v2924 = vsub.f32 %v2863, %v358
      %v2925 = vsub.f32 %v2868, %v358
      %v2926 = vsub.f32 %v2873, %v358
      %v2927 = vsub.f32 %v2878, %v358
      %v2928 = vsub.f32 %v2883, %v358
      %v2929 = vsub.f32 %v2888, %v358
      %v2930 = vsub.f32 %v2893, %v358
      %v2931 = vsub.f32 %v2898, %v358
      %v2932 = vsub.f32 %v2903, %v358
      %v2933 = vsub.f32 %v2908, %v358
      %v2934 = vsub.f32 %v2913, %v358
      %v2935 = vsub.f32 %v2918, %v358
      %v2936 = vmul.f32 %v2920, %v2920
      %v2937 = vmul.f32 %v2921, %v2921
      %v2938 = vmul.f32 %v2922, %v2922
      %v2939 = vmul.f32 %v2923, %v2923
      %v2940 = vmul.f32 %v2924, %v2924
      %v2941 = vmul.f32 %v2925, %v2925
      %v2942 = vmul.f32 %v2926, %v2926
      %v2943 = vmul.f32 %v2927, %v2927
      %v2944 = vmul.f32 %v2928, %v2928
      %v2945 = vmul.f32 %v2929, %v2929
      %v2946 = vmul.f32 %v2930, %v2930
      %v2947 = vmul.f32 %v2931, %v2931
      %v2948 = vmul.f32 %v2932, %v2932
      %v2949 = vmul.f32 %v2933, %v2933
      %v2950 = vmul.f32 %v2934, %v2934
      %v2951 = vmul.f32 %v2935, %v2935
      %2952 = vset.pattern.permute.xlu0 1
      %2953 = vperm.xlu0 %2952, %v2824
      %v2954 = vpop.permute.xlu0 %2953
      %2956 = vset.pattern.permute.xlu0 1
      %2957 = vperm.xlu0 %2956, %v2825
      %v2958 = vpop.permute.xlu0 %2957
      %2960 = vset.pattern.permute.xlu0 1
      %2961 = vperm.xlu0 %2960, %v2826
      %v2962 = vpop.permute.xlu0 %2961
      %2964 = vset.pattern.permute.xlu0 1
      %2965 = vperm.xlu0 %2964, %v2827
      %v2966 = vpop.permute.xlu0 %2965
      %2968 = vset.pattern.permute.xlu0 1
      %2969 = vperm.xlu0 %2968, %v2828
      %v2970 = vpop.permute.xlu0 %2969
      %2972 = vset.pattern.permute.xlu0 1
      %2973 = vperm.xlu0 %2972, %v2829
      %v2974 = vpop.permute.xlu0 %2973
      %2976 = vset.pattern.permute.xlu0 1
      %2977 = vperm.xlu0 %2976, %v2830
      %v2978 = vpop.permute.xlu0 %2977
      %2980 = vset.pattern.permute.xlu0 1
      %2981 = vperm.xlu0 %2980, %v2831
      %v2982 = vpop.permute.xlu0 %2981
      %2984 = vset.pattern.permute.xlu0 1
      %2985 = vperm.xlu0 %2984, %v2832
      %v2986 = vpop.permute.xlu0 %2985
      %2988 = vset.pattern.permute.xlu0 1
      %2989 = vperm.xlu0 %2988, %v2833
      %v2990 = vpop.permute.xlu0 %2989
      %2992 = vset.pattern.permute.xlu0 1
      %2993 = vperm.xlu0 %2992, %v2834
      %v2994 = vpop.permute.xlu0 %2993
      %2996 = vset.pattern.permute.xlu0 1
      %2997 = vperm.xlu0 %2996, %v2835
      %v2998 = vpop.permute.xlu0 %2997
      %3000 = vset.pattern.permute.xlu0 1
      %3001 = vperm.xlu0 %3000, %v2836
      %v3002 = vpop.permute.xlu0 %3001
      %3004 = vset.pattern.permute.xlu0 1
      %3005 = vperm.xlu0 %3004, %v2837
      %v3006 = vpop.permute.xlu0 %3005
      %3008 = vset.pattern.permute.xlu0 1
      %3009 = vperm.xlu0 %3008, %v2838
      %v3010 = vpop.permute.xlu0 %3009
      %3012 = vset.pattern.permute.xlu0 1
      %3013 = vperm.xlu0 %3012, %v2839
      %v3014 = vpop.permute.xlu0 %3013
      %v3016 = vsub.f32 %v2954, %v458
      %v3017 = vsub.f32 %v2958, %v458
      %v3018 = vsub.f32 %v2962, %v458
      %v3019 = vsub.f32 %v2966, %v458
      %v3020 = vsub.f32 %v2970, %v458
      %v3021 = vsub.f32 %v2974, %v458
      %v3022 = vsub.f32 %v2978, %v458
      %v3023 = vsub.f32 %v2982, %v458
      %v3024 = vsub.f32 %v2986, %v458
      %v3025 = vsub.f32 %v2990, %v458
      %v3026 = vsub.f32 %v2994, %v458
      %v3027 = vsub.f32 %v2998, %v458
      %v3028 = vsub.f32 %v3002, %v458
      %v3029 = vsub.f32 %v3006, %v458
      %v3030 = vsub.f32 %v3010, %v458
      %v3031 = vsub.f32 %v3014, %v458
      %v3032 = vmul.f32 %v3016, %v3016
      %v3033 = vmul.f32 %v3017, %v3017
      %v3034 = vmul.f32 %v3018, %v3018
      %v3035 = vmul.f32 %v3019, %v3019
      %v3036 = vmul.f32 %v3020, %v3020
      %v3037 = vmul.f32 %v3021, %v3021
      %v3038 = vmul.f32 %v3022, %v3022
      %v3039 = vmul.f32 %v3023, %v3023
      %v3040 = vmul.f32 %v3024, %v3024
      %v3041 = vmul.f32 %v3025, %v3025
      %v3042 = vmul.f32 %v3026, %v3026
      %v3043 = vmul.f32 %v3027, %v3027
      %v3044 = vmul.f32 %v3028, %v3028
      %v3045 = vmul.f32 %v3029, %v3029
      %v3046 = vmul.f32 %v3030, %v3030
      %v3047 = vmul.f32 %v3031, %v3031
      %v3048 = vadd.f32 %v2936, %v3032
      %v3049 = vadd.f32 %v2937, %v3033
      %v3050 = vadd.f32 %v2938, %v3034
      %v3051 = vadd.f32 %v2939, %v3035
      %v3052 = vadd.f32 %v2940, %v3036
      %v3053 = vadd.f32 %v2941, %v3037
      %v3054 = vadd.f32 %v2942, %v3038
      %v3055 = vadd.f32 %v2943, %v3039
      %v3056 = vadd.f32 %v2944, %v3040
      %v3057 = vadd.f32 %v2945, %v3041
      %v3058 = vadd.f32 %v2946, %v3042
      %v3059 = vadd.f32 %v2947, %v3043
      %v3060 = vadd.f32 %v2948, %v3044
      %v3061 = vadd.f32 %v2949, %v3045
      %v3062 = vadd.f32 %v2950, %v3046
      %v3063 = vadd.f32 %v2951, %v3047
      %3064 = vset.pattern.permute.xlu0 2
      %3065 = vperm.xlu0 %3064, %v2824
      %v3066 = vpop.permute.xlu0 %3065
      %3068 = vset.pattern.permute.xlu0 2
      %3069 = vperm.xlu0 %3068, %v2825
      %v3070 = vpop.permute.xlu0 %3069
      %3072 = vset.pattern.permute.xlu0 2
      %3073 = vperm.xlu0 %3072, %v2826
      %v3074 = vpop.permute.xlu0 %3073
      %3076 = vset.pattern.permute.xlu0 2
      %3077 = vperm.xlu0 %3076, %v2827
      %v3078 = vpop.permute.xlu0 %3077
      %3080 = vset.pattern.permute.xlu0 2
      %3081 = vperm.xlu0 %3080, %v2828
      %v3082 = vpop.permute.xlu0 %3081
      %3084 = vset.pattern.permute.xlu0 2
      %3085 = vperm.xlu0 %3084, %v2829
      %v3086 = vpop.permute.xlu0 %3085
      %3088 = vset.pattern.permute.xlu0 2
      %3089 = vperm.xlu0 %3088, %v2830
      %v3090 = vpop.permute.xlu0 %3089
      %3092 = vset.pattern.permute.xlu0 2
      %3093 = vperm.xlu0 %3092, %v2831
      %v3094 = vpop.permute.xlu0 %3093
      %3096 = vset.pattern.permute.xlu0 2
      %3097 = vperm.xlu0 %3096, %v2832
      %v3098 = vpop.permute.xlu0 %3097
      %3100 = vset.pattern.permute.xlu0 2
      %3101 = vperm.xlu0 %3100, %v2833
      %v3102 = vpop.permute.xlu0 %3101
      %3104 = vset.pattern.permute.xlu0 2
      %3105 = vperm.xlu0 %3104, %v2834
      %v3106 = vpop.permute.xlu0 %3105
      %3108 = vset.pattern.permute.xlu0 2
      %3109 = vperm.xlu0 %3108, %v2835
      %v3110 = vpop.permute.xlu0 %3109
      %3112 = vset.pattern.permute.xlu0 2
      %3113 = vperm.xlu0 %3112, %v2836
      %v3114 = vpop.permute.xlu0 %3113
      %3116 = vset.pattern.permute.xlu0 2
      %3117 = vperm.xlu0 %3116, %v2837
      %v3118 = vpop.permute.xlu0 %3117
      %3120 = vset.pattern.permute.xlu0 2
      %3121 = vperm.xlu0 %3120, %v2838
      %v3122 = vpop.permute.xlu0 %3121
      %3124 = vset.pattern.permute.xlu0 2
      %3125 = vperm.xlu0 %3124, %v2839
      %v3126 = vpop.permute.xlu0 %3125
      %v3128 = vsub.f32 %v3066, %v574
      %v3129 = vsub.f32 %v3070, %v574
      %v3130 = vsub.f32 %v3074, %v574
      %v3131 = vsub.f32 %v3078, %v574
      %v3132 = vsub.f32 %v3082, %v574
      %v3133 = vsub.f32 %v3086, %v574
      %v3134 = vsub.f32 %v3090, %v574
      %v3135 = vsub.f32 %v3094, %v574
      %v3136 = vsub.f32 %v3098, %v574
      %v3137 = vsub.f32 %v3102, %v574
      %v3138 = vsub.f32 %v3106, %v574
      %v3139 = vsub.f32 %v3110, %v574
      %v3140 = vsub.f32 %v3114, %v574
      %v3141 = vsub.f32 %v3118, %v574
      %v3142 = vsub.f32 %v3122, %v574
      %v3143 = vsub.f32 %v3126, %v574
      %v3144 = vmul.f32 %v3128, %v3128
      %v3145 = vmul.f32 %v3129, %v3129
      %v3146 = vmul.f32 %v3130, %v3130
      %v3147 = vmul.f32 %v3131, %v3131
      %v3148 = vmul.f32 %v3132, %v3132
      %v3149 = vmul.f32 %v3133, %v3133
      %v3150 = vmul.f32 %v3134, %v3134
      %v3151 = vmul.f32 %v3135, %v3135
      %v3152 = vmul.f32 %v3136, %v3136
      %v3153 = vmul.f32 %v3137, %v3137
      %v3154 = vmul.f32 %v3138, %v3138
      %v3155 = vmul.f32 %v3139, %v3139
      %v3156 = vmul.f32 %v3140, %v3140
      %v3157 = vmul.f32 %v3141, %v3141
      %v3158 = vmul.f32 %v3142, %v3142
      %v3159 = vmul.f32 %v3143, %v3143
      %v3160 = vadd.f32 %v3048, %v3144
      %v3161 = vadd.f32 %v3049, %v3145
      %v3162 = vadd.f32 %v3050, %v3146
      %v3163 = vadd.f32 %v3051, %v3147
      %v3164 = vadd.f32 %v3052, %v3148
      %v3165 = vadd.f32 %v3053, %v3149
      %v3166 = vadd.f32 %v3054, %v3150
      %v3167 = vadd.f32 %v3055, %v3151
      %v3168 = vadd.f32 %v3056, %v3152
      %v3169 = vadd.f32 %v3057, %v3153
      %v3170 = vadd.f32 %v3058, %v3154
      %v3171 = vadd.f32 %v3059, %v3155
      %v3172 = vadd.f32 %v3060, %v3156
      %v3173 = vadd.f32 %v3061, %v3157
      %v3174 = vadd.f32 %v3062, %v3158
      %v3175 = vadd.f32 %v3063, %v3159
      %3176 = vmin.xlane.f32.xlu0 %v3160
      %v3177 = vpop.xlane.xlu0 %3176
      %3178 = vmin.xlane.f32.xlu0 %v3161
      %v3179 = vpop.xlane.xlu0 %3178
      %3180 = vmin.xlane.f32.xlu0 %v3162
      %v3181 = vpop.xlane.xlu0 %3180
      %3182 = vmin.xlane.f32.xlu0 %v3163
      %v3183 = vpop.xlane.xlu0 %3182
      %3184 = vmin.xlane.f32.xlu0 %v3164
      %v3185 = vpop.xlane.xlu0 %3184
      %3186 = vmin.xlane.f32.xlu0 %v3165
      %v3187 = vpop.xlane.xlu0 %3186
      %3188 = vmin.xlane.f32.xlu0 %v3166
      %v3189 = vpop.xlane.xlu0 %3188
      %3190 = vmin.xlane.f32.xlu0 %v3167
      %v3191 = vpop.xlane.xlu0 %3190
      %3192 = vmin.xlane.f32.xlu0 %v3168
      %v3193 = vpop.xlane.xlu0 %3192
      %3194 = vmin.xlane.f32.xlu0 %v3169
      %v3195 = vpop.xlane.xlu0 %3194
      %3196 = vmin.xlane.f32.xlu0 %v3170
      %v3197 = vpop.xlane.xlu0 %3196
      %3198 = vmin.xlane.f32.xlu0 %v3171
      %v3199 = vpop.xlane.xlu0 %3198
      %3200 = vmin.xlane.f32.xlu0 %v3172
      %v3201 = vpop.xlane.xlu0 %3200
      %3202 = vmin.xlane.f32.xlu0 %v3173
      %v3203 = vpop.xlane.xlu0 %3202
      %3204 = vmin.xlane.f32.xlu0 %v3174
      %v3205 = vpop.xlane.xlu0 %3204
      %3206 = vmin.xlane.f32.xlu0 %v3175
      %v3207 = vpop.xlane.xlu0 %3206
      %vm3208 = vcmp.eq.f32.partialorder %v3160, %v3177
      %vm3209 = vcmp.eq.f32.partialorder %v3161, %v3179
      %vm3210 = vcmp.eq.f32.partialorder %v3162, %v3181
      %vm3211 = vcmp.eq.f32.partialorder %v3163, %v3183
      %vm3212 = vcmp.eq.f32.partialorder %v3164, %v3185
      %vm3213 = vcmp.eq.f32.partialorder %v3165, %v3187
      %vm3214 = vcmp.eq.f32.partialorder %v3166, %v3189
      %vm3215 = vcmp.eq.f32.partialorder %v3167, %v3191
      %vm3216 = vcmp.eq.f32.partialorder %v3168, %v3193
      %vm3217 = vcmp.eq.f32.partialorder %v3169, %v3195
      %vm3218 = vcmp.eq.f32.partialorder %v3170, %v3197
      %vm3219 = vcmp.eq.f32.partialorder %v3171, %v3199
      %vm3220 = vcmp.eq.f32.partialorder %v3172, %v3201
      %vm3221 = vcmp.eq.f32.partialorder %v3173, %v3203
      %vm3222 = vcmp.eq.f32.partialorder %v3174, %v3205
      %vm3223 = vcmp.eq.f32.partialorder %v3175, %v3207
      %v3224 = vsel %vm3208, 1, 0
      %v3225 = vsel %vm3209, 1, 0
      %v3226 = vsel %vm3210, 1, 0
      %v3227 = vsel %vm3211, 1, 0
      %v3228 = vsel %vm3212, 1, 0
      %v3229 = vsel %vm3213, 1, 0
      %v3230 = vsel %vm3214, 1, 0
      %v3231 = vsel %vm3215, 1, 0
      %v3232 = vsel %vm3216, 1, 0
      %v3233 = vsel %vm3217, 1, 0
      %v3234 = vsel %vm3218, 1, 0
      %v3235 = vsel %vm3219, 1, 0
      %v3236 = vsel %vm3220, 1, 0
      %v3237 = vsel %vm3221, 1, 0
      %v3238 = vsel %vm3222, 1, 0
      %v3239 = vsel %vm3223, 1, 0
      %v3240 = vcvt.s32.f32 %v3224
      %v3241 = vcvt.s32.f32 %v3225
      %v3242 = vcvt.s32.f32 %v3226
      %v3243 = vcvt.s32.f32 %v3227
      %v3244 = vcvt.s32.f32 %v3228
      %v3245 = vcvt.s32.f32 %v3229
      %v3246 = vcvt.s32.f32 %v3230
      %v3247 = vcvt.s32.f32 %v3231
      %v3248 = vcvt.s32.f32 %v3232
      %v3249 = vcvt.s32.f32 %v3233
      %v3250 = vcvt.s32.f32 %v3234
      %v3251 = vcvt.s32.f32 %v3235
      %v3252 = vcvt.s32.f32 %v3236
      %v3253 = vcvt.s32.f32 %v3237
      %v3254 = vcvt.s32.f32 %v3238
      %v3255 = vcvt.s32.f32 %v3239
      %vm3256 = vcmp.le.f32.partialorder %v238, %v3177
      %vm3257 = vcmp.le.f32.partialorder %v239, %v3179
      %vm3258 = vcmp.le.f32.partialorder %v240, %v3181
      %vm3259 = vcmp.le.f32.partialorder %v241, %v3183
      %vm3260 = vcmp.le.f32.partialorder %v242, %v3185
      %vm3261 = vcmp.le.f32.partialorder %v243, %v3187
      %vm3262 = vcmp.le.f32.partialorder %v244, %v3189
      %vm3263 = vcmp.le.f32.partialorder %v245, %v3191
      %vm3264 = vcmp.le.f32.partialorder %v246, %v3193
      %vm3265 = vcmp.le.f32.partialorder %v247, %v3195
      %vm3266 = vcmp.le.f32.partialorder %v248, %v3197
      %vm3267 = vcmp.le.f32.partialorder %v249, %v3199
      %vm3268 = vcmp.le.f32.partialorder %v250, %v3201
      %vm3269 = vcmp.le.f32.partialorder %v251, %v3203
      %vm3270 = vcmp.le.f32.partialorder %v252, %v3205
      %vm3271 = vcmp.le.f32.partialorder %v253, %v3207
      %v3272 = vsel %vm3256, 1, 0
      %v3273 = vsel %vm3257, 1, 0
      %v3274 = vsel %vm3258, 1, 0
      %v3275 = vsel %vm3259, 1, 0
      %v3276 = vsel %vm3260, 1, 0
      %v3277 = vsel %vm3261, 1, 0
      %v3278 = vsel %vm3262, 1, 0
      %v3279 = vsel %vm3263, 1, 0
      %v3280 = vsel %vm3264, 1, 0
      %v3281 = vsel %vm3265, 1, 0
      %v3282 = vsel %vm3266, 1, 0
      %v3283 = vsel %vm3267, 1, 0
      %v3284 = vsel %vm3268, 1, 0
      %v3285 = vsel %vm3269, 1, 0
      %v3286 = vsel %vm3270, 1, 0
      %v3287 = vsel %vm3271, 1, 0
      %v3288 = vcvt.s32.f32 %v3272
      %v3289 = vcvt.s32.f32 %v3273
      %v3290 = vcvt.s32.f32 %v3274
      %v3291 = vcvt.s32.f32 %v3275
      %v3292 = vcvt.s32.f32 %v3276
      %v3293 = vcvt.s32.f32 %v3277
      %v3294 = vcvt.s32.f32 %v3278
      %v3295 = vcvt.s32.f32 %v3279
      %v3296 = vcvt.s32.f32 %v3280
      %v3297 = vcvt.s32.f32 %v3281
      %v3298 = vcvt.s32.f32 %v3282
      %v3299 = vcvt.s32.f32 %v3283
      %v3300 = vcvt.s32.f32 %v3284
      %v3301 = vcvt.s32.f32 %v3285
      %v3302 = vcvt.s32.f32 %v3286
      %v3303 = vcvt.s32.f32 %v3287
      %3305 = vset.pattern.permute.xlu0 0
      %3306 = vperm.xlu0 %3305, %v3288
      %v3307 = vpop.permute.xlu0 %3306
      %3310 = vset.pattern.permute.xlu0 0
      %3311 = vperm.xlu0 %3310, %v3289
      %v3312 = vpop.permute.xlu0 %3311
      %3315 = vset.pattern.permute.xlu0 0
      %3316 = vperm.xlu0 %3315, %v3290
      %v3317 = vpop.permute.xlu0 %3316
      %3320 = vset.pattern.permute.xlu0 0
      %3321 = vperm.xlu0 %3320, %v3291
      %v3322 = vpop.permute.xlu0 %3321
      %3325 = vset.pattern.permute.xlu0 0
      %3326 = vperm.xlu0 %3325, %v3292
      %v3327 = vpop.permute.xlu0 %3326
      %3330 = vset.pattern.permute.xlu0 0
      %3331 = vperm.xlu0 %3330, %v3293
      %v3332 = vpop.permute.xlu0 %3331
      %3335 = vset.pattern.permute.xlu0 0
      %3336 = vperm.xlu0 %3335, %v3294
      %v3337 = vpop.permute.xlu0 %3336
      %3340 = vset.pattern.permute.xlu0 0
      %3341 = vperm.xlu0 %3340, %v3295
      %v3342 = vpop.permute.xlu0 %3341
      %3345 = vset.pattern.permute.xlu0 0
      %3346 = vperm.xlu0 %3345, %v3296
      %v3347 = vpop.permute.xlu0 %3346
      %3350 = vset.pattern.permute.xlu0 0
      %3351 = vperm.xlu0 %3350, %v3297
      %v3352 = vpop.permute.xlu0 %3351
      %3355 = vset.pattern.permute.xlu0 0
      %3356 = vperm.xlu0 %3355, %v3298
      %v3357 = vpop.permute.xlu0 %3356
      %3360 = vset.pattern.permute.xlu0 0
      %3361 = vperm.xlu0 %3360, %v3299
      %v3362 = vpop.permute.xlu0 %3361
      %3365 = vset.pattern.permute.xlu0 0
      %3366 = vperm.xlu0 %3365, %v3300
      %v3367 = vpop.permute.xlu0 %3366
      %3370 = vset.pattern.permute.xlu0 0
      %3371 = vperm.xlu0 %3370, %v3301
      %v3372 = vpop.permute.xlu0 %3371
      %3375 = vset.pattern.permute.xlu0 0
      %3376 = vperm.xlu0 %3375, %v3302
      %v3377 = vpop.permute.xlu0 %3376
      %3380 = vset.pattern.permute.xlu0 0
      %3381 = vperm.xlu0 %3380, %v3303
      %v3382 = vpop.permute.xlu0 %3381
      %v3384 = vmul.f32 %v3240, %v3307
      %v3385 = vmul.f32 %v3241, %v3312
      %v3386 = vmul.f32 %v3242, %v3317
      %v3387 = vmul.f32 %v3243, %v3322
      %v3388 = vmul.f32 %v3244, %v3327
      %v3389 = vmul.f32 %v3245, %v3332
      %v3390 = vmul.f32 %v3246, %v3337
      %v3391 = vmul.f32 %v3247, %v3342
      %v3392 = vmul.f32 %v3248, %v3347
      %v3393 = vmul.f32 %v3249, %v3352
      %v3394 = vmul.f32 %v3250, %v3357
      %v3395 = vmul.f32 %v3251, %v3362
      %v3396 = vmul.f32 %v3252, %v3367
      %v3397 = vmul.f32 %v3253, %v3372
      %v3398 = vmul.f32 %v3254, %v3377
      %v3399 = vmul.f32 %v3255, %v3382
      %v3400 = vadd.f32 %v3384, %v3385
      %v3401 = vadd.f32 %v3400, %v3386
      %v3402 = vadd.f32 %v3401, %v3387
      %v3403 = vadd.f32 %v3402, %v3388
      %v3404 = vadd.f32 %v3403, %v3389
      %v3405 = vadd.f32 %v3404, %v3390
      %v3406 = vadd.f32 %v3405, %v3391
      %v3407 = vadd.f32 %v3406, %v3392
      %v3408 = vadd.f32 %v3407, %v3393
      %v3409 = vadd.f32 %v3408, %v3394
      %v3410 = vadd.f32 %v3409, %v3395
      %v3411 = vadd.f32 %v3410, %v3396
      %v3412 = vadd.f32 %v3411, %v3397
      %v3413 = vadd.f32 %v3412, %v3398
      %v3414 = vadd.f32 %v3413, %v3399
      %v3415 = vrot.slane %v3414, 4
      %v3416 = vadd.f32 %v3414, %v3415
      %v3417 = vrot.slane %v3416, 2
      %v3418 = vadd.f32 %v3416, %v3417
      %v3419 = vrot.slane %v3418, 1
      %v3420 = vadd.f32 %v3418, %v3419
      %v3421 = vsel %vm868, %v3288, 0.0
      %v3422 = vsel %vm868, %v3289, 0.0
      %v3423 = vadd.f32 %v3421, %v3422
      %v3424 = vsel %vm868, %v3290, 0.0
      %v3425 = vadd.f32 %v3423, %v3424
      %v3426 = vsel %vm868, %v3291, 0.0
      %v3427 = vadd.f32 %v3425, %v3426
      %v3428 = vsel %vm868, %v3292, 0.0
      %v3429 = vadd.f32 %v3427, %v3428
      %v3430 = vsel %vm868, %v3293, 0.0
      %v3431 = vadd.f32 %v3429, %v3430
      %v3432 = vsel %vm868, %v3294, 0.0
      %v3433 = vadd.f32 %v3431, %v3432
      %v3434 = vsel %vm868, %v3295, 0.0
      %v3435 = vadd.f32 %v3433, %v3434
      %v3436 = vsel %vm868, %v3296, 0.0
      %v3437 = vadd.f32 %v3435, %v3436
      %v3438 = vsel %vm868, %v3297, 0.0
      %v3439 = vadd.f32 %v3437, %v3438
      %v3440 = vsel %vm868, %v3298, 0.0
      %v3441 = vadd.f32 %v3439, %v3440
      %v3442 = vsel %vm868, %v3299, 0.0
      %v3443 = vadd.f32 %v3441, %v3442
      %v3444 = vsel %vm868, %v3300, 0.0
      %v3445 = vadd.f32 %v3443, %v3444
      %v3446 = vsel %vm868, %v3301, 0.0
      %v3447 = vadd.f32 %v3445, %v3446
      %v3448 = vsel %vm868, %v3302, 0.0
      %v3449 = vadd.f32 %v3447, %v3448
      %v3450 = vsel %vm868, %v3303, 0.0
      %v3451 = vadd.f32 %v3449, %v3450
      %v3452 = vrot.slane %v3451, 4
      %v3453 = vadd.f32 %v3451, %v3452
      %v3454 = vrot.slane %v3453, 2
      %v3455 = vadd.f32 %v3453, %v3454
      %v3456 = vrot.slane %v3455, 1
      %v3457 = vadd.f32 %v3455, %v3456
      %v3458 = vlaneseq
      %v3459 = vshrl.u32 %v3458, 7
      %v3460 = vsub.s32 5, %v3459
      %v3461 = vrot.slane %v220, %v3460
      %v3462 = vadd.f32 %v3461, %v221
      %v3463 = vadd.f32 %v3461, %v222
      %v3464 = vadd.f32 %v3461, %v223
      %v3465 = vadd.f32 %v3461, %v224
      %v3466 = vadd.f32 %v3461, %v225
      %v3467 = vadd.f32 %v3461, %v226
      %v3468 = vadd.f32 %v3461, %v227
      %v3469 = vadd.f32 %v3461, %v228
      %v3470 = vadd.f32 %v3461, %v229
      %v3471 = vadd.f32 %v3461, %v230
      %v3472 = vadd.f32 %v3461, %v231
      %v3473 = vadd.f32 %v3461, %v232
      %v3474 = vadd.f32 %v3461, %v233
      %v3475 = vadd.f32 %v3461, %v234
      %v3476 = vadd.f32 %v3461, %v235
      %v3477 = vadd.f32 %v3461, %v236
      %3479 = vset.pattern.permute.xlu0 0
      %3480 = vperm.xlu0 %3479, %v3462
      %v3481 = vpop.permute.xlu0 %3480
      %3484 = vset.pattern.permute.xlu0 0
      %3485 = vperm.xlu0 %3484, %v3463
      %v3486 = vpop.permute.xlu0 %3485
      %3489 = vset.pattern.permute.xlu0 0
      %3490 = vperm.xlu0 %3489, %v3464
      %v3491 = vpop.permute.xlu0 %3490
      %3494 = vset.pattern.permute.xlu0 0
      %3495 = vperm.xlu0 %3494, %v3465
      %v3496 = vpop.permute.xlu0 %3495
      %3499 = vset.pattern.permute.xlu0 0
      %3500 = vperm.xlu0 %3499, %v3466
      %v3501 = vpop.permute.xlu0 %3500
      %3504 = vset.pattern.permute.xlu0 0
      %3505 = vperm.xlu0 %3504, %v3467
      %v3506 = vpop.permute.xlu0 %3505
      %3509 = vset.pattern.permute.xlu0 0
      %3510 = vperm.xlu0 %3509, %v3468
      %v3511 = vpop.permute.xlu0 %3510
      %3514 = vset.pattern.permute.xlu0 0
      %3515 = vperm.xlu0 %3514, %v3469
      %v3516 = vpop.permute.xlu0 %3515
      %3519 = vset.pattern.permute.xlu0 0
      %3520 = vperm.xlu0 %3519, %v3470
      %v3521 = vpop.permute.xlu0 %3520
      %3524 = vset.pattern.permute.xlu0 0
      %3525 = vperm.xlu0 %3524, %v3471
      %v3526 = vpop.permute.xlu0 %3525
      %3529 = vset.pattern.permute.xlu0 0
      %3530 = vperm.xlu0 %3529, %v3472
      %v3531 = vpop.permute.xlu0 %3530
      %3534 = vset.pattern.permute.xlu0 0
      %3535 = vperm.xlu0 %3534, %v3473
      %v3536 = vpop.permute.xlu0 %3535
      %3539 = vset.pattern.permute.xlu0 0
      %3540 = vperm.xlu0 %3539, %v3474
      %v3541 = vpop.permute.xlu0 %3540
      %3544 = vset.pattern.permute.xlu0 0
      %3545 = vperm.xlu0 %3544, %v3475
      %v3546 = vpop.permute.xlu0 %3545
      %3549 = vset.pattern.permute.xlu0 0
      %3550 = vperm.xlu0 %3549, %v3476
      %v3551 = vpop.permute.xlu0 %3550
      %3554 = vset.pattern.permute.xlu0 0
      %3555 = vperm.xlu0 %3554, %v3477
      %v3556 = vpop.permute.xlu0 %3555
      %v3558 = vsub.f32 %v3481, %v358
      %v3559 = vsub.f32 %v3486, %v358
      %v3560 = vsub.f32 %v3491, %v358
      %v3561 = vsub.f32 %v3496, %v358
      %v3562 = vsub.f32 %v3501, %v358
      %v3563 = vsub.f32 %v3506, %v358
      %v3564 = vsub.f32 %v3511, %v358
      %v3565 = vsub.f32 %v3516, %v358
      %v3566 = vsub.f32 %v3521, %v358
      %v3567 = vsub.f32 %v3526, %v358
      %v3568 = vsub.f32 %v3531, %v358
      %v3569 = vsub.f32 %v3536, %v358
      %v3570 = vsub.f32 %v3541, %v358
      %v3571 = vsub.f32 %v3546, %v358
      %v3572 = vsub.f32 %v3551, %v358
      %v3573 = vsub.f32 %v3556, %v358
      %v3574 = vmul.f32 %v3558, %v3558
      %v3575 = vmul.f32 %v3559, %v3559
      %v3576 = vmul.f32 %v3560, %v3560
      %v3577 = vmul.f32 %v3561, %v3561
      %v3578 = vmul.f32 %v3562, %v3562
      %v3579 = vmul.f32 %v3563, %v3563
      %v3580 = vmul.f32 %v3564, %v3564
      %v3581 = vmul.f32 %v3565, %v3565
      %v3582 = vmul.f32 %v3566, %v3566
      %v3583 = vmul.f32 %v3567, %v3567
      %v3584 = vmul.f32 %v3568, %v3568
      %v3585 = vmul.f32 %v3569, %v3569
      %v3586 = vmul.f32 %v3570, %v3570
      %v3587 = vmul.f32 %v3571, %v3571
      %v3588 = vmul.f32 %v3572, %v3572
      %v3589 = vmul.f32 %v3573, %v3573
      %3590 = vset.pattern.permute.xlu0 1
      %3591 = vperm.xlu0 %3590, %v3462
      %v3592 = vpop.permute.xlu0 %3591
      %3594 = vset.pattern.permute.xlu0 1
      %3595 = vperm.xlu0 %3594, %v3463
      %v3596 = vpop.permute.xlu0 %3595
      %3598 = vset.pattern.permute.xlu0 1
      %3599 = vperm.xlu0 %3598, %v3464
      %v3600 = vpop.permute.xlu0 %3599
      %3602 = vset.pattern.permute.xlu0 1
      %3603 = vperm.xlu0 %3602, %v3465
      %v3604 = vpop.permute.xlu0 %3603
      %3606 = vset.pattern.permute.xlu0 1
      %3607 = vperm.xlu0 %3606, %v3466
      %v3608 = vpop.permute.xlu0 %3607
      %3610 = vset.pattern.permute.xlu0 1
      %3611 = vperm.xlu0 %3610, %v3467
      %v3612 = vpop.permute.xlu0 %3611
      %3614 = vset.pattern.permute.xlu0 1
      %3615 = vperm.xlu0 %3614, %v3468
      %v3616 = vpop.permute.xlu0 %3615
      %3618 = vset.pattern.permute.xlu0 1
      %3619 = vperm.xlu0 %3618, %v3469
      %v3620 = vpop.permute.xlu0 %3619
      %3622 = vset.pattern.permute.xlu0 1
      %3623 = vperm.xlu0 %3622, %v3470
      %v3624 = vpop.permute.xlu0 %3623
      %3626 = vset.pattern.permute.xlu0 1
      %3627 = vperm.xlu0 %3626, %v3471
      %v3628 = vpop.permute.xlu0 %3627
      %3630 = vset.pattern.permute.xlu0 1
      %3631 = vperm.xlu0 %3630, %v3472
      %v3632 = vpop.permute.xlu0 %3631
      %3634 = vset.pattern.permute.xlu0 1
      %3635 = vperm.xlu0 %3634, %v3473
      %v3636 = vpop.permute.xlu0 %3635
      %3638 = vset.pattern.permute.xlu0 1
      %3639 = vperm.xlu0 %3638, %v3474
      %v3640 = vpop.permute.xlu0 %3639
      %3642 = vset.pattern.permute.xlu0 1
      %3643 = vperm.xlu0 %3642, %v3475
      %v3644 = vpop.permute.xlu0 %3643
      %3646 = vset.pattern.permute.xlu0 1
      %3647 = vperm.xlu0 %3646, %v3476
      %v3648 = vpop.permute.xlu0 %3647
      %3650 = vset.pattern.permute.xlu0 1
      %3651 = vperm.xlu0 %3650, %v3477
      %v3652 = vpop.permute.xlu0 %3651
      %v3654 = vsub.f32 %v3592, %v458
      %v3655 = vsub.f32 %v3596, %v458
      %v3656 = vsub.f32 %v3600, %v458
      %v3657 = vsub.f32 %v3604, %v458
      %v3658 = vsub.f32 %v3608, %v458
      %v3659 = vsub.f32 %v3612, %v458
      %v3660 = vsub.f32 %v3616, %v458
      %v3661 = vsub.f32 %v3620, %v458
      %v3662 = vsub.f32 %v3624, %v458
      %v3663 = vsub.f32 %v3628, %v458
      %v3664 = vsub.f32 %v3632, %v458
      %v3665 = vsub.f32 %v3636, %v458
      %v3666 = vsub.f32 %v3640, %v458
      %v3667 = vsub.f32 %v3644, %v458
      %v3668 = vsub.f32 %v3648, %v458
      %v3669 = vsub.f32 %v3652, %v458
      %v3670 = vmul.f32 %v3654, %v3654
      %v3671 = vmul.f32 %v3655, %v3655
      %v3672 = vmul.f32 %v3656, %v3656
      %v3673 = vmul.f32 %v3657, %v3657
      %v3674 = vmul.f32 %v3658, %v3658
      %v3675 = vmul.f32 %v3659, %v3659
      %v3676 = vmul.f32 %v3660, %v3660
      %v3677 = vmul.f32 %v3661, %v3661
      %v3678 = vmul.f32 %v3662, %v3662
      %v3679 = vmul.f32 %v3663, %v3663
      %v3680 = vmul.f32 %v3664, %v3664
      %v3681 = vmul.f32 %v3665, %v3665
      %v3682 = vmul.f32 %v3666, %v3666
      %v3683 = vmul.f32 %v3667, %v3667
      %v3684 = vmul.f32 %v3668, %v3668
      %v3685 = vmul.f32 %v3669, %v3669
      %v3686 = vadd.f32 %v3574, %v3670
      %v3687 = vadd.f32 %v3575, %v3671
      %v3688 = vadd.f32 %v3576, %v3672
      %v3689 = vadd.f32 %v3577, %v3673
      %v3690 = vadd.f32 %v3578, %v3674
      %v3691 = vadd.f32 %v3579, %v3675
      %v3692 = vadd.f32 %v3580, %v3676
      %v3693 = vadd.f32 %v3581, %v3677
      %v3694 = vadd.f32 %v3582, %v3678
      %v3695 = vadd.f32 %v3583, %v3679
      %v3696 = vadd.f32 %v3584, %v3680
      %v3697 = vadd.f32 %v3585, %v3681
      %v3698 = vadd.f32 %v3586, %v3682
      %v3699 = vadd.f32 %v3587, %v3683
      %v3700 = vadd.f32 %v3588, %v3684
      %v3701 = vadd.f32 %v3589, %v3685
      %3702 = vset.pattern.permute.xlu0 2
      %3703 = vperm.xlu0 %3702, %v3462
      %v3704 = vpop.permute.xlu0 %3703
      %3706 = vset.pattern.permute.xlu0 2
      %3707 = vperm.xlu0 %3706, %v3463
      %v3708 = vpop.permute.xlu0 %3707
      %3710 = vset.pattern.permute.xlu0 2
      %3711 = vperm.xlu0 %3710, %v3464
      %v3712 = vpop.permute.xlu0 %3711
      %3714 = vset.pattern.permute.xlu0 2
      %3715 = vperm.xlu0 %3714, %v3465
      %v3716 = vpop.permute.xlu0 %3715
      %3718 = vset.pattern.permute.xlu0 2
      %3719 = vperm.xlu0 %3718, %v3466
      %v3720 = vpop.permute.xlu0 %3719
      %3722 = vset.pattern.permute.xlu0 2
      %3723 = vperm.xlu0 %3722, %v3467
      %v3724 = vpop.permute.xlu0 %3723
      %3726 = vset.pattern.permute.xlu0 2
      %3727 = vperm.xlu0 %3726, %v3468
      %v3728 = vpop.permute.xlu0 %3727
      %3730 = vset.pattern.permute.xlu0 2
      %3731 = vperm.xlu0 %3730, %v3469
      %v3732 = vpop.permute.xlu0 %3731
      %3734 = vset.pattern.permute.xlu0 2
      %3735 = vperm.xlu0 %3734, %v3470
      %v3736 = vpop.permute.xlu0 %3735
      %3738 = vset.pattern.permute.xlu0 2
      %3739 = vperm.xlu0 %3738, %v3471
      %v3740 = vpop.permute.xlu0 %3739
      %3742 = vset.pattern.permute.xlu0 2
      %3743 = vperm.xlu0 %3742, %v3472
      %v3744 = vpop.permute.xlu0 %3743
      %3746 = vset.pattern.permute.xlu0 2
      %3747 = vperm.xlu0 %3746, %v3473
      %v3748 = vpop.permute.xlu0 %3747
      %3750 = vset.pattern.permute.xlu0 2
      %3751 = vperm.xlu0 %3750, %v3474
      %v3752 = vpop.permute.xlu0 %3751
      %3754 = vset.pattern.permute.xlu0 2
      %3755 = vperm.xlu0 %3754, %v3475
      %v3756 = vpop.permute.xlu0 %3755
      %3758 = vset.pattern.permute.xlu0 2
      %3759 = vperm.xlu0 %3758, %v3476
      %v3760 = vpop.permute.xlu0 %3759
      %3762 = vset.pattern.permute.xlu0 2
      %3763 = vperm.xlu0 %3762, %v3477
      %v3764 = vpop.permute.xlu0 %3763
      %v3766 = vsub.f32 %v3704, %v574
      %v3767 = vsub.f32 %v3708, %v574
      %v3768 = vsub.f32 %v3712, %v574
      %v3769 = vsub.f32 %v3716, %v574
      %v3770 = vsub.f32 %v3720, %v574
      %v3771 = vsub.f32 %v3724, %v574
      %v3772 = vsub.f32 %v3728, %v574
      %v3773 = vsub.f32 %v3732, %v574
      %v3774 = vsub.f32 %v3736, %v574
      %v3775 = vsub.f32 %v3740, %v574
      %v3776 = vsub.f32 %v3744, %v574
      %v3777 = vsub.f32 %v3748, %v574
      %v3778 = vsub.f32 %v3752, %v574
      %v3779 = vsub.f32 %v3756, %v574
      %v3780 = vsub.f32 %v3760, %v574
      %v3781 = vsub.f32 %v3764, %v574
      %v3782 = vmul.f32 %v3766, %v3766
      %v3783 = vmul.f32 %v3767, %v3767
      %v3784 = vmul.f32 %v3768, %v3768
      %v3785 = vmul.f32 %v3769, %v3769
      %v3786 = vmul.f32 %v3770, %v3770
      %v3787 = vmul.f32 %v3771, %v3771
      %v3788 = vmul.f32 %v3772, %v3772
      %v3789 = vmul.f32 %v3773, %v3773
      %v3790 = vmul.f32 %v3774, %v3774
      %v3791 = vmul.f32 %v3775, %v3775
      %v3792 = vmul.f32 %v3776, %v3776
      %v3793 = vmul.f32 %v3777, %v3777
      %v3794 = vmul.f32 %v3778, %v3778
      %v3795 = vmul.f32 %v3779, %v3779
      %v3796 = vmul.f32 %v3780, %v3780
      %v3797 = vmul.f32 %v3781, %v3781
      %v3798 = vadd.f32 %v3686, %v3782
      %v3799 = vadd.f32 %v3687, %v3783
      %v3800 = vadd.f32 %v3688, %v3784
      %v3801 = vadd.f32 %v3689, %v3785
      %v3802 = vadd.f32 %v3690, %v3786
      %v3803 = vadd.f32 %v3691, %v3787
      %v3804 = vadd.f32 %v3692, %v3788
      %v3805 = vadd.f32 %v3693, %v3789
      %v3806 = vadd.f32 %v3694, %v3790
      %v3807 = vadd.f32 %v3695, %v3791
      %v3808 = vadd.f32 %v3696, %v3792
      %v3809 = vadd.f32 %v3697, %v3793
      %v3810 = vadd.f32 %v3698, %v3794
      %v3811 = vadd.f32 %v3699, %v3795
      %v3812 = vadd.f32 %v3700, %v3796
      %v3813 = vadd.f32 %v3701, %v3797
      %3814 = vmin.xlane.f32.xlu0 %v3798
      %v3815 = vpop.xlane.xlu0 %3814
      %3816 = vmin.xlane.f32.xlu0 %v3799
      %v3817 = vpop.xlane.xlu0 %3816
      %3818 = vmin.xlane.f32.xlu0 %v3800
      %v3819 = vpop.xlane.xlu0 %3818
      %3820 = vmin.xlane.f32.xlu0 %v3801
      %v3821 = vpop.xlane.xlu0 %3820
      %3822 = vmin.xlane.f32.xlu0 %v3802
      %v3823 = vpop.xlane.xlu0 %3822
      %3824 = vmin.xlane.f32.xlu0 %v3803
      %v3825 = vpop.xlane.xlu0 %3824
      %3826 = vmin.xlane.f32.xlu0 %v3804
      %v3827 = vpop.xlane.xlu0 %3826
      %3828 = vmin.xlane.f32.xlu0 %v3805
      %v3829 = vpop.xlane.xlu0 %3828
      %3830 = vmin.xlane.f32.xlu0 %v3806
      %v3831 = vpop.xlane.xlu0 %3830
      %3832 = vmin.xlane.f32.xlu0 %v3807
      %v3833 = vpop.xlane.xlu0 %3832
      %3834 = vmin.xlane.f32.xlu0 %v3808
      %v3835 = vpop.xlane.xlu0 %3834
      %3836 = vmin.xlane.f32.xlu0 %v3809
      %v3837 = vpop.xlane.xlu0 %3836
      %3838 = vmin.xlane.f32.xlu0 %v3810
      %v3839 = vpop.xlane.xlu0 %3838
      %3840 = vmin.xlane.f32.xlu0 %v3811
      %v3841 = vpop.xlane.xlu0 %3840
      %3842 = vmin.xlane.f32.xlu0 %v3812
      %v3843 = vpop.xlane.xlu0 %3842
      %3844 = vmin.xlane.f32.xlu0 %v3813
      %v3845 = vpop.xlane.xlu0 %3844
      %vm3846 = vcmp.eq.f32.partialorder %v3798, %v3815
      %vm3847 = vcmp.eq.f32.partialorder %v3799, %v3817
      %vm3848 = vcmp.eq.f32.partialorder %v3800, %v3819
      %vm3849 = vcmp.eq.f32.partialorder %v3801, %v3821
      %vm3850 = vcmp.eq.f32.partialorder %v3802, %v3823
      %vm3851 = vcmp.eq.f32.partialorder %v3803, %v3825
      %vm3852 = vcmp.eq.f32.partialorder %v3804, %v3827
      %vm3853 = vcmp.eq.f32.partialorder %v3805, %v3829
      %vm3854 = vcmp.eq.f32.partialorder %v3806, %v3831
      %vm3855 = vcmp.eq.f32.partialorder %v3807, %v3833
      %vm3856 = vcmp.eq.f32.partialorder %v3808, %v3835
      %vm3857 = vcmp.eq.f32.partialorder %v3809, %v3837
      %vm3858 = vcmp.eq.f32.partialorder %v3810, %v3839
      %vm3859 = vcmp.eq.f32.partialorder %v3811, %v3841
      %vm3860 = vcmp.eq.f32.partialorder %v3812, %v3843
      %vm3861 = vcmp.eq.f32.partialorder %v3813, %v3845
      %v3862 = vsel %vm3846, 1, 0
      %v3863 = vsel %vm3847, 1, 0
      %v3864 = vsel %vm3848, 1, 0
      %v3865 = vsel %vm3849, 1, 0
      %v3866 = vsel %vm3850, 1, 0
      %v3867 = vsel %vm3851, 1, 0
      %v3868 = vsel %vm3852, 1, 0
      %v3869 = vsel %vm3853, 1, 0
      %v3870 = vsel %vm3854, 1, 0
      %v3871 = vsel %vm3855, 1, 0
      %v3872 = vsel %vm3856, 1, 0
      %v3873 = vsel %vm3857, 1, 0
      %v3874 = vsel %vm3858, 1, 0
      %v3875 = vsel %vm3859, 1, 0
      %v3876 = vsel %vm3860, 1, 0
      %v3877 = vsel %vm3861, 1, 0
      %v3878 = vcvt.s32.f32 %v3862
      %v3879 = vcvt.s32.f32 %v3863
      %v3880 = vcvt.s32.f32 %v3864
      %v3881 = vcvt.s32.f32 %v3865
      %v3882 = vcvt.s32.f32 %v3866
      %v3883 = vcvt.s32.f32 %v3867
      %v3884 = vcvt.s32.f32 %v3868
      %v3885 = vcvt.s32.f32 %v3869
      %v3886 = vcvt.s32.f32 %v3870
      %v3887 = vcvt.s32.f32 %v3871
      %v3888 = vcvt.s32.f32 %v3872
      %v3889 = vcvt.s32.f32 %v3873
      %v3890 = vcvt.s32.f32 %v3874
      %v3891 = vcvt.s32.f32 %v3875
      %v3892 = vcvt.s32.f32 %v3876
      %v3893 = vcvt.s32.f32 %v3877
      %vm3894 = vcmp.le.f32.partialorder %v238, %v3815
      %vm3895 = vcmp.le.f32.partialorder %v239, %v3817
      %vm3896 = vcmp.le.f32.partialorder %v240, %v3819
      %vm3897 = vcmp.le.f32.partialorder %v241, %v3821
      %vm3898 = vcmp.le.f32.partialorder %v242, %v3823
      %vm3899 = vcmp.le.f32.partialorder %v243, %v3825
      %vm3900 = vcmp.le.f32.partialorder %v244, %v3827
      %vm3901 = vcmp.le.f32.partialorder %v245, %v3829
      %vm3902 = vcmp.le.f32.partialorder %v246, %v3831
      %vm3903 = vcmp.le.f32.partialorder %v247, %v3833
      %vm3904 = vcmp.le.f32.partialorder %v248, %v3835
      %vm3905 = vcmp.le.f32.partialorder %v249, %v3837
      %vm3906 = vcmp.le.f32.partialorder %v250, %v3839
      %vm3907 = vcmp.le.f32.partialorder %v251, %v3841
      %vm3908 = vcmp.le.f32.partialorder %v252, %v3843
      %vm3909 = vcmp.le.f32.partialorder %v253, %v3845
      %v3910 = vsel %vm3894, 1, 0
      %v3911 = vsel %vm3895, 1, 0
      %v3912 = vsel %vm3896, 1, 0
      %v3913 = vsel %vm3897, 1, 0
      %v3914 = vsel %vm3898, 1, 0
      %v3915 = vsel %vm3899, 1, 0
      %v3916 = vsel %vm3900, 1, 0
      %v3917 = vsel %vm3901, 1, 0
      %v3918 = vsel %vm3902, 1, 0
      %v3919 = vsel %vm3903, 1, 0
      %v3920 = vsel %vm3904, 1, 0
      %v3921 = vsel %vm3905, 1, 0
      %v3922 = vsel %vm3906, 1, 0
      %v3923 = vsel %vm3907, 1, 0
      %v3924 = vsel %vm3908, 1, 0
      %v3925 = vsel %vm3909, 1, 0
      %v3926 = vcvt.s32.f32 %v3910
      %v3927 = vcvt.s32.f32 %v3911
      %v3928 = vcvt.s32.f32 %v3912
      %v3929 = vcvt.s32.f32 %v3913
      %v3930 = vcvt.s32.f32 %v3914
      %v3931 = vcvt.s32.f32 %v3915
      %v3932 = vcvt.s32.f32 %v3916
      %v3933 = vcvt.s32.f32 %v3917
      %v3934 = vcvt.s32.f32 %v3918
      %v3935 = vcvt.s32.f32 %v3919
      %v3936 = vcvt.s32.f32 %v3920
      %v3937 = vcvt.s32.f32 %v3921
      %v3938 = vcvt.s32.f32 %v3922
      %v3939 = vcvt.s32.f32 %v3923
      %v3940 = vcvt.s32.f32 %v3924
      %v3941 = vcvt.s32.f32 %v3925
      %3943 = vset.pattern.permute.xlu0 0
      %3944 = vperm.xlu0 %3943, %v3926
      %v3945 = vpop.permute.xlu0 %3944
      %3948 = vset.pattern.permute.xlu0 0
      %3949 = vperm.xlu0 %3948, %v3927
      %v3950 = vpop.permute.xlu0 %3949
      %3953 = vset.pattern.permute.xlu0 0
      %3954 = vperm.xlu0 %3953, %v3928
      %v3955 = vpop.permute.xlu0 %3954
      %3958 = vset.pattern.permute.xlu0 0
      %3959 = vperm.xlu0 %3958, %v3929
      %v3960 = vpop.permute.xlu0 %3959
      %3963 = vset.pattern.permute.xlu0 0
      %3964 = vperm.xlu0 %3963, %v3930
      %v3965 = vpop.permute.xlu0 %3964
      %3968 = vset.pattern.permute.xlu0 0
      %3969 = vperm.xlu0 %3968, %v3931
      %v3970 = vpop.permute.xlu0 %3969
      %3973 = vset.pattern.permute.xlu0 0
      %3974 = vperm.xlu0 %3973, %v3932
      %v3975 = vpop.permute.xlu0 %3974
      %3978 = vset.pattern.permute.xlu0 0
      %3979 = vperm.xlu0 %3978, %v3933
      %v3980 = vpop.permute.xlu0 %3979
      %3983 = vset.pattern.permute.xlu0 0
      %3984 = vperm.xlu0 %3983, %v3934
      %v3985 = vpop.permute.xlu0 %3984
      %3988 = vset.pattern.permute.xlu0 0
      %3989 = vperm.xlu0 %3988, %v3935
      %v3990 = vpop.permute.xlu0 %3989
      %3993 = vset.pattern.permute.xlu0 0
      %3994 = vperm.xlu0 %3993, %v3936
      %v3995 = vpop.permute.xlu0 %3994
      %3998 = vset.pattern.permute.xlu0 0
      %3999 = vperm.xlu0 %3998, %v3937
      %v4000 = vpop.permute.xlu0 %3999
      %4003 = vset.pattern.permute.xlu0 0
      %4004 = vperm.xlu0 %4003, %v3938
      %v4005 = vpop.permute.xlu0 %4004
      %4008 = vset.pattern.permute.xlu0 0
      %4009 = vperm.xlu0 %4008, %v3939
      %v4010 = vpop.permute.xlu0 %4009
      %4013 = vset.pattern.permute.xlu0 0
      %4014 = vperm.xlu0 %4013, %v3940
      %v4015 = vpop.permute.xlu0 %4014
      %4018 = vset.pattern.permute.xlu0 0
      %4019 = vperm.xlu0 %4018, %v3941
      %v4020 = vpop.permute.xlu0 %4019
      %v4022 = vmul.f32 %v3878, %v3945
      %v4023 = vmul.f32 %v3879, %v3950
      %v4024 = vmul.f32 %v3880, %v3955
      %v4025 = vmul.f32 %v3881, %v3960
      %v4026 = vmul.f32 %v3882, %v3965
      %v4027 = vmul.f32 %v3883, %v3970
      %v4028 = vmul.f32 %v3884, %v3975
      %v4029 = vmul.f32 %v3885, %v3980
      %v4030 = vmul.f32 %v3886, %v3985
      %v4031 = vmul.f32 %v3887, %v3990
      %v4032 = vmul.f32 %v3888, %v3995
      %v4033 = vmul.f32 %v3889, %v4000
      %v4034 = vmul.f32 %v3890, %v4005
      %v4035 = vmul.f32 %v3891, %v4010
      %v4036 = vmul.f32 %v3892, %v4015
      %v4037 = vmul.f32 %v3893, %v4020
      %v4038 = vadd.f32 %v4022, %v4023
      %v4039 = vadd.f32 %v4038, %v4024
      %v4040 = vadd.f32 %v4039, %v4025
      %v4041 = vadd.f32 %v4040, %v4026
      %v4042 = vadd.f32 %v4041, %v4027
      %v4043 = vadd.f32 %v4042, %v4028
      %v4044 = vadd.f32 %v4043, %v4029
      %v4045 = vadd.f32 %v4044, %v4030
      %v4046 = vadd.f32 %v4045, %v4031
      %v4047 = vadd.f32 %v4046, %v4032
      %v4048 = vadd.f32 %v4047, %v4033
      %v4049 = vadd.f32 %v4048, %v4034
      %v4050 = vadd.f32 %v4049, %v4035
      %v4051 = vadd.f32 %v4050, %v4036
      %v4052 = vadd.f32 %v4051, %v4037
      %v4053 = vrot.slane %v4052, 4
      %v4054 = vadd.f32 %v4052, %v4053
      %v4055 = vrot.slane %v4054, 2
      %v4056 = vadd.f32 %v4054, %v4055
      %v4057 = vrot.slane %v4056, 1
      %v4058 = vadd.f32 %v4056, %v4057
      %v4059 = vsel %vm868, %v3926, 0.0
      %v4060 = vsel %vm868, %v3927, 0.0
      %v4061 = vadd.f32 %v4059, %v4060
      %v4062 = vsel %vm868, %v3928, 0.0
      %v4063 = vadd.f32 %v4061, %v4062
      %v4064 = vsel %vm868, %v3929, 0.0
      %v4065 = vadd.f32 %v4063, %v4064
      %v4066 = vsel %vm868, %v3930, 0.0
      %v4067 = vadd.f32 %v4065, %v4066
      %v4068 = vsel %vm868, %v3931, 0.0
      %v4069 = vadd.f32 %v4067, %v4068
      %v4070 = vsel %vm868, %v3932, 0.0
      %v4071 = vadd.f32 %v4069, %v4070
      %v4072 = vsel %vm868, %v3933, 0.0
      %v4073 = vadd.f32 %v4071, %v4072
      %v4074 = vsel %vm868, %v3934, 0.0
      %v4075 = vadd.f32 %v4073, %v4074
      %v4076 = vsel %vm868, %v3935, 0.0
      %v4077 = vadd.f32 %v4075, %v4076
      %v4078 = vsel %vm868, %v3936, 0.0
      %v4079 = vadd.f32 %v4077, %v4078
      %v4080 = vsel %vm868, %v3937, 0.0
      %v4081 = vadd.f32 %v4079, %v4080
      %v4082 = vsel %vm868, %v3938, 0.0
      %v4083 = vadd.f32 %v4081, %v4082
      %v4084 = vsel %vm868, %v3939, 0.0
      %v4085 = vadd.f32 %v4083, %v4084
      %v4086 = vsel %vm868, %v3940, 0.0
      %v4087 = vadd.f32 %v4085, %v4086
      %v4088 = vsel %vm868, %v3941, 0.0
      %v4089 = vadd.f32 %v4087, %v4088
      %v4090 = vrot.slane %v4089, 4
      %v4091 = vadd.f32 %v4089, %v4090
      %v4092 = vrot.slane %v4091, 2
      %v4093 = vadd.f32 %v4091, %v4092
      %v4094 = vrot.slane %v4093, 1
      %v4095 = vadd.f32 %v4093, %v4094
      %v4096 = vlaneseq
      %v4097 = vshrl.u32 %v4096, 7
      %v4098 = vsub.s32 6, %v4097
      %v4099 = vrot.slane %v220, %v4098
      %v4100 = vadd.f32 %v4099, %v221
      %v4101 = vadd.f32 %v4099, %v222
      %v4102 = vadd.f32 %v4099, %v223
      %v4103 = vadd.f32 %v4099, %v224
      %v4104 = vadd.f32 %v4099, %v225
      %v4105 = vadd.f32 %v4099, %v226
      %v4106 = vadd.f32 %v4099, %v227
      %v4107 = vadd.f32 %v4099, %v228
      %v4108 = vadd.f32 %v4099, %v229
      %v4109 = vadd.f32 %v4099, %v230
      %v4110 = vadd.f32 %v4099, %v231
      %v4111 = vadd.f32 %v4099, %v232
      %v4112 = vadd.f32 %v4099, %v233
      %v4113 = vadd.f32 %v4099, %v234
      %v4114 = vadd.f32 %v4099, %v235
      %v4115 = vadd.f32 %v4099, %v236
      %4117 = vset.pattern.permute.xlu0 0
      %4118 = vperm.xlu0 %4117, %v4100
      %v4119 = vpop.permute.xlu0 %4118
      %4122 = vset.pattern.permute.xlu0 0
      %4123 = vperm.xlu0 %4122, %v4101
      %v4124 = vpop.permute.xlu0 %4123
      %4127 = vset.pattern.permute.xlu0 0
      %4128 = vperm.xlu0 %4127, %v4102
      %v4129 = vpop.permute.xlu0 %4128
      %4132 = vset.pattern.permute.xlu0 0
      %4133 = vperm.xlu0 %4132, %v4103
      %v4134 = vpop.permute.xlu0 %4133
      %4137 = vset.pattern.permute.xlu0 0
      %4138 = vperm.xlu0 %4137, %v4104
      %v4139 = vpop.permute.xlu0 %4138
      %4142 = vset.pattern.permute.xlu0 0
      %4143 = vperm.xlu0 %4142, %v4105
      %v4144 = vpop.permute.xlu0 %4143
      %4147 = vset.pattern.permute.xlu0 0
      %4148 = vperm.xlu0 %4147, %v4106
      %v4149 = vpop.permute.xlu0 %4148
      %4152 = vset.pattern.permute.xlu0 0
      %4153 = vperm.xlu0 %4152, %v4107
      %v4154 = vpop.permute.xlu0 %4153
      %4157 = vset.pattern.permute.xlu0 0
      %4158 = vperm.xlu0 %4157, %v4108
      %v4159 = vpop.permute.xlu0 %4158
      %4162 = vset.pattern.permute.xlu0 0
      %4163 = vperm.xlu0 %4162, %v4109
      %v4164 = vpop.permute.xlu0 %4163
      %4167 = vset.pattern.permute.xlu0 0
      %4168 = vperm.xlu0 %4167, %v4110
      %v4169 = vpop.permute.xlu0 %4168
      %4172 = vset.pattern.permute.xlu0 0
      %4173 = vperm.xlu0 %4172, %v4111
      %v4174 = vpop.permute.xlu0 %4173
      %4177 = vset.pattern.permute.xlu0 0
      %4178 = vperm.xlu0 %4177, %v4112
      %v4179 = vpop.permute.xlu0 %4178
      %4182 = vset.pattern.permute.xlu0 0
      %4183 = vperm.xlu0 %4182, %v4113
      %v4184 = vpop.permute.xlu0 %4183
      %4187 = vset.pattern.permute.xlu0 0
      %4188 = vperm.xlu0 %4187, %v4114
      %v4189 = vpop.permute.xlu0 %4188
      %4192 = vset.pattern.permute.xlu0 0
      %4193 = vperm.xlu0 %4192, %v4115
      %v4194 = vpop.permute.xlu0 %4193
      %v4196 = vsub.f32 %v4119, %v358
      %v4197 = vsub.f32 %v4124, %v358
      %v4198 = vsub.f32 %v4129, %v358
      %v4199 = vsub.f32 %v4134, %v358
      %v4200 = vsub.f32 %v4139, %v358
      %v4201 = vsub.f32 %v4144, %v358
      %v4202 = vsub.f32 %v4149, %v358
      %v4203 = vsub.f32 %v4154, %v358
      %v4204 = vsub.f32 %v4159, %v358
      %v4205 = vsub.f32 %v4164, %v358
      %v4206 = vsub.f32 %v4169, %v358
      %v4207 = vsub.f32 %v4174, %v358
      %v4208 = vsub.f32 %v4179, %v358
      %v4209 = vsub.f32 %v4184, %v358
      %v4210 = vsub.f32 %v4189, %v358
      %v4211 = vsub.f32 %v4194, %v358
      %v4212 = vmul.f32 %v4196, %v4196
      %v4213 = vmul.f32 %v4197, %v4197
      %v4214 = vmul.f32 %v4198, %v4198
      %v4215 = vmul.f32 %v4199, %v4199
      %v4216 = vmul.f32 %v4200, %v4200
      %v4217 = vmul.f32 %v4201, %v4201
      %v4218 = vmul.f32 %v4202, %v4202
      %v4219 = vmul.f32 %v4203, %v4203
      %v4220 = vmul.f32 %v4204, %v4204
      %v4221 = vmul.f32 %v4205, %v4205
      %v4222 = vmul.f32 %v4206, %v4206
      %v4223 = vmul.f32 %v4207, %v4207
      %v4224 = vmul.f32 %v4208, %v4208
      %v4225 = vmul.f32 %v4209, %v4209
      %v4226 = vmul.f32 %v4210, %v4210
      %v4227 = vmul.f32 %v4211, %v4211
      %4228 = vset.pattern.permute.xlu0 1
      %4229 = vperm.xlu0 %4228, %v4100
      %v4230 = vpop.permute.xlu0 %4229
      %4232 = vset.pattern.permute.xlu0 1
      %4233 = vperm.xlu0 %4232, %v4101
      %v4234 = vpop.permute.xlu0 %4233
      %4236 = vset.pattern.permute.xlu0 1
      %4237 = vperm.xlu0 %4236, %v4102
      %v4238 = vpop.permute.xlu0 %4237
      %4240 = vset.pattern.permute.xlu0 1
      %4241 = vperm.xlu0 %4240, %v4103
      %v4242 = vpop.permute.xlu0 %4241
      %4244 = vset.pattern.permute.xlu0 1
      %4245 = vperm.xlu0 %4244, %v4104
      %v4246 = vpop.permute.xlu0 %4245
      %4248 = vset.pattern.permute.xlu0 1
      %4249 = vperm.xlu0 %4248, %v4105
      %v4250 = vpop.permute.xlu0 %4249
      %4252 = vset.pattern.permute.xlu0 1
      %4253 = vperm.xlu0 %4252, %v4106
      %v4254 = vpop.permute.xlu0 %4253
      %4256 = vset.pattern.permute.xlu0 1
      %4257 = vperm.xlu0 %4256, %v4107
      %v4258 = vpop.permute.xlu0 %4257
      %4260 = vset.pattern.permute.xlu0 1
      %4261 = vperm.xlu0 %4260, %v4108
      %v4262 = vpop.permute.xlu0 %4261
      %4264 = vset.pattern.permute.xlu0 1
      %4265 = vperm.xlu0 %4264, %v4109
      %v4266 = vpop.permute.xlu0 %4265
      %4268 = vset.pattern.permute.xlu0 1
      %4269 = vperm.xlu0 %4268, %v4110
      %v4270 = vpop.permute.xlu0 %4269
      %4272 = vset.pattern.permute.xlu0 1
      %4273 = vperm.xlu0 %4272, %v4111
      %v4274 = vpop.permute.xlu0 %4273
      %4276 = vset.pattern.permute.xlu0 1
      %4277 = vperm.xlu0 %4276, %v4112
      %v4278 = vpop.permute.xlu0 %4277
      %4280 = vset.pattern.permute.xlu0 1
      %4281 = vperm.xlu0 %4280, %v4113
      %v4282 = vpop.permute.xlu0 %4281
      %4284 = vset.pattern.permute.xlu0 1
      %4285 = vperm.xlu0 %4284, %v4114
      %v4286 = vpop.permute.xlu0 %4285
      %4288 = vset.pattern.permute.xlu0 1
      %4289 = vperm.xlu0 %4288, %v4115
      %v4290 = vpop.permute.xlu0 %4289
      %v4292 = vsub.f32 %v4230, %v458
      %v4293 = vsub.f32 %v4234, %v458
      %v4294 = vsub.f32 %v4238, %v458
      %v4295 = vsub.f32 %v4242, %v458
      %v4296 = vsub.f32 %v4246, %v458
      %v4297 = vsub.f32 %v4250, %v458
      %v4298 = vsub.f32 %v4254, %v458
      %v4299 = vsub.f32 %v4258, %v458
      %v4300 = vsub.f32 %v4262, %v458
      %v4301 = vsub.f32 %v4266, %v458
      %v4302 = vsub.f32 %v4270, %v458
      %v4303 = vsub.f32 %v4274, %v458
      %v4304 = vsub.f32 %v4278, %v458
      %v4305 = vsub.f32 %v4282, %v458
      %v4306 = vsub.f32 %v4286, %v458
      %v4307 = vsub.f32 %v4290, %v458
      %v4308 = vmul.f32 %v4292, %v4292
      %v4309 = vmul.f32 %v4293, %v4293
      %v4310 = vmul.f32 %v4294, %v4294
      %v4311 = vmul.f32 %v4295, %v4295
      %v4312 = vmul.f32 %v4296, %v4296
      %v4313 = vmul.f32 %v4297, %v4297
      %v4314 = vmul.f32 %v4298, %v4298
      %v4315 = vmul.f32 %v4299, %v4299
      %v4316 = vmul.f32 %v4300, %v4300
      %v4317 = vmul.f32 %v4301, %v4301
      %v4318 = vmul.f32 %v4302, %v4302
      %v4319 = vmul.f32 %v4303, %v4303
      %v4320 = vmul.f32 %v4304, %v4304
      %v4321 = vmul.f32 %v4305, %v4305
      %v4322 = vmul.f32 %v4306, %v4306
      %v4323 = vmul.f32 %v4307, %v4307
      %v4324 = vadd.f32 %v4212, %v4308
      %v4325 = vadd.f32 %v4213, %v4309
      %v4326 = vadd.f32 %v4214, %v4310
      %v4327 = vadd.f32 %v4215, %v4311
      %v4328 = vadd.f32 %v4216, %v4312
      %v4329 = vadd.f32 %v4217, %v4313
      %v4330 = vadd.f32 %v4218, %v4314
      %v4331 = vadd.f32 %v4219, %v4315
      %v4332 = vadd.f32 %v4220, %v4316
      %v4333 = vadd.f32 %v4221, %v4317
      %v4334 = vadd.f32 %v4222, %v4318
      %v4335 = vadd.f32 %v4223, %v4319
      %v4336 = vadd.f32 %v4224, %v4320
      %v4337 = vadd.f32 %v4225, %v4321
      %v4338 = vadd.f32 %v4226, %v4322
      %v4339 = vadd.f32 %v4227, %v4323
      %4340 = vset.pattern.permute.xlu0 2
      %4341 = vperm.xlu0 %4340, %v4100
      %v4342 = vpop.permute.xlu0 %4341
      %4344 = vset.pattern.permute.xlu0 2
      %4345 = vperm.xlu0 %4344, %v4101
      %v4346 = vpop.permute.xlu0 %4345
      %4348 = vset.pattern.permute.xlu0 2
      %4349 = vperm.xlu0 %4348, %v4102
      %v4350 = vpop.permute.xlu0 %4349
      %4352 = vset.pattern.permute.xlu0 2
      %4353 = vperm.xlu0 %4352, %v4103
      %v4354 = vpop.permute.xlu0 %4353
      %4356 = vset.pattern.permute.xlu0 2
      %4357 = vperm.xlu0 %4356, %v4104
      %v4358 = vpop.permute.xlu0 %4357
      %4360 = vset.pattern.permute.xlu0 2
      %4361 = vperm.xlu0 %4360, %v4105
      %v4362 = vpop.permute.xlu0 %4361
      %4364 = vset.pattern.permute.xlu0 2
      %4365 = vperm.xlu0 %4364, %v4106
      %v4366 = vpop.permute.xlu0 %4365
      %4368 = vset.pattern.permute.xlu0 2
      %4369 = vperm.xlu0 %4368, %v4107
      %v4370 = vpop.permute.xlu0 %4369
      %4372 = vset.pattern.permute.xlu0 2
      %4373 = vperm.xlu0 %4372, %v4108
      %v4374 = vpop.permute.xlu0 %4373
      %4376 = vset.pattern.permute.xlu0 2
      %4377 = vperm.xlu0 %4376, %v4109
      %v4378 = vpop.permute.xlu0 %4377
      %4380 = vset.pattern.permute.xlu0 2
      %4381 = vperm.xlu0 %4380, %v4110
      %v4382 = vpop.permute.xlu0 %4381
      %4384 = vset.pattern.permute.xlu0 2
      %4385 = vperm.xlu0 %4384, %v4111
      %v4386 = vpop.permute.xlu0 %4385
      %4388 = vset.pattern.permute.xlu0 2
      %4389 = vperm.xlu0 %4388, %v4112
      %v4390 = vpop.permute.xlu0 %4389
      %4392 = vset.pattern.permute.xlu0 2
      %4393 = vperm.xlu0 %4392, %v4113
      %v4394 = vpop.permute.xlu0 %4393
      %4396 = vset.pattern.permute.xlu0 2
      %4397 = vperm.xlu0 %4396, %v4114
      %v4398 = vpop.permute.xlu0 %4397
      %4400 = vset.pattern.permute.xlu0 2
      %4401 = vperm.xlu0 %4400, %v4115
      %v4402 = vpop.permute.xlu0 %4401
      %v4404 = vsub.f32 %v4342, %v574
      %v4405 = vsub.f32 %v4346, %v574
      %v4406 = vsub.f32 %v4350, %v574
      %v4407 = vsub.f32 %v4354, %v574
      %v4408 = vsub.f32 %v4358, %v574
      %v4409 = vsub.f32 %v4362, %v574
      %v4410 = vsub.f32 %v4366, %v574
      %v4411 = vsub.f32 %v4370, %v574
      %v4412 = vsub.f32 %v4374, %v574
      %v4413 = vsub.f32 %v4378, %v574
      %v4414 = vsub.f32 %v4382, %v574
      %v4415 = vsub.f32 %v4386, %v574
      %v4416 = vsub.f32 %v4390, %v574
      %v4417 = vsub.f32 %v4394, %v574
      %v4418 = vsub.f32 %v4398, %v574
      %v4419 = vsub.f32 %v4402, %v574
      %v4420 = vmul.f32 %v4404, %v4404
      %v4421 = vmul.f32 %v4405, %v4405
      %v4422 = vmul.f32 %v4406, %v4406
      %v4423 = vmul.f32 %v4407, %v4407
      %v4424 = vmul.f32 %v4408, %v4408
      %v4425 = vmul.f32 %v4409, %v4409
      %v4426 = vmul.f32 %v4410, %v4410
      %v4427 = vmul.f32 %v4411, %v4411
      %v4428 = vmul.f32 %v4412, %v4412
      %v4429 = vmul.f32 %v4413, %v4413
      %v4430 = vmul.f32 %v4414, %v4414
      %v4431 = vmul.f32 %v4415, %v4415
      %v4432 = vmul.f32 %v4416, %v4416
      %v4433 = vmul.f32 %v4417, %v4417
      %v4434 = vmul.f32 %v4418, %v4418
      %v4435 = vmul.f32 %v4419, %v4419
      %v4436 = vadd.f32 %v4324, %v4420
      %v4437 = vadd.f32 %v4325, %v4421
      %v4438 = vadd.f32 %v4326, %v4422
      %v4439 = vadd.f32 %v4327, %v4423
      %v4440 = vadd.f32 %v4328, %v4424
      %v4441 = vadd.f32 %v4329, %v4425
      %v4442 = vadd.f32 %v4330, %v4426
      %v4443 = vadd.f32 %v4331, %v4427
      %v4444 = vadd.f32 %v4332, %v4428
      %v4445 = vadd.f32 %v4333, %v4429
      %v4446 = vadd.f32 %v4334, %v4430
      %v4447 = vadd.f32 %v4335, %v4431
      %v4448 = vadd.f32 %v4336, %v4432
      %v4449 = vadd.f32 %v4337, %v4433
      %v4450 = vadd.f32 %v4338, %v4434
      %v4451 = vadd.f32 %v4339, %v4435
      %4452 = vmin.xlane.f32.xlu0 %v4436
      %v4453 = vpop.xlane.xlu0 %4452
      %4454 = vmin.xlane.f32.xlu0 %v4437
      %v4455 = vpop.xlane.xlu0 %4454
      %4456 = vmin.xlane.f32.xlu0 %v4438
      %v4457 = vpop.xlane.xlu0 %4456
      %4458 = vmin.xlane.f32.xlu0 %v4439
      %v4459 = vpop.xlane.xlu0 %4458
      %4460 = vmin.xlane.f32.xlu0 %v4440
      %v4461 = vpop.xlane.xlu0 %4460
      %4462 = vmin.xlane.f32.xlu0 %v4441
      %v4463 = vpop.xlane.xlu0 %4462
      %4464 = vmin.xlane.f32.xlu0 %v4442
      %v4465 = vpop.xlane.xlu0 %4464
      %4466 = vmin.xlane.f32.xlu0 %v4443
      %v4467 = vpop.xlane.xlu0 %4466
      %4468 = vmin.xlane.f32.xlu0 %v4444
      %v4469 = vpop.xlane.xlu0 %4468
      %4470 = vmin.xlane.f32.xlu0 %v4445
      %v4471 = vpop.xlane.xlu0 %4470
      %4472 = vmin.xlane.f32.xlu0 %v4446
      %v4473 = vpop.xlane.xlu0 %4472
      %4474 = vmin.xlane.f32.xlu0 %v4447
      %v4475 = vpop.xlane.xlu0 %4474
      %4476 = vmin.xlane.f32.xlu0 %v4448
      %v4477 = vpop.xlane.xlu0 %4476
      %4478 = vmin.xlane.f32.xlu0 %v4449
      %v4479 = vpop.xlane.xlu0 %4478
      %4480 = vmin.xlane.f32.xlu0 %v4450
      %v4481 = vpop.xlane.xlu0 %4480
      %4482 = vmin.xlane.f32.xlu0 %v4451
      %v4483 = vpop.xlane.xlu0 %4482
      %vm4484 = vcmp.eq.f32.partialorder %v4436, %v4453
      %vm4485 = vcmp.eq.f32.partialorder %v4437, %v4455
      %vm4486 = vcmp.eq.f32.partialorder %v4438, %v4457
      %vm4487 = vcmp.eq.f32.partialorder %v4439, %v4459
      %vm4488 = vcmp.eq.f32.partialorder %v4440, %v4461
      %vm4489 = vcmp.eq.f32.partialorder %v4441, %v4463
      %vm4490 = vcmp.eq.f32.partialorder %v4442, %v4465
      %vm4491 = vcmp.eq.f32.partialorder %v4443, %v4467
      %vm4492 = vcmp.eq.f32.partialorder %v4444, %v4469
      %vm4493 = vcmp.eq.f32.partialorder %v4445, %v4471
      %vm4494 = vcmp.eq.f32.partialorder %v4446, %v4473
      %vm4495 = vcmp.eq.f32.partialorder %v4447, %v4475
      %vm4496 = vcmp.eq.f32.partialorder %v4448, %v4477
      %vm4497 = vcmp.eq.f32.partialorder %v4449, %v4479
      %vm4498 = vcmp.eq.f32.partialorder %v4450, %v4481
      %vm4499 = vcmp.eq.f32.partialorder %v4451, %v4483
      %v4500 = vsel %vm4484, 1, 0
      %v4501 = vsel %vm4485, 1, 0
      %v4502 = vsel %vm4486, 1, 0
      %v4503 = vsel %vm4487, 1, 0
      %v4504 = vsel %vm4488, 1, 0
      %v4505 = vsel %vm4489, 1, 0
      %v4506 = vsel %vm4490, 1, 0
      %v4507 = vsel %vm4491, 1, 0
      %v4508 = vsel %vm4492, 1, 0
      %v4509 = vsel %vm4493, 1, 0
      %v4510 = vsel %vm4494, 1, 0
      %v4511 = vsel %vm4495, 1, 0
      %v4512 = vsel %vm4496, 1, 0
      %v4513 = vsel %vm4497, 1, 0
      %v4514 = vsel %vm4498, 1, 0
      %v4515 = vsel %vm4499, 1, 0
      %v4516 = vcvt.s32.f32 %v4500
      %v4517 = vcvt.s32.f32 %v4501
      %v4518 = vcvt.s32.f32 %v4502
      %v4519 = vcvt.s32.f32 %v4503
      %v4520 = vcvt.s32.f32 %v4504
      %v4521 = vcvt.s32.f32 %v4505
      %v4522 = vcvt.s32.f32 %v4506
      %v4523 = vcvt.s32.f32 %v4507
      %v4524 = vcvt.s32.f32 %v4508
      %v4525 = vcvt.s32.f32 %v4509
      %v4526 = vcvt.s32.f32 %v4510
      %v4527 = vcvt.s32.f32 %v4511
      %v4528 = vcvt.s32.f32 %v4512
      %v4529 = vcvt.s32.f32 %v4513
      %v4530 = vcvt.s32.f32 %v4514
      %v4531 = vcvt.s32.f32 %v4515
      %vm4532 = vcmp.le.f32.partialorder %v238, %v4453
      %vm4533 = vcmp.le.f32.partialorder %v239, %v4455
      %vm4534 = vcmp.le.f32.partialorder %v240, %v4457
      %vm4535 = vcmp.le.f32.partialorder %v241, %v4459
      %vm4536 = vcmp.le.f32.partialorder %v242, %v4461
      %vm4537 = vcmp.le.f32.partialorder %v243, %v4463
      %vm4538 = vcmp.le.f32.partialorder %v244, %v4465
      %vm4539 = vcmp.le.f32.partialorder %v245, %v4467
      %vm4540 = vcmp.le.f32.partialorder %v246, %v4469
      %vm4541 = vcmp.le.f32.partialorder %v247, %v4471
      %vm4542 = vcmp.le.f32.partialorder %v248, %v4473
      %vm4543 = vcmp.le.f32.partialorder %v249, %v4475
      %vm4544 = vcmp.le.f32.partialorder %v250, %v4477
      %vm4545 = vcmp.le.f32.partialorder %v251, %v4479
      %vm4546 = vcmp.le.f32.partialorder %v252, %v4481
      %vm4547 = vcmp.le.f32.partialorder %v253, %v4483
      %v4548 = vsel %vm4532, 1, 0
      %v4549 = vsel %vm4533, 1, 0
      %v4550 = vsel %vm4534, 1, 0
      %v4551 = vsel %vm4535, 1, 0
      %v4552 = vsel %vm4536, 1, 0
      %v4553 = vsel %vm4537, 1, 0
      %v4554 = vsel %vm4538, 1, 0
      %v4555 = vsel %vm4539, 1, 0
      %v4556 = vsel %vm4540, 1, 0
      %v4557 = vsel %vm4541, 1, 0
      %v4558 = vsel %vm4542, 1, 0
      %v4559 = vsel %vm4543, 1, 0
      %v4560 = vsel %vm4544, 1, 0
      %v4561 = vsel %vm4545, 1, 0
      %v4562 = vsel %vm4546, 1, 0
      %v4563 = vsel %vm4547, 1, 0
      %v4564 = vcvt.s32.f32 %v4548
      %v4565 = vcvt.s32.f32 %v4549
      %v4566 = vcvt.s32.f32 %v4550
      %v4567 = vcvt.s32.f32 %v4551
      %v4568 = vcvt.s32.f32 %v4552
      %v4569 = vcvt.s32.f32 %v4553
      %v4570 = vcvt.s32.f32 %v4554
      %v4571 = vcvt.s32.f32 %v4555
      %v4572 = vcvt.s32.f32 %v4556
      %v4573 = vcvt.s32.f32 %v4557
      %v4574 = vcvt.s32.f32 %v4558
      %v4575 = vcvt.s32.f32 %v4559
      %v4576 = vcvt.s32.f32 %v4560
      %v4577 = vcvt.s32.f32 %v4561
      %v4578 = vcvt.s32.f32 %v4562
      %v4579 = vcvt.s32.f32 %v4563
      %4581 = vset.pattern.permute.xlu0 0
      %4582 = vperm.xlu0 %4581, %v4564
      %v4583 = vpop.permute.xlu0 %4582
      %4586 = vset.pattern.permute.xlu0 0
      %4587 = vperm.xlu0 %4586, %v4565
      %v4588 = vpop.permute.xlu0 %4587
      %4591 = vset.pattern.permute.xlu0 0
      %4592 = vperm.xlu0 %4591, %v4566
      %v4593 = vpop.permute.xlu0 %4592
      %4596 = vset.pattern.permute.xlu0 0
      %4597 = vperm.xlu0 %4596, %v4567
      %v4598 = vpop.permute.xlu0 %4597
      %4601 = vset.pattern.permute.xlu0 0
      %4602 = vperm.xlu0 %4601, %v4568
      %v4603 = vpop.permute.xlu0 %4602
      %4606 = vset.pattern.permute.xlu0 0
      %4607 = vperm.xlu0 %4606, %v4569
      %v4608 = vpop.permute.xlu0 %4607
      %4611 = vset.pattern.permute.xlu0 0
      %4612 = vperm.xlu0 %4611, %v4570
      %v4613 = vpop.permute.xlu0 %4612
      %4616 = vset.pattern.permute.xlu0 0
      %4617 = vperm.xlu0 %4616, %v4571
      %v4618 = vpop.permute.xlu0 %4617
      %4621 = vset.pattern.permute.xlu0 0
      %4622 = vperm.xlu0 %4621, %v4572
      %v4623 = vpop.permute.xlu0 %4622
      %4626 = vset.pattern.permute.xlu0 0
      %4627 = vperm.xlu0 %4626, %v4573
      %v4628 = vpop.permute.xlu0 %4627
      %4631 = vset.pattern.permute.xlu0 0
      %4632 = vperm.xlu0 %4631, %v4574
      %v4633 = vpop.permute.xlu0 %4632
      %4636 = vset.pattern.permute.xlu0 0
      %4637 = vperm.xlu0 %4636, %v4575
      %v4638 = vpop.permute.xlu0 %4637
      %4641 = vset.pattern.permute.xlu0 0
      %4642 = vperm.xlu0 %4641, %v4576
      %v4643 = vpop.permute.xlu0 %4642
      %4646 = vset.pattern.permute.xlu0 0
      %4647 = vperm.xlu0 %4646, %v4577
      %v4648 = vpop.permute.xlu0 %4647
      %4651 = vset.pattern.permute.xlu0 0
      %4652 = vperm.xlu0 %4651, %v4578
      %v4653 = vpop.permute.xlu0 %4652
      %4656 = vset.pattern.permute.xlu0 0
      %4657 = vperm.xlu0 %4656, %v4579
      %v4658 = vpop.permute.xlu0 %4657
      %v4660 = vmul.f32 %v4516, %v4583
      %v4661 = vmul.f32 %v4517, %v4588
      %v4662 = vmul.f32 %v4518, %v4593
      %v4663 = vmul.f32 %v4519, %v4598
      %v4664 = vmul.f32 %v4520, %v4603
      %v4665 = vmul.f32 %v4521, %v4608
      %v4666 = vmul.f32 %v4522, %v4613
      %v4667 = vmul.f32 %v4523, %v4618
      %v4668 = vmul.f32 %v4524, %v4623
      %v4669 = vmul.f32 %v4525, %v4628
      %v4670 = vmul.f32 %v4526, %v4633
      %v4671 = vmul.f32 %v4527, %v4638
      %v4672 = vmul.f32 %v4528, %v4643
      %v4673 = vmul.f32 %v4529, %v4648
      %v4674 = vmul.f32 %v4530, %v4653
      %v4675 = vmul.f32 %v4531, %v4658
      %v4676 = vadd.f32 %v4660, %v4661
      %v4677 = vadd.f32 %v4676, %v4662
      %v4678 = vadd.f32 %v4677, %v4663
      %v4679 = vadd.f32 %v4678, %v4664
      %v4680 = vadd.f32 %v4679, %v4665
      %v4681 = vadd.f32 %v4680, %v4666
      %v4682 = vadd.f32 %v4681, %v4667
      %v4683 = vadd.f32 %v4682, %v4668
      %v4684 = vadd.f32 %v4683, %v4669
      %v4685 = vadd.f32 %v4684, %v4670
      %v4686 = vadd.f32 %v4685, %v4671
      %v4687 = vadd.f32 %v4686, %v4672
      %v4688 = vadd.f32 %v4687, %v4673
      %v4689 = vadd.f32 %v4688, %v4674
      %v4690 = vadd.f32 %v4689, %v4675
      %v4691 = vrot.slane %v4690, 4
      %v4692 = vadd.f32 %v4690, %v4691
      %v4693 = vrot.slane %v4692, 2
      %v4694 = vadd.f32 %v4692, %v4693
      %v4695 = vrot.slane %v4694, 1
      %v4696 = vadd.f32 %v4694, %v4695
      %v4697 = vsel %vm868, %v4564, 0.0
      %v4698 = vsel %vm868, %v4565, 0.0
      %v4699 = vadd.f32 %v4697, %v4698
      %v4700 = vsel %vm868, %v4566, 0.0
      %v4701 = vadd.f32 %v4699, %v4700
      %v4702 = vsel %vm868, %v4567, 0.0
      %v4703 = vadd.f32 %v4701, %v4702
      %v4704 = vsel %vm868, %v4568, 0.0
      %v4705 = vadd.f32 %v4703, %v4704
      %v4706 = vsel %vm868, %v4569, 0.0
      %v4707 = vadd.f32 %v4705, %v4706
      %v4708 = vsel %vm868, %v4570, 0.0
      %v4709 = vadd.f32 %v4707, %v4708
      %v4710 = vsel %vm868, %v4571, 0.0
      %v4711 = vadd.f32 %v4709, %v4710
      %v4712 = vsel %vm868, %v4572, 0.0
      %v4713 = vadd.f32 %v4711, %v4712
      %v4714 = vsel %vm868, %v4573, 0.0
      %v4715 = vadd.f32 %v4713, %v4714
      %v4716 = vsel %vm868, %v4574, 0.0
      %v4717 = vadd.f32 %v4715, %v4716
      %v4718 = vsel %vm868, %v4575, 0.0
      %v4719 = vadd.f32 %v4717, %v4718
      %v4720 = vsel %vm868, %v4576, 0.0
      %v4721 = vadd.f32 %v4719, %v4720
      %v4722 = vsel %vm868, %v4577, 0.0
      %v4723 = vadd.f32 %v4721, %v4722
      %v4724 = vsel %vm868, %v4578, 0.0
      %v4725 = vadd.f32 %v4723, %v4724
      %v4726 = vsel %vm868, %v4579, 0.0
      %v4727 = vadd.f32 %v4725, %v4726
      %v4728 = vrot.slane %v4727, 4
      %v4729 = vadd.f32 %v4727, %v4728
      %v4730 = vrot.slane %v4729, 2
      %v4731 = vadd.f32 %v4729, %v4730
      %v4732 = vrot.slane %v4731, 1
      %v4733 = vadd.f32 %v4731, %v4732
      %v4734 = vlaneseq
      %v4735 = vshrl.u32 %v4734, 7
      %v4736 = vsub.s32 7, %v4735
      %v4737 = vrot.slane %v220, %v4736
      %v4738 = vadd.f32 %v4737, %v221
      %v4739 = vadd.f32 %v4737, %v222
      %v4740 = vadd.f32 %v4737, %v223
      %v4741 = vadd.f32 %v4737, %v224
      %v4742 = vadd.f32 %v4737, %v225
      %v4743 = vadd.f32 %v4737, %v226
      %v4744 = vadd.f32 %v4737, %v227
      %v4745 = vadd.f32 %v4737, %v228
      %v4746 = vadd.f32 %v4737, %v229
      %v4747 = vadd.f32 %v4737, %v230
      %v4748 = vadd.f32 %v4737, %v231
      %v4749 = vadd.f32 %v4737, %v232
      %v4750 = vadd.f32 %v4737, %v233
      %v4751 = vadd.f32 %v4737, %v234
      %v4752 = vadd.f32 %v4737, %v235
      %v4753 = vadd.f32 %v4737, %v236
      %4755 = vset.pattern.permute.xlu0 0
      %4756 = vperm.xlu0 %4755, %v4738
      %v4757 = vpop.permute.xlu0 %4756
      %4760 = vset.pattern.permute.xlu0 0
      %4761 = vperm.xlu0 %4760, %v4739
      %v4762 = vpop.permute.xlu0 %4761
      %4765 = vset.pattern.permute.xlu0 0
      %4766 = vperm.xlu0 %4765, %v4740
      %v4767 = vpop.permute.xlu0 %4766
      %4770 = vset.pattern.permute.xlu0 0
      %4771 = vperm.xlu0 %4770, %v4741
      %v4772 = vpop.permute.xlu0 %4771
      %4775 = vset.pattern.permute.xlu0 0
      %4776 = vperm.xlu0 %4775, %v4742
      %v4777 = vpop.permute.xlu0 %4776
      %4780 = vset.pattern.permute.xlu0 0
      %4781 = vperm.xlu0 %4780, %v4743
      %v4782 = vpop.permute.xlu0 %4781
      %4785 = vset.pattern.permute.xlu0 0
      %4786 = vperm.xlu0 %4785, %v4744
      %v4787 = vpop.permute.xlu0 %4786
      %4790 = vset.pattern.permute.xlu0 0
      %4791 = vperm.xlu0 %4790, %v4745
      %v4792 = vpop.permute.xlu0 %4791
      %4795 = vset.pattern.permute.xlu0 0
      %4796 = vperm.xlu0 %4795, %v4746
      %v4797 = vpop.permute.xlu0 %4796
      %4800 = vset.pattern.permute.xlu0 0
      %4801 = vperm.xlu0 %4800, %v4747
      %v4802 = vpop.permute.xlu0 %4801
      %4805 = vset.pattern.permute.xlu0 0
      %4806 = vperm.xlu0 %4805, %v4748
      %v4807 = vpop.permute.xlu0 %4806
      %4810 = vset.pattern.permute.xlu0 0
      %4811 = vperm.xlu0 %4810, %v4749
      %v4812 = vpop.permute.xlu0 %4811
      %4815 = vset.pattern.permute.xlu0 0
      %4816 = vperm.xlu0 %4815, %v4750
      %v4817 = vpop.permute.xlu0 %4816
      %4820 = vset.pattern.permute.xlu0 0
      %4821 = vperm.xlu0 %4820, %v4751
      %v4822 = vpop.permute.xlu0 %4821
      %4825 = vset.pattern.permute.xlu0 0
      %4826 = vperm.xlu0 %4825, %v4752
      %v4827 = vpop.permute.xlu0 %4826
      %4830 = vset.pattern.permute.xlu0 0
      %4831 = vperm.xlu0 %4830, %v4753
      %v4832 = vpop.permute.xlu0 %4831
      %v4834 = vsub.f32 %v4757, %v358
      %v4835 = vsub.f32 %v4762, %v358
      %v4836 = vsub.f32 %v4767, %v358
      %v4837 = vsub.f32 %v4772, %v358
      %v4838 = vsub.f32 %v4777, %v358
      %v4839 = vsub.f32 %v4782, %v358
      %v4840 = vsub.f32 %v4787, %v358
      %v4841 = vsub.f32 %v4792, %v358
      %v4842 = vsub.f32 %v4797, %v358
      %v4843 = vsub.f32 %v4802, %v358
      %v4844 = vsub.f32 %v4807, %v358
      %v4845 = vsub.f32 %v4812, %v358
      %v4846 = vsub.f32 %v4817, %v358
      %v4847 = vsub.f32 %v4822, %v358
      %v4848 = vsub.f32 %v4827, %v358
      %v4849 = vsub.f32 %v4832, %v358
      %v4850 = vmul.f32 %v4834, %v4834
      %v4851 = vmul.f32 %v4835, %v4835
      %v4852 = vmul.f32 %v4836, %v4836
      %v4853 = vmul.f32 %v4837, %v4837
      %v4854 = vmul.f32 %v4838, %v4838
      %v4855 = vmul.f32 %v4839, %v4839
      %v4856 = vmul.f32 %v4840, %v4840
      %v4857 = vmul.f32 %v4841, %v4841
      %v4858 = vmul.f32 %v4842, %v4842
      %v4859 = vmul.f32 %v4843, %v4843
      %v4860 = vmul.f32 %v4844, %v4844
      %v4861 = vmul.f32 %v4845, %v4845
      %v4862 = vmul.f32 %v4846, %v4846
      %v4863 = vmul.f32 %v4847, %v4847
      %v4864 = vmul.f32 %v4848, %v4848
      %v4865 = vmul.f32 %v4849, %v4849
      %4866 = vset.pattern.permute.xlu0 1
      %4867 = vperm.xlu0 %4866, %v4738
      %v4868 = vpop.permute.xlu0 %4867
      %4870 = vset.pattern.permute.xlu0 1
      %4871 = vperm.xlu0 %4870, %v4739
      %v4872 = vpop.permute.xlu0 %4871
      %4874 = vset.pattern.permute.xlu0 1
      %4875 = vperm.xlu0 %4874, %v4740
      %v4876 = vpop.permute.xlu0 %4875
      %4878 = vset.pattern.permute.xlu0 1
      %4879 = vperm.xlu0 %4878, %v4741
      %v4880 = vpop.permute.xlu0 %4879
      %4882 = vset.pattern.permute.xlu0 1
      %4883 = vperm.xlu0 %4882, %v4742
      %v4884 = vpop.permute.xlu0 %4883
      %4886 = vset.pattern.permute.xlu0 1
      %4887 = vperm.xlu0 %4886, %v4743
      %v4888 = vpop.permute.xlu0 %4887
      %4890 = vset.pattern.permute.xlu0 1
      %4891 = vperm.xlu0 %4890, %v4744
      %v4892 = vpop.permute.xlu0 %4891
      %4894 = vset.pattern.permute.xlu0 1
      %4895 = vperm.xlu0 %4894, %v4745
      %v4896 = vpop.permute.xlu0 %4895
      %4898 = vset.pattern.permute.xlu0 1
      %4899 = vperm.xlu0 %4898, %v4746
      %v4900 = vpop.permute.xlu0 %4899
      %4902 = vset.pattern.permute.xlu0 1
      %4903 = vperm.xlu0 %4902, %v4747
      %v4904 = vpop.permute.xlu0 %4903
      %4906 = vset.pattern.permute.xlu0 1
      %4907 = vperm.xlu0 %4906, %v4748
      %v4908 = vpop.permute.xlu0 %4907
      %4910 = vset.pattern.permute.xlu0 1
      %4911 = vperm.xlu0 %4910, %v4749
      %v4912 = vpop.permute.xlu0 %4911
      %4914 = vset.pattern.permute.xlu0 1
      %4915 = vperm.xlu0 %4914, %v4750
      %v4916 = vpop.permute.xlu0 %4915
      %4918 = vset.pattern.permute.xlu0 1
      %4919 = vperm.xlu0 %4918, %v4751
      %v4920 = vpop.permute.xlu0 %4919
      %4922 = vset.pattern.permute.xlu0 1
      %4923 = vperm.xlu0 %4922, %v4752
      %v4924 = vpop.permute.xlu0 %4923
      %4926 = vset.pattern.permute.xlu0 1
      %4927 = vperm.xlu0 %4926, %v4753
      %v4928 = vpop.permute.xlu0 %4927
      %v4930 = vsub.f32 %v4868, %v458
      %v4931 = vsub.f32 %v4872, %v458
      %v4932 = vsub.f32 %v4876, %v458
      %v4933 = vsub.f32 %v4880, %v458
      %v4934 = vsub.f32 %v4884, %v458
      %v4935 = vsub.f32 %v4888, %v458
      %v4936 = vsub.f32 %v4892, %v458
      %v4937 = vsub.f32 %v4896, %v458
      %v4938 = vsub.f32 %v4900, %v458
      %v4939 = vsub.f32 %v4904, %v458
      %v4940 = vsub.f32 %v4908, %v458
      %v4941 = vsub.f32 %v4912, %v458
      %v4942 = vsub.f32 %v4916, %v458
      %v4943 = vsub.f32 %v4920, %v458
      %v4944 = vsub.f32 %v4924, %v458
      %v4945 = vsub.f32 %v4928, %v458
      %v4946 = vmul.f32 %v4930, %v4930
      %v4947 = vmul.f32 %v4931, %v4931
      %v4948 = vmul.f32 %v4932, %v4932
      %v4949 = vmul.f32 %v4933, %v4933
      %v4950 = vmul.f32 %v4934, %v4934
      %v4951 = vmul.f32 %v4935, %v4935
      %v4952 = vmul.f32 %v4936, %v4936
      %v4953 = vmul.f32 %v4937, %v4937
      %v4954 = vmul.f32 %v4938, %v4938
      %v4955 = vmul.f32 %v4939, %v4939
      %v4956 = vmul.f32 %v4940, %v4940
      %v4957 = vmul.f32 %v4941, %v4941
      %v4958 = vmul.f32 %v4942, %v4942
      %v4959 = vmul.f32 %v4943, %v4943
      %v4960 = vmul.f32 %v4944, %v4944
      %v4961 = vmul.f32 %v4945, %v4945
      %v4962 = vadd.f32 %v4850, %v4946
      %v4963 = vadd.f32 %v4851, %v4947
      %v4964 = vadd.f32 %v4852, %v4948
      %v4965 = vadd.f32 %v4853, %v4949
      %v4966 = vadd.f32 %v4854, %v4950
      %v4967 = vadd.f32 %v4855, %v4951
      %v4968 = vadd.f32 %v4856, %v4952
      %v4969 = vadd.f32 %v4857, %v4953
      %v4970 = vadd.f32 %v4858, %v4954
      %v4971 = vadd.f32 %v4859, %v4955
      %v4972 = vadd.f32 %v4860, %v4956
      %v4973 = vadd.f32 %v4861, %v4957
      %v4974 = vadd.f32 %v4862, %v4958
      %v4975 = vadd.f32 %v4863, %v4959
      %v4976 = vadd.f32 %v4864, %v4960
      %v4977 = vadd.f32 %v4865, %v4961
      %4978 = vset.pattern.permute.xlu0 2
      %4979 = vperm.xlu0 %4978, %v4738
      %v4980 = vpop.permute.xlu0 %4979
      %4982 = vset.pattern.permute.xlu0 2
      %4983 = vperm.xlu0 %4982, %v4739
      %v4984 = vpop.permute.xlu0 %4983
      %4986 = vset.pattern.permute.xlu0 2
      %4987 = vperm.xlu0 %4986, %v4740
      %v4988 = vpop.permute.xlu0 %4987
      %4990 = vset.pattern.permute.xlu0 2
      %4991 = vperm.xlu0 %4990, %v4741
      %v4992 = vpop.permute.xlu0 %4991
      %4994 = vset.pattern.permute.xlu0 2
      %4995 = vperm.xlu0 %4994, %v4742
      %v4996 = vpop.permute.xlu0 %4995
      %4998 = vset.pattern.permute.xlu0 2
      %4999 = vperm.xlu0 %4998, %v4743
      %v5000 = vpop.permute.xlu0 %4999
      %5002 = vset.pattern.permute.xlu0 2
      %5003 = vperm.xlu0 %5002, %v4744
      %v5004 = vpop.permute.xlu0 %5003
      %5006 = vset.pattern.permute.xlu0 2
      %5007 = vperm.xlu0 %5006, %v4745
      %v5008 = vpop.permute.xlu0 %5007
      %5010 = vset.pattern.permute.xlu0 2
      %5011 = vperm.xlu0 %5010, %v4746
      %v5012 = vpop.permute.xlu0 %5011
      %5014 = vset.pattern.permute.xlu0 2
      %5015 = vperm.xlu0 %5014, %v4747
      %v5016 = vpop.permute.xlu0 %5015
      %5018 = vset.pattern.permute.xlu0 2
      %5019 = vperm.xlu0 %5018, %v4748
      %v5020 = vpop.permute.xlu0 %5019
      %5022 = vset.pattern.permute.xlu0 2
      %5023 = vperm.xlu0 %5022, %v4749
      %v5024 = vpop.permute.xlu0 %5023
      %5026 = vset.pattern.permute.xlu0 2
      %5027 = vperm.xlu0 %5026, %v4750
      %v5028 = vpop.permute.xlu0 %5027
      %5030 = vset.pattern.permute.xlu0 2
      %5031 = vperm.xlu0 %5030, %v4751
      %v5032 = vpop.permute.xlu0 %5031
      %5034 = vset.pattern.permute.xlu0 2
      %5035 = vperm.xlu0 %5034, %v4752
      %v5036 = vpop.permute.xlu0 %5035
      %5038 = vset.pattern.permute.xlu0 2
      %5039 = vperm.xlu0 %5038, %v4753
      %v5040 = vpop.permute.xlu0 %5039
      %v5042 = vsub.f32 %v4980, %v574
      %v5043 = vsub.f32 %v4984, %v574
      %v5044 = vsub.f32 %v4988, %v574
      %v5045 = vsub.f32 %v4992, %v574
      %v5046 = vsub.f32 %v4996, %v574
      %v5047 = vsub.f32 %v5000, %v574
      %v5048 = vsub.f32 %v5004, %v574
      %v5049 = vsub.f32 %v5008, %v574
      %v5050 = vsub.f32 %v5012, %v574
      %v5051 = vsub.f32 %v5016, %v574
      %v5052 = vsub.f32 %v5020, %v574
      %v5053 = vsub.f32 %v5024, %v574
      %v5054 = vsub.f32 %v5028, %v574
      %v5055 = vsub.f32 %v5032, %v574
      %v5056 = vsub.f32 %v5036, %v574
      %v5057 = vsub.f32 %v5040, %v574
      %v5058 = vmul.f32 %v5042, %v5042
      %v5059 = vmul.f32 %v5043, %v5043
      %v5060 = vmul.f32 %v5044, %v5044
      %v5061 = vmul.f32 %v5045, %v5045
      %v5062 = vmul.f32 %v5046, %v5046
      %v5063 = vmul.f32 %v5047, %v5047
      %v5064 = vmul.f32 %v5048, %v5048
      %v5065 = vmul.f32 %v5049, %v5049
      %v5066 = vmul.f32 %v5050, %v5050
      %v5067 = vmul.f32 %v5051, %v5051
      %v5068 = vmul.f32 %v5052, %v5052
      %v5069 = vmul.f32 %v5053, %v5053
      %v5070 = vmul.f32 %v5054, %v5054
      %v5071 = vmul.f32 %v5055, %v5055
      %v5072 = vmul.f32 %v5056, %v5056
      %v5073 = vmul.f32 %v5057, %v5057
      %v5074 = vadd.f32 %v4962, %v5058
      %v5075 = vadd.f32 %v4963, %v5059
      %v5076 = vadd.f32 %v4964, %v5060
      %v5077 = vadd.f32 %v4965, %v5061
      %v5078 = vadd.f32 %v4966, %v5062
      %v5079 = vadd.f32 %v4967, %v5063
      %v5080 = vadd.f32 %v4968, %v5064
      %v5081 = vadd.f32 %v4969, %v5065
      %v5082 = vadd.f32 %v4970, %v5066
      %v5083 = vadd.f32 %v4971, %v5067
      %v5084 = vadd.f32 %v4972, %v5068
      %v5085 = vadd.f32 %v4973, %v5069
      %v5086 = vadd.f32 %v4974, %v5070
      %v5087 = vadd.f32 %v4975, %v5071
      %v5088 = vadd.f32 %v4976, %v5072
      %v5089 = vadd.f32 %v4977, %v5073
      %5090 = vmin.xlane.f32.xlu0 %v5074
      %v5091 = vpop.xlane.xlu0 %5090
      %5092 = vmin.xlane.f32.xlu0 %v5075
      %v5093 = vpop.xlane.xlu0 %5092
      %5094 = vmin.xlane.f32.xlu0 %v5076
      %v5095 = vpop.xlane.xlu0 %5094
      %5096 = vmin.xlane.f32.xlu0 %v5077
      %v5097 = vpop.xlane.xlu0 %5096
      %5098 = vmin.xlane.f32.xlu0 %v5078
      %v5099 = vpop.xlane.xlu0 %5098
      %5100 = vmin.xlane.f32.xlu0 %v5079
      %v5101 = vpop.xlane.xlu0 %5100
      %5102 = vmin.xlane.f32.xlu0 %v5080
      %v5103 = vpop.xlane.xlu0 %5102
      %5104 = vmin.xlane.f32.xlu0 %v5081
      %v5105 = vpop.xlane.xlu0 %5104
      %5106 = vmin.xlane.f32.xlu0 %v5082
      %v5107 = vpop.xlane.xlu0 %5106
      %5108 = vmin.xlane.f32.xlu0 %v5083
      %v5109 = vpop.xlane.xlu0 %5108
      %5110 = vmin.xlane.f32.xlu0 %v5084
      %v5111 = vpop.xlane.xlu0 %5110
      %5112 = vmin.xlane.f32.xlu0 %v5085
      %v5113 = vpop.xlane.xlu0 %5112
      %5114 = vmin.xlane.f32.xlu0 %v5086
      %v5115 = vpop.xlane.xlu0 %5114
      %5116 = vmin.xlane.f32.xlu0 %v5087
      %v5117 = vpop.xlane.xlu0 %5116
      %5118 = vmin.xlane.f32.xlu0 %v5088
      %v5119 = vpop.xlane.xlu0 %5118
      %5120 = vmin.xlane.f32.xlu0 %v5089
      %v5121 = vpop.xlane.xlu0 %5120
      %vm5122 = vcmp.eq.f32.partialorder %v5074, %v5091
      %vm5123 = vcmp.eq.f32.partialorder %v5075, %v5093
      %vm5124 = vcmp.eq.f32.partialorder %v5076, %v5095
      %vm5125 = vcmp.eq.f32.partialorder %v5077, %v5097
      %vm5126 = vcmp.eq.f32.partialorder %v5078, %v5099
      %vm5127 = vcmp.eq.f32.partialorder %v5079, %v5101
      %vm5128 = vcmp.eq.f32.partialorder %v5080, %v5103
      %vm5129 = vcmp.eq.f32.partialorder %v5081, %v5105
      %vm5130 = vcmp.eq.f32.partialorder %v5082, %v5107
      %vm5131 = vcmp.eq.f32.partialorder %v5083, %v5109
      %vm5132 = vcmp.eq.f32.partialorder %v5084, %v5111
      %vm5133 = vcmp.eq.f32.partialorder %v5085, %v5113
      %vm5134 = vcmp.eq.f32.partialorder %v5086, %v5115
      %vm5135 = vcmp.eq.f32.partialorder %v5087, %v5117
      %vm5136 = vcmp.eq.f32.partialorder %v5088, %v5119
      %vm5137 = vcmp.eq.f32.partialorder %v5089, %v5121
      %v5138 = vsel %vm5122, 1, 0
      %v5139 = vsel %vm5123, 1, 0
      %v5140 = vsel %vm5124, 1, 0
      %v5141 = vsel %vm5125, 1, 0
      %v5142 = vsel %vm5126, 1, 0
      %v5143 = vsel %vm5127, 1, 0
      %v5144 = vsel %vm5128, 1, 0
      %v5145 = vsel %vm5129, 1, 0
      %v5146 = vsel %vm5130, 1, 0
      %v5147 = vsel %vm5131, 1, 0
      %v5148 = vsel %vm5132, 1, 0
      %v5149 = vsel %vm5133, 1, 0
      %v5150 = vsel %vm5134, 1, 0
      %v5151 = vsel %vm5135, 1, 0
      %v5152 = vsel %vm5136, 1, 0
      %v5153 = vsel %vm5137, 1, 0
      %v5154 = vcvt.s32.f32 %v5138
      %v5155 = vcvt.s32.f32 %v5139
      %v5156 = vcvt.s32.f32 %v5140
      %v5157 = vcvt.s32.f32 %v5141
      %v5158 = vcvt.s32.f32 %v5142
      %v5159 = vcvt.s32.f32 %v5143
      %v5160 = vcvt.s32.f32 %v5144
      %v5161 = vcvt.s32.f32 %v5145
      %v5162 = vcvt.s32.f32 %v5146
      %v5163 = vcvt.s32.f32 %v5147
      %v5164 = vcvt.s32.f32 %v5148
      %v5165 = vcvt.s32.f32 %v5149
      %v5166 = vcvt.s32.f32 %v5150
      %v5167 = vcvt.s32.f32 %v5151
      %v5168 = vcvt.s32.f32 %v5152
      %v5169 = vcvt.s32.f32 %v5153
      %vm5170 = vcmp.le.f32.partialorder %v238, %v5091
      %vm5171 = vcmp.le.f32.partialorder %v239, %v5093
      %vm5172 = vcmp.le.f32.partialorder %v240, %v5095
      %vm5173 = vcmp.le.f32.partialorder %v241, %v5097
      %vm5174 = vcmp.le.f32.partialorder %v242, %v5099
      %vm5175 = vcmp.le.f32.partialorder %v243, %v5101
      %vm5176 = vcmp.le.f32.partialorder %v244, %v5103
      %vm5177 = vcmp.le.f32.partialorder %v245, %v5105
      %vm5178 = vcmp.le.f32.partialorder %v246, %v5107
      %vm5179 = vcmp.le.f32.partialorder %v247, %v5109
      %vm5180 = vcmp.le.f32.partialorder %v248, %v5111
      %vm5181 = vcmp.le.f32.partialorder %v249, %v5113
      %vm5182 = vcmp.le.f32.partialorder %v250, %v5115
      %vm5183 = vcmp.le.f32.partialorder %v251, %v5117
      %vm5184 = vcmp.le.f32.partialorder %v252, %v5119
      %vm5185 = vcmp.le.f32.partialorder %v253, %v5121
      %v5186 = vsel %vm5170, 1, 0
      %v5187 = vsel %vm5171, 1, 0
      %v5188 = vsel %vm5172, 1, 0
      %v5189 = vsel %vm5173, 1, 0
      %v5190 = vsel %vm5174, 1, 0
      %v5191 = vsel %vm5175, 1, 0
      %v5192 = vsel %vm5176, 1, 0
      %v5193 = vsel %vm5177, 1, 0
      %v5194 = vsel %vm5178, 1, 0
      %v5195 = vsel %vm5179, 1, 0
      %v5196 = vsel %vm5180, 1, 0
      %v5197 = vsel %vm5181, 1, 0
      %v5198 = vsel %vm5182, 1, 0
      %v5199 = vsel %vm5183, 1, 0
      %v5200 = vsel %vm5184, 1, 0
      %v5201 = vsel %vm5185, 1, 0
      %v5202 = vcvt.s32.f32 %v5186
      %v5203 = vcvt.s32.f32 %v5187
      %v5204 = vcvt.s32.f32 %v5188
      %v5205 = vcvt.s32.f32 %v5189
      %v5206 = vcvt.s32.f32 %v5190
      %v5207 = vcvt.s32.f32 %v5191
      %v5208 = vcvt.s32.f32 %v5192
      %v5209 = vcvt.s32.f32 %v5193
      %v5210 = vcvt.s32.f32 %v5194
      %v5211 = vcvt.s32.f32 %v5195
      %v5212 = vcvt.s32.f32 %v5196
      %v5213 = vcvt.s32.f32 %v5197
      %v5214 = vcvt.s32.f32 %v5198
      %v5215 = vcvt.s32.f32 %v5199
      %v5216 = vcvt.s32.f32 %v5200
      %v5217 = vcvt.s32.f32 %v5201
      %5219 = vset.pattern.permute.xlu0 0
      %5220 = vperm.xlu0 %5219, %v5202
      %v5221 = vpop.permute.xlu0 %5220
      %5224 = vset.pattern.permute.xlu0 0
      %5225 = vperm.xlu0 %5224, %v5203
      %v5226 = vpop.permute.xlu0 %5225
      %5229 = vset.pattern.permute.xlu0 0
      %5230 = vperm.xlu0 %5229, %v5204
      %v5231 = vpop.permute.xlu0 %5230
      %5234 = vset.pattern.permute.xlu0 0
      %5235 = vperm.xlu0 %5234, %v5205
      %v5236 = vpop.permute.xlu0 %5235
      %5239 = vset.pattern.permute.xlu0 0
      %5240 = vperm.xlu0 %5239, %v5206
      %v5241 = vpop.permute.xlu0 %5240
      %5244 = vset.pattern.permute.xlu0 0
      %5245 = vperm.xlu0 %5244, %v5207
      %v5246 = vpop.permute.xlu0 %5245
      %5249 = vset.pattern.permute.xlu0 0
      %5250 = vperm.xlu0 %5249, %v5208
      %v5251 = vpop.permute.xlu0 %5250
      %5254 = vset.pattern.permute.xlu0 0
      %5255 = vperm.xlu0 %5254, %v5209
      %v5256 = vpop.permute.xlu0 %5255
      %5259 = vset.pattern.permute.xlu0 0
      %5260 = vperm.xlu0 %5259, %v5210
      %v5261 = vpop.permute.xlu0 %5260
      %5264 = vset.pattern.permute.xlu0 0
      %5265 = vperm.xlu0 %5264, %v5211
      %v5266 = vpop.permute.xlu0 %5265
      %5269 = vset.pattern.permute.xlu0 0
      %5270 = vperm.xlu0 %5269, %v5212
      %v5271 = vpop.permute.xlu0 %5270
      %5274 = vset.pattern.permute.xlu0 0
      %5275 = vperm.xlu0 %5274, %v5213
      %v5276 = vpop.permute.xlu0 %5275
      %5279 = vset.pattern.permute.xlu0 0
      %5280 = vperm.xlu0 %5279, %v5214
      %v5281 = vpop.permute.xlu0 %5280
      %5284 = vset.pattern.permute.xlu0 0
      %5285 = vperm.xlu0 %5284, %v5215
      %v5286 = vpop.permute.xlu0 %5285
      %5289 = vset.pattern.permute.xlu0 0
      %5290 = vperm.xlu0 %5289, %v5216
      %v5291 = vpop.permute.xlu0 %5290
      %5294 = vset.pattern.permute.xlu0 0
      %5295 = vperm.xlu0 %5294, %v5217
      %v5296 = vpop.permute.xlu0 %5295
      %v5298 = vmul.f32 %v5154, %v5221
      %v5299 = vmul.f32 %v5155, %v5226
      %v5300 = vmul.f32 %v5156, %v5231
      %v5301 = vmul.f32 %v5157, %v5236
      %v5302 = vmul.f32 %v5158, %v5241
      %v5303 = vmul.f32 %v5159, %v5246
      %v5304 = vmul.f32 %v5160, %v5251
      %v5305 = vmul.f32 %v5161, %v5256
      %v5306 = vmul.f32 %v5162, %v5261
      %v5307 = vmul.f32 %v5163, %v5266
      %v5308 = vmul.f32 %v5164, %v5271
      %v5309 = vmul.f32 %v5165, %v5276
      %v5310 = vmul.f32 %v5166, %v5281
      %v5311 = vmul.f32 %v5167, %v5286
      %v5312 = vmul.f32 %v5168, %v5291
      %v5313 = vmul.f32 %v5169, %v5296
      %v5314 = vadd.f32 %v5298, %v5299
      %v5315 = vadd.f32 %v5314, %v5300
      %v5316 = vadd.f32 %v5315, %v5301
      %v5317 = vadd.f32 %v5316, %v5302
      %v5318 = vadd.f32 %v5317, %v5303
      %v5319 = vadd.f32 %v5318, %v5304
      %v5320 = vadd.f32 %v5319, %v5305
      %v5321 = vadd.f32 %v5320, %v5306
      %v5322 = vadd.f32 %v5321, %v5307
      %v5323 = vadd.f32 %v5322, %v5308
      %v5324 = vadd.f32 %v5323, %v5309
      %v5325 = vadd.f32 %v5324, %v5310
      %v5326 = vadd.f32 %v5325, %v5311
      %v5327 = vadd.f32 %v5326, %v5312
      %v5328 = vadd.f32 %v5327, %v5313
      %v5329 = vrot.slane %v5328, 4
      %v5330 = vadd.f32 %v5328, %v5329
      %v5331 = vrot.slane %v5330, 2
      %v5332 = vadd.f32 %v5330, %v5331
      %v5333 = vrot.slane %v5332, 1
      %v5334 = vadd.f32 %v5332, %v5333
      %v5335 = vsel %vm868, %v5202, 0.0
      %v5336 = vsel %vm868, %v5203, 0.0
      %v5337 = vadd.f32 %v5335, %v5336
      %v5338 = vsel %vm868, %v5204, 0.0
      %v5339 = vadd.f32 %v5337, %v5338
      %v5340 = vsel %vm868, %v5205, 0.0
      %v5341 = vadd.f32 %v5339, %v5340
      %v5342 = vsel %vm868, %v5206, 0.0
      %v5343 = vadd.f32 %v5341, %v5342
      %v5344 = vsel %vm868, %v5207, 0.0
      %v5345 = vadd.f32 %v5343, %v5344
      %v5346 = vsel %vm868, %v5208, 0.0
      %v5347 = vadd.f32 %v5345, %v5346
      %v5348 = vsel %vm868, %v5209, 0.0
      %v5349 = vadd.f32 %v5347, %v5348
      %v5350 = vsel %vm868, %v5210, 0.0
      %v5351 = vadd.f32 %v5349, %v5350
      %v5352 = vsel %vm868, %v5211, 0.0
      %v5353 = vadd.f32 %v5351, %v5352
      %v5354 = vsel %vm868, %v5212, 0.0
      %v5355 = vadd.f32 %v5353, %v5354
      %v5356 = vsel %vm868, %v5213, 0.0
      %v5357 = vadd.f32 %v5355, %v5356
      %v5358 = vsel %vm868, %v5214, 0.0
      %v5359 = vadd.f32 %v5357, %v5358
      %v5360 = vsel %vm868, %v5215, 0.0
      %v5361 = vadd.f32 %v5359, %v5360
      %v5362 = vsel %vm868, %v5216, 0.0
      %v5363 = vadd.f32 %v5361, %v5362
      %v5364 = vsel %vm868, %v5217, 0.0
      %v5365 = vadd.f32 %v5363, %v5364
      %v5366 = vrot.slane %v5365, 4
      %v5367 = vadd.f32 %v5365, %v5366
      %v5368 = vrot.slane %v5367, 2
      %v5369 = vadd.f32 %v5367, %v5368
      %v5370 = vrot.slane %v5369, 1
      %v5371 = vadd.f32 %v5369, %v5370
      %vm5372 = vcmask 1040384
      %v5373 = vsel %vm5372, %v867, %v1506
      %vm5374 = vcmask 1041408
      %v5375 = vsel %vm5374, %v5373, %v2144
      %vm5376 = vcmask 1042432
      %v5377 = vsel %vm5376, %v5375, %v2782
      %vm5378 = vcmask 1043456
      %v5379 = vsel %vm5378, %v5377, %v3420
      %vm5380 = vcmask 1044480
      %v5381 = vsel %vm5380, %v5379, %v4058
      %vm5382 = vcmask 1045504
      %v5383 = vsel %vm5382, %v5381, %v4696
      %vm5384 = vcmask 1046528
      %v5385 = vsel %vm5384, %v5383, %v5334
      %v5386 = vsel %vm5372, %v905, %v1543
      %v5387 = vsel %vm5374, %v5386, %v2181
      %v5388 = vsel %vm5376, %v5387, %v2819
      %v5389 = vsel %vm5378, %v5388, %v3457
      %v5390 = vsel %vm5380, %v5389, %v4095
      %v5391 = vsel %vm5382, %v5390, %v4733
      %v5392 = vsel %vm5384, %v5391, %v5371
      %v5394 = vlaneseq
      %v5395 = vshrl.u32 %v5394, 7
      %v5396 = vsub.s32 0, %v5395
      %v5397 = vrot.slane %v254, %v5396
      %v5399 = vmul.f32 %v5385, %v5397
      %5400 = vadd.xlane.f32.xlu0 %v5399
      %v5401 = vpop.xlane.xlu0 %5400
      %v5402 = vmax.f32 %v5392, 1.0
      %v5403 = vrcp.pop %v5402
      %v5404 = vmul.f32 %v5401, %v5403
      %5405 = vst.msk [vmem:[%s219] sm:$0xff] %vm868, %v5404
      %p5406 = scmp.lt.s32.totalorder %s16, 1
      %s5407 = scalar_select %p5406, %s16, 1
      %s5408 = smul.addr %s5407, 8
      %s5409 = scalar_lea.vmem %s5, %s5408
      // Predicated region
      $region41: #{tpu_custom_call.1} parent=39 // pred_check
        %p5410 = pneg %p144
      $region42: #{tpu_custom_call.1} parent=39 // pred_check_branch
        %5412 = sbr.rel (%p5410) target = $region44
      $region43: #{tpu_custom_call.1} parent=39 // pred_region
        _
      $region44: #{tpu_custom_call.1} parent=39 // pred_fallthru
        _
    $region40: #{tpu_custom_call.1} parent=5 // pred_fallthru
      _
    %p5413 = scmp.le.s32.totalorder 2, %s11
    // Predicated region
    $region45: #{tpu_custom_call.1} parent=5 // pred_check
      %p5414 = pneg %p5413
    $region46: #{tpu_custom_call.1} parent=5 // pred_check_branch
      %5416 = sbr.rel (%p5414) target = $region48
    $region47: #{tpu_custom_call.1} parent=5 // pred_region
      %s5417 = ssub.s32 %s11, 2
      // Predicated region
      $region49: #{tpu_custom_call.1} parent=47 // pred_check
        %p5418 = pneg %p150
      $region50: #{tpu_custom_call.1} parent=47 // pred_check_branch
        %5420 = sbr.rel (%p5418) target = $region52
      $region51: #{tpu_custom_call.1} parent=47 // pred_region
        %p5421 = scmp.lt.s32.totalorder %s17, 1
        %s5422 = scalar_select %p5421, %s17, 1
        %s5423 = smul.addr %s5422, 8
        %s5424 = scalar_lea.vmem %s5, %s5423
      $region52: #{tpu_custom_call.1} parent=47 // pred_fallthru
        _
    $region48: #{tpu_custom_call.1} parent=5 // pred_fallthru
      _
  $region6: #{tpu_custom_call.1} parent=0 // loop_footer
    %s15 = sadd.s32 1, %s11
  $region7: #{tpu_custom_call.1} parent=0 // loop_footer_branch
    %10 = sbr.rel target = $region3
  $region8: #{tpu_custom_call.1} parent=0 // loop_exit
    _

</llo_original>
